<compile_context>
chip_gen: v7x
topology: tpu7x:2x2x1
jax: 0.10.0
libtpu: 0.0.40
codegen_flags: <defaults>
</compile_context>

<pallas_src>
import functools

import jax
import jax.numpy as jnp
from jax.experimental import pallas as pl
from jax.experimental.pallas import tpu as pltpu

BN_EPS = 1e-5
LANE = 128


def _round_up(x, m):
    return (x + m - 1) // m * m


# ---------------------------------------------------------------------------
# Kernel: conv (sum of k*k shifted matmuls on a flat activation matrix)
#         + folded-BN bias [+ residual]
# ---------------------------------------------------------------------------
def _make_conv_bn_kernel(tap_offsets, mb, with_residual):
    """Build a kernel for a conv whose taps are contiguous row-slices.

    x_ref block is (1, R, cin_pad) -- the phase-split, row-flattened activation.
    Tap t contributes dot(x_ref[0, off_t:off_t+mb, :], w_ref[t]) where off_t is
    a static Python int, so each operand load is a single contiguous slice.
    Accumulator rows a*lw + b with b >= wo are junk and dropped by the wrapper.
    """

    def kernel(*refs):
        if with_residual:
            x_ref, w_ref, b_ref, r_ref, o_ref = refs
        else:
            x_ref, w_ref, b_ref, o_ref = refs

        acc = None
        for t, off in enumerate(tap_offsets):
            xs = x_ref[0, off:off + mb, :]                       # (mb, cin_pad) bf16
            d = jnp.dot(xs, w_ref[t],                            # bf16 x bf16 -> f32 MXU
                        preferred_element_type=jnp.float32)
            acc = d if acc is None else acc + d

        acc = acc + b_ref[...]                                   # folded BN bias (1, cout_pad) f32
        if with_residual:
            acc = acc + r_ref[0].astype(jnp.float32)
        o_ref[0] = acc.astype(o_ref.dtype)

    return kernel


# ---------------------------------------------------------------------------
# Wrapper glue
# ---------------------------------------------------------------------------
def _phase_split(x_nhwc, k, stride, pad):
    """Zero-pad + stride-s space-to-depth so every conv tap is a contiguous slice.

    Returns (x_phases, ho, wo, lh, lw) with x_phases of shape (N, s*s*lh, lw, C).
    Phase (p, q) occupies rows [(p*s+q)*lh, (p*s+q+1)*lh); phase-plane pixel
    (a, b) is padded-input pixel (a*s + p, b*s + q).
    """
    n, h, w, c = x_nhwc.shape
    s = stride
    ho = (h + 2 * pad - k) // s + 1
    wo = (w + 2 * pad - k) // s + 1
    lh = ho + (k - 1) // s
    lw = wo + (k - 1) // s
    hp, wp = s * lh, s * lw

    xp = jnp.pad(x_nhwc, ((0, 0), (pad, pad), (pad, pad), (0, 0)))
    dh, dw = hp - xp.shape[1], wp - xp.shape[2]
    if dh > 0 or dw > 0:
        xp = jnp.pad(xp, ((0, 0), (0, max(dh, 0)), (0, max(dw, 0)), (0, 0)))
    xp = xp[:, :hp, :wp, :]
    xp = xp.reshape(n, lh, s, lw, s, c).transpose(0, 2, 4, 1, 3, 5)
    return xp.reshape(n, s * s * lh, lw, c), ho, wo, lh, lw


def conv_bn_pallas(x_nhwc, weight_oikk, bn_scale, bn_bias, *, stride, pad,
                   residual=None, out_dtype=jnp.bfloat16):
    """QConv2d (full-precision math, bf16 operands) + inference BatchNorm
    [+ fused residual add] as one Pallas call.

    x_nhwc      : (N, H, W, Cin_pad) bf16, channels padded to a multiple of 128
                  (extra channels zero).
    weight_oikk : (Cout, Cin, k, k) f32, torch layout.
    residual    : optional (N, Ho*LW, Cout_pad) bf16 in the kernel's flat layout.
    Returns (out_flat (N, Ho*LW, Cout_pad), Ho, Wo, LW); rows a*LW+b with b>=Wo
    and channels >= Cout are junk/zero and must be sliced off by the caller.
    """
    n, h, w, cin_pad = x_nhwc.shape
    cout, cin, kh, kw = weight_oikk.shape
    assert kh == kw and cin <= cin_pad
    k, s = kh, stride
    cout_pad = _round_up(cout, LANE)

    # Fold BN scale into the weight columns; the kernel only adds the bias.
    w_f = weight_oikk.astype(jnp.float32) * bn_scale.astype(jnp.float32)[:, None, None, None]
    w_mat = jnp.transpose(w_f, (2, 3, 1, 0)).reshape(k * k, cin, cout)
    w_mat = jnp.pad(w_mat, ((0, 0), (0, cin_pad - cin), (0, cout_pad - cout)))
    w_mat = w_mat.astype(jnp.bfloat16)
    bias = jnp.pad(bn_bias.astype(jnp.float32), (0, cout_pad - cout)).reshape(1, cout_pad)

    # Phase split + row flatten: tap (ki, kj) becomes a contiguous row slice at
    # a static offset of the flat matrix.
    x_ph, ho, wo, lh, lw = _phase_split(x_nhwc, k, s, pad)
    plane = lh * lw
    x_flat = x_ph.reshape(n, s * s * plane, cin_pad)

    offs = []
    for ki in range(k):
        for kj in range(k):
            phase = (ki % s) * s + (kj % s)
            offs.append(phase * plane + (ki // s) * lw + (kj // s))
    mb = ho * lw                                   # rows of the accumulator / output
    rows_needed = max(offs) + mb
    if rows_needed > x_flat.shape[1]:              # keep every tap slice in-bounds
        x_flat = jnp.pad(x_flat, ((0, 0), (0, rows_needed - x_flat.shape[1]), (0, 0)))
    r_rows = x_flat.shape[1]

    in_specs = [
        pl.BlockSpec((1, r_rows, cin_pad), lambda i: (i, 0, 0)),
        pl.BlockSpec((k * k, cin_pad, cout_pad), lambda i: (0, 0, 0)),
        pl.BlockSpec((1, cout_pad), lambda i: (0, 0)),
    ]
    args = [x_flat, w_mat, bias]
    if residual is not None:
        assert residual.shape == (n, mb, cout_pad), (residual.shape, (n, mb, cout_pad))
        in_specs.append(pl.BlockSpec((1, mb, cout_pad), lambda i: (i, 0, 0)))
        args.append(residual)

    kernel = _make_conv_bn_kernel(tuple(offs), mb, residual is not None)
    out = pl.pallas_call(
        kernel,
        out_shape=jax.ShapeDtypeStruct((n, mb, cout_pad), out_dtype),
        grid=(n,),
        in_specs=in_specs,
        out_specs=pl.BlockSpec((1, mb, cout_pad), lambda i: (i, 0, 0)),
        compiler_params=pltpu.CompilerParams(
            dimension_semantics=("parallel",),
            vmem_limit_bytes=64 * 1024 * 1024),
    )(*args)
    return out, ho, wo, lw


# ---------------------------------------------------------------------------
# BasicBlockV1 parameters + forward
# ---------------------------------------------------------------------------
def init_basic_block_v1(key, in_channels, out_channels, stride):
    if stride == -1:
        stride = 2 if in_channels != out_channels else 1
    keys = jax.random.split(key, 6)

    def conv_w(kk, co, ci, ksz):
        fan_in = ci * ksz * ksz
        return jax.random.normal(kk, (co, ci, ksz, ksz), jnp.float32) / jnp.sqrt(fan_in)

    def bn(kk, c):
        k1, k2, k3, k4 = jax.random.split(kk, 4)
        gamma = 1.0 + 0.1 * jax.random.normal(k1, (c,), jnp.float32)
        beta = 0.1 * jax.random.normal(k2, (c,), jnp.float32)
        rmean = 0.1 * jax.random.normal(k3, (c,), jnp.float32)
        rvar = 1.0 + 0.1 * jax.random.uniform(k4, (c,), jnp.float32)
        scale = gamma / jnp.sqrt(rvar + BN_EPS)       # inference-mode BN folded
        bias = beta - rmean * scale
        return scale, bias

    params = {
        "stride": stride,
        "shall_downsample": in_channels != out_channels,
        "conv1_w": conv_w(keys[0], out_channels, in_channels, 3),
        "bn1": bn(keys[1], out_channels),
        "conv2_w": conv_w(keys[2], out_channels, out_channels, 3),
        "bn2": bn(keys[3], out_channels),
    }
    if params["shall_downsample"]:
        params["down_w"] = conv_w(keys[4], out_channels, in_channels, 1)
        params["bn_d"] = bn(keys[5], out_channels)
    return params


def basic_block_v1_forward(params, x_nchw):
    # TODO(synk): bitorch QConv2d applies an input/weight quantization given by its
    # quantization config (not specified here); convs are implemented full precision.
    stride = params["stride"]
    shall_down = params["shall_downsample"]
    if not shall_down and stride != 1:
        # Matches the torch module: identity residual only makes sense at stride 1.
        raise ValueError("identity residual requires stride == 1")

    n, cin, h, w = x_nchw.shape
    cin_pad = _round_up(cin, LANE)
    cout = params["conv1_w"].shape[0]
    cout_pad = _round_up(cout, LANE)

    x = jnp.transpose(x_nchw, (0, 2, 3, 1))                        # NCHW -> NHWC
    x = jnp.pad(x, ((0, 0), (0, 0), (0, 0), (0, cin_pad - cin)))   # lane-pad channels
    x = x.astype(jnp.bfloat16)

    # --- body conv1 + bn1 --------------------------------------------------
    y_flat, ho, wo, lw1 = conv_bn_pallas(x, params["conv1_w"], *params["bn1"],
                                         stride=stride, pad=1)      # bf16, lane-padded
    y = y_flat.reshape(n, ho, lw1, cout_pad)[:, :, :wo, :]          # drop junk columns

    # --- residual (downsample conv+bn, or identity) ------------------------
    if shall_down:
        r_flat, rho, rwo, rlw = conv_bn_pallas(x, params["down_w"], *params["bn_d"],
                                               stride=stride, pad=0)
        r = r_flat.reshape(n, rho, rlw, cout_pad)[:, :, :rwo, :]    # (n, ho, wo, cout_pad)
    else:
        r = x                                                        # cin_pad == cout_pad, h==ho

    # --- body conv2 + bn2 + fused residual add -----------------------------
    lw2 = wo + 2                                   # conv2: k=3, stride=1 -> halo of 2
    r = jnp.pad(r, ((0, 0), (0, 0), (0, lw2 - wo), (0, 0)))
    r_flat2 = r.reshape(n, ho * lw2, cout_pad)     # residual in conv2's flat layout

    out_flat, ho2, wo2, lw2k = conv_bn_pallas(y, params["conv2_w"], *params["bn2"],
                                              stride=1, pad=1, residual=r_flat2,
                                              out_dtype=jnp.float32)
    assert lw2k == lw2 and ho2 == ho and wo2 == wo
    out = out_flat.reshape(n, ho2, lw2, cout_pad)[:, :, :wo2, :cout]
    # NOTE: BasicBlockV1.forward never applies self.activation, so no ReLU here.
    return jnp.transpose(out, (0, 3, 1, 2))                        # NHWC -> NCHW


# ---------------------------------------------------------------------------
# Pure-JAX reference (mirrors the kernels' bf16 operand rounding)
# ---------------------------------------------------------------------------
def _ref_conv_bn(x_nhwc, w, scale, bias, stride, pad, residual=None):
    xb = x_nhwc.astype(jnp.bfloat16).astype(jnp.float32)
    wf = w.astype(jnp.float32) * scale.astype(jnp.float32)[:, None, None, None]
    wb = wf.astype(jnp.bfloat16).astype(jnp.float32)
    y = jax.lax.conv_general_dilated(
        xb, jnp.transpose(wb, (2, 3, 1, 0)),
        window_strides=(stride, stride),
        padding=[(pad, pad), (pad, pad)],
        dimension_numbers=("NHWC", "HWIO", "NHWC"))
    y = y + bias.astype(jnp.float32)
    if residual is not None:
        y = y + residual
    return y


if __name__ == "__main__":
    key = jax.random.PRNGKey(0)
    k_x, k_p = jax.random.split(key)

    in_c, out_c = 4, 8
    x = jax.random.normal(k_x, (2, in_c, 16, 16), jnp.float32)
    params = init_basic_block_v1(k_p, in_c, out_c, stride=-1)   # -> stride 2, downsample

    fwd = jax.jit(functools.partial(basic_block_v1_forward, params))
    out = jax.block_until_ready(fwd(x))

    # reference check
    xh = jnp.transpose(x, (0, 2, 3, 1))
    s = params["stride"]
    res = _ref_conv_bn(xh, params["down_w"], *params["bn_d"], s, 0)
    res = res.astype(jnp.bfloat16).astype(jnp.float32)
    r1 = _ref_conv_bn(xh, params["conv1_w"], *params["bn1"], s, 1)
    r1 = r1.astype(jnp.bfloat16).astype(jnp.float32)
    r2 = _ref_conv_bn(r1, params["conv2_w"], *params["bn2"], 1, 1, residual=res)
    ref = jnp.transpose(r2, (0, 3, 1, 2))

    assert out.shape == (2, out_c, 8, 8), out.shape
    err = float(jnp.max(jnp.abs(out - ref)))
    assert jnp.allclose(out, ref, rtol=2e-2, atol=2e-2), err
    print("KERNEL_OK")
</pallas_src>

<mosaic_0001>
module attributes {stable_mosaic.version = 11 : i64} {
  func.func @kernel(%arg0: i32, %arg1: memref<1x256x128xbf16, #tpu.memory_space<vmem>>, %arg2: memref<1x128x128xbf16, #tpu.memory_space<vmem>>, %arg3: memref<1x128xf32, #tpu.memory_space<vmem>>, %arg4: memref<1x64x128xbf16, #tpu.memory_space<vmem>>) attributes {dimension_semantics = [#tpu.dimension_semantics<parallel>], iteration_bounds = array<i64: 2>, scalar_prefetch = 0 : i64, scratch_operands = 0 : i64, tpu.core_type = #tpu.core_type<tc>, window_params = [{transform_indices = @transform_0, window_bounds = array<i64: 1, 256, 128>}, {pipeline_mode = #tpu.pipeline_mode<synchronous>, transform_indices = @transform_1, window_bounds = array<i64: 1, 128, 128>}, {pipeline_mode = #tpu.pipeline_mode<synchronous>, transform_indices = @transform_2, window_bounds = array<i64: 1, 128>}, {transform_indices = @transform_3, window_bounds = array<i64: 1, 64, 128>}]} {
    %c0 = arith.constant 0 : index
    %c0_0 = arith.constant 0 : index
    %c0_1 = arith.constant 0 : index
    %0 = vector.load %arg1[%c0, %c0_0, %c0_1] : memref<1x256x128xbf16, #tpu.memory_space<vmem>>, vector<1x64x128xbf16>
    %1 = vector.shape_cast %0 : vector<1x64x128xbf16> to vector<64x128xbf16>
    %c0_2 = arith.constant 0 : index
    %c0_3 = arith.constant 0 : index
    %c0_4 = arith.constant 0 : index
    %2 = vector.load %arg2[%c0_2, %c0_3, %c0_4] : memref<1x128x128xbf16, #tpu.memory_space<vmem>>, vector<1x128x128xbf16>
    %3 = vector.shape_cast %2 : vector<1x128x128xbf16> to vector<128x128xbf16>
    %cst = arith.constant dense<0.000000e+00> : vector<64x128xf32>
    %4 = tpu.matmul %1, %3, %cst {dimension_numbers = #tpu.dot_dimension_numbers<[1], [0], [0], [1], [0, 0, 1, 1], [], []>} : vector<64x128xbf16>, vector<128x128xbf16>, vector<64x128xf32> -> vector<64x128xf32>
    %c0_5 = arith.constant 0 : index
    %c0_6 = arith.constant 0 : index
    %5 = vector.load %arg3[%c0_5, %c0_6] : memref<1x128xf32, #tpu.memory_space<vmem>>, vector<1x128xf32>
    %6 = vector.broadcast %5 : vector<1x128xf32> to vector<64x128xf32>
    %7 = arith.addf %4, %6 : vector<64x128xf32>
    %8 = arith.truncf %7 : vector<64x128xf32> to vector<64x128xbf16>
    %c0_7 = arith.constant 0 : index
    %c0_8 = arith.constant 0 : index
    %c0_9 = arith.constant 0 : index
    %9 = vector.load %arg4[%c0_7, %c0_8, %c0_9] : memref<1x64x128xbf16, #tpu.memory_space<vmem>>, vector<1x64x128xbf16>
    %10 = vector.shape_cast %9 : vector<1x64x128xbf16> to vector<64x128xbf16>
    %11 = vector.shape_cast %8 : vector<64x128xbf16> to vector<1x64x128xbf16>
    tpu.vector_store %arg4[%c0_7, %c0_8, %c0_9], %11 {strides = array<i32>} : memref<1x64x128xbf16, #tpu.memory_space<vmem>>, vector<1x64x128xbf16>,
    return
  }
  func.func @transform_0(%arg0: i32) -> (i32, i32, i32) {
    %c0_i32 = arith.constant 0 : i32
    %c0_i32_0 = arith.constant 0 : i32
    %c0_i32_1 = arith.constant 0 : i32
    return %arg0, %c0_i32, %c0_i32_0 : i32, i32, i32
  }
  func.func @transform_1(%arg0: i32) -> (i32, i32, i32) {
    %c0_i32 = arith.constant 0 : i32
    %c0_i32_0 = arith.constant 0 : i32
    %c0_i32_1 = arith.constant 0 : i32
    %c0_i32_2 = arith.constant 0 : i32
    return %c0_i32, %c0_i32_0, %c0_i32_1 : i32, i32, i32
  }
  func.func @transform_2(%arg0: i32) -> (i32, i32) {
    %c0_i32 = arith.constant 0 : i32
    %c0_i32_0 = arith.constant 0 : i32
    %c0_i32_1 = arith.constant 0 : i32
    return %c0_i32, %c0_i32_0 : i32, i32
  }
  func.func @transform_3(%arg0: i32) -> (i32, i32, i32) {
    %c0_i32 = arith.constant 0 : i32
    %c0_i32_0 = arith.constant 0 : i32
    %c0_i32_1 = arith.constant 0 : i32
    return %arg0, %c0_i32, %c0_i32_0 : i32, i32, i32
  }
}

module attributes {stable_mosaic.version = 11 : i64} {
  func.func @kernel(%arg0: i32, %arg1: memref<1x324x128xbf16, #tpu.memory_space<vmem>>, %arg2: memref<9x128x128xbf16, #tpu.memory_space<vmem>>, %arg3: memref<1x128xf32, #tpu.memory_space<vmem>>, %arg4: memref<1x72x128xbf16, #tpu.memory_space<vmem>>) attributes {dimension_semantics = [#tpu.dimension_semantics<parallel>], iteration_bounds = array<i64: 2>, scalar_prefetch = 0 : i64, scratch_operands = 0 : i64, tpu.core_type = #tpu.core_type<tc>, window_params = [{transform_indices = @transform_0, window_bounds = array<i64: 1, 324, 128>}, {pipeline_mode = #tpu.pipeline_mode<synchronous>, transform_indices = @transform_1, window_bounds = array<i64: 9, 128, 128>}, {pipeline_mode = #tpu.pipeline_mode<synchronous>, transform_indices = @transform_2, window_bounds = array<i64: 1, 128>}, {transform_indices = @transform_3, window_bounds = array<i64: 1, 72, 128>}]} {
    %c0 = arith.constant 0 : index
    %c0_0 = arith.constant 0 : index
    %c0_1 = arith.constant 0 : index
    %0 = vector.load %arg1[%c0, %c0_0, %c0_1] : memref<1x324x128xbf16, #tpu.memory_space<vmem>>, vector<1x72x128xbf16>
    %1 = vector.shape_cast %0 : vector<1x72x128xbf16> to vector<72x128xbf16>
    %c0_2 = arith.constant 0 : index
    %c0_3 = arith.constant 0 : index
    %c0_4 = arith.constant 0 : index
    %2 = vector.load %arg2[%c0_2, %c0_3, %c0_4] : memref<9x128x128xbf16, #tpu.memory_space<vmem>>, vector<1x128x128xbf16>
    %3 = vector.shape_cast %2 : vector<1x128x128xbf16> to vector<128x128xbf16>
    %cst = arith.constant dense<0.000000e+00> : vector<72x128xf32>
    %4 = tpu.matmul %1, %3, %cst {dimension_numbers = #tpu.dot_dimension_numbers<[1], [0], [0], [1], [0, 0, 1, 1], [], []>} : vector<72x128xbf16>, vector<128x128xbf16>, vector<72x128xf32> -> vector<72x128xf32>
    %c0_5 = arith.constant 0 : index
    %c81 = arith.constant 81 : index
    %c0_6 = arith.constant 0 : index
    %5 = vector.load %arg1[%c0_5, %c81, %c0_6] : memref<1x324x128xbf16, #tpu.memory_space<vmem>>, vector<1x72x128xbf16>
    %6 = vector.shape_cast %5 : vector<1x72x128xbf16> to vector<72x128xbf16>
    %c1 = arith.constant 1 : index
    %c0_7 = arith.constant 0 : index
    %c0_8 = arith.constant 0 : index
    %7 = vector.load %arg2[%c1, %c0_7, %c0_8] : memref<9x128x128xbf16, #tpu.memory_space<vmem>>, vector<1x128x128xbf16>
    %8 = vector.shape_cast %7 : vector<1x128x128xbf16> to vector<128x128xbf16>
    %cst_9 = arith.constant dense<0.000000e+00> : vector<72x128xf32>
    %9 = tpu.matmul %6, %8, %cst_9 {dimension_numbers = #tpu.dot_dimension_numbers<[1], [0], [0], [1], [0, 0, 1, 1], [], []>} : vector<72x128xbf16>, vector<128x128xbf16>, vector<72x128xf32> -> vector<72x128xf32>
    %10 = arith.addf %4, %9 : vector<72x128xf32>
    %c0_10 = arith.constant 0 : index
    %c1_11 = arith.constant 1 : index
    %c0_12 = arith.constant 0 : index
    %11 = vector.load %arg1[%c0_10, %c1_11, %c0_12] : memref<1x324x128xbf16, #tpu.memory_space<vmem>>, vector<1x72x128xbf16>
    %12 = vector.shape_cast %11 : vector<1x72x128xbf16> to vector<72x128xbf16>
    %c2 = arith.constant 2 : index
    %c0_13 = arith.constant 0 : index
    %c0_14 = arith.constant 0 : index
    %13 = vector.load %arg2[%c2, %c0_13, %c0_14] : memref<9x128x128xbf16, #tpu.memory_space<vmem>>, vector<1x128x128xbf16>
    %14 = vector.shape_cast %13 : vector<1x128x128xbf16> to vector<128x128xbf16>
    %cst_15 = arith.constant dense<0.000000e+00> : vector<72x128xf32>
    %15 = tpu.matmul %12, %14, %cst_15 {dimension_numbers = #tpu.dot_dimension_numbers<[1], [0], [0], [1], [0, 0, 1, 1], [], []>} : vector<72x128xbf16>, vector<128x128xbf16>, vector<72x128xf32> -> vector<72x128xf32>
    %16 = arith.addf %10, %15 : vector<72x128xf32>
    %c0_16 = arith.constant 0 : index
    %c162 = arith.constant 162 : index
    %c0_17 = arith.constant 0 : index
    %17 = vector.load %arg1[%c0_16, %c162, %c0_17] : memref<1x324x128xbf16, #tpu.memory_space<vmem>>, vector<1x72x128xbf16>
    %18 = vector.shape_cast %17 : vector<1x72x128xbf16> to vector<72x128xbf16>
    %c3 = arith.constant 3 : index
    %c0_18 = arith.constant 0 : index
    %c0_19 = arith.constant 0 : index
    %19 = vector.load %arg2[%c3, %c0_18, %c0_19] : memref<9x128x128xbf16, #tpu.memory_space<vmem>>, vector<1x128x128xbf16>
    %20 = vector.shape_cast %19 : vector<1x128x128xbf16> to vector<128x128xbf16>
    %cst_20 = arith.constant dense<0.000000e+00> : vector<72x128xf32>
    %21 = tpu.matmul %18, %20, %cst_20 {dimension_numbers = #tpu.dot_dimension_numbers<[1], [0], [0], [1], [0, 0, 1, 1], [], []>} : vector<72x128xbf16>, vector<128x128xbf16>, vector<72x128xf32> -> vector<72x128xf32>
    %22 = arith.addf %16, %21 : vector<72x128xf32>
    %c0_21 = arith.constant 0 : index
    %c243 = arith.constant 243 : index
    %c0_22 = arith.constant 0 : index
    %23 = vector.load %arg1[%c0_21, %c243, %c0_22] : memref<1x324x128xbf16, #tpu.memory_space<vmem>>, vector<1x72x128xbf16>
    %24 = vector.shape_cast %23 : vector<1x72x128xbf16> to vector<72x128xbf16>
    %c4 = arith.constant 4 : index
    %c0_23 = arith.constant 0 : index
    %c0_24 = arith.constant 0 : index
    %25 = vector.load %arg2[%c4, %c0_23, %c0_24] : memref<9x128x128xbf16, #tpu.memory_space<vmem>>, vector<1x128x128xbf16>
    %26 = vector.shape_cast %25 : vector<1x128x128xbf16> to vector<128x128xbf16>
    %cst_25 = arith.constant dense<0.000000e+00> : vector<72x128xf32>
    %27 = tpu.matmul %24, %26, %cst_25 {dimension_numbers = #tpu.dot_dimension_numbers<[1], [0], [0], [1], [0, 0, 1, 1], [], []>} : vector<72x128xbf16>, vector<128x128xbf16>, vector<72x128xf32> -> vector<72x128xf32>
    %28 = arith.addf %22, %27 : vector<72x128xf32>
    %c0_26 = arith.constant 0 : index
    %c163 = arith.constant 163 : index
    %c0_27 = arith.constant 0 : index
    %29 = vector.load %arg1[%c0_26, %c163, %c0_27] : memref<1x324x128xbf16, #tpu.memory_space<vmem>>, vector<1x72x128xbf16>
    %30 = vector.shape_cast %29 : vector<1x72x128xbf16> to vector<72x128xbf16>
    %c5 = arith.constant 5 : index
    %c0_28 = arith.constant 0 : index
    %c0_29 = arith.constant 0 : index
    %31 = vector.load %arg2[%c5, %c0_28, %c0_29] : memref<9x128x128xbf16, #tpu.memory_space<vmem>>, vector<1x128x128xbf16>
    %32 = vector.shape_cast %31 : vector<1x128x128xbf16> to vector<128x128xbf16>
    %cst_30 = arith.constant dense<0.000000e+00> : vector<72x128xf32>
    %33 = tpu.matmul %30, %32, %cst_30 {dimension_numbers = #tpu.dot_dimension_numbers<[1], [0], [0], [1], [0, 0, 1, 1], [], []>} : vector<72x128xbf16>, vector<128x128xbf16>, vector<72x128xf32> -> vector<72x128xf32>
    %34 = arith.addf %28, %33 : vector<72x128xf32>
    %c0_31 = arith.constant 0 : index
    %c9 = arith.constant 9 : index
    %c0_32 = arith.constant 0 : index
    %35 = vector.load %arg1[%c0_31, %c9, %c0_32] : memref<1x324x128xbf16, #tpu.memory_space<vmem>>, vector<1x72x128xbf16>
    %36 = vector.shape_cast %35 : vector<1x72x128xbf16> to vector<72x128xbf16>
    %c6 = arith.constant 6 : index
    %c0_33 = arith.constant 0 : index
    %c0_34 = arith.constant 0 : index
    %37 = vector.load %arg2[%c6, %c0_33, %c0_34] : memref<9x128x128xbf16, #tpu.memory_space<vmem>>, vector<1x128x128xbf16>
    %38 = vector.shape_cast %37 : vector<1x128x128xbf16> to vector<128x128xbf16>
    %cst_35 = arith.constant dense<0.000000e+00> : vector<72x128xf32>
    %39 = tpu.matmul %36, %38, %cst_35 {dimension_numbers = #tpu.dot_dimension_numbers<[1], [0], [0], [1], [0, 0, 1, 1], [], []>} : vector<72x128xbf16>, vector<128x128xbf16>, vector<72x128xf32> -> vector<72x128xf32>
    %40 = arith.addf %34, %39 : vector<72x128xf32>
    %c0_36 = arith.constant 0 : index
    %c90 = arith.constant 90 : index
    %c0_37 = arith.constant 0 : index
    %41 = vector.load %arg1[%c0_36, %c90, %c0_37] : memref<1x324x128xbf16, #tpu.memory_space<vmem>>, vector<1x72x128xbf16>
    %42 = vector.shape_cast %41 : vector<1x72x128xbf16> to vector<72x128xbf16>
    %c7 = arith.constant 7 : index
    %c0_38 = arith.constant 0 : index
    %c0_39 = arith.constant 0 : index
    %43 = vector.load %arg2[%c7, %c0_38, %c0_39] : memref<9x128x128xbf16, #tpu.memory_space<vmem>>, vector<1x128x128xbf16>
    %44 = vector.shape_cast %43 : vector<1x128x128xbf16> to vector<128x128xbf16>
    %cst_40 = arith.constant dense<0.000000e+00> : vector<72x128xf32>
    %45 = tpu.matmul %42, %44, %cst_40 {dimension_numbers = #tpu.dot_dimension_numbers<[1], [0], [0], [1], [0, 0, 1, 1], [], []>} : vector<72x128xbf16>, vector<128x128xbf16>, vector<72x128xf32> -> vector<72x128xf32>
    %46 = arith.addf %40, %45 : vector<72x128xf32>
    %c0_41 = arith.constant 0 : index
    %c10 = arith.constant 10 : index
    %c0_42 = arith.constant 0 : index
    %47 = vector.load %arg1[%c0_41, %c10, %c0_42] : memref<1x324x128xbf16, #tpu.memory_space<vmem>>, vector<1x72x128xbf16>
    %48 = vector.shape_cast %47 : vector<1x72x128xbf16> to vector<72x128xbf16>
    %c8 = arith.constant 8 : index
    %c0_43 = arith.constant 0 : index
    %c0_44 = arith.constant 0 : index
    %49 = vector.load %arg2[%c8, %c0_43, %c0_44] : memref<9x128x128xbf16, #tpu.memory_space<vmem>>, vector<1x128x128xbf16>
    %50 = vector.shape_cast %49 : vector<1x128x128xbf16> to vector<128x128xbf16>
    %cst_45 = arith.constant dense<0.000000e+00> : vector<72x128xf32>
    %51 = tpu.matmul %48, %50, %cst_45 {dimension_numbers = #tpu.dot_dimension_numbers<[1], [0], [0], [1], [0, 0, 1, 1], [], []>} : vector<72x128xbf16>, vector<128x128xbf16>, vector<72x128xf32> -> vector<72x128xf32>
    %52 = arith.addf %46, %51 : vector<72x128xf32>
    %c0_46 = arith.constant 0 : index
    %c0_47 = arith.constant 0 : index
    %53 = vector.load %arg3[%c0_46, %c0_47] : memref<1x128xf32, #tpu.memory_space<vmem>>, vector<1x128xf32>
    %54 = vector.broadcast %53 : vector<1x128xf32> to vector<72x128xf32>
    %55 = arith.addf %52, %54 : vector<72x128xf32>
    %56 = arith.truncf %55 : vector<72x128xf32> to vector<72x128xbf16>
    %c0_48 = arith.constant 0 : index
    %c0_49 = arith.constant 0 : index
    %c0_50 = arith.constant 0 : index
    %57 = vector.load %arg4[%c0_48, %c0_49, %c0_50] : memref<1x72x128xbf16, #tpu.memory_space<vmem>>, vector<1x72x128xbf16>
    %58 = vector.shape_cast %57 : vector<1x72x128xbf16> to vector<72x128xbf16>
    %59 = vector.shape_cast %56 : vector<72x128xbf16> to vector<1x72x128xbf16>
    tpu.vector_store %arg4[%c0_48, %c0_49, %c0_50], %59 {strides = array<i32>} : memref<1x72x128xbf16, #tpu.memory_space<vmem>>, vector<1x72x128xbf16>,
    return
  }
  func.func @transform_0(%arg0: i32) -> (i32, i32, i32) {
    %c0_i32 = arith.constant 0 : i32
    %c0_i32_0 = arith.constant 0 : i32
    %c0_i32_1 = arith.constant 0 : i32
    return %arg0, %c0_i32, %c0_i32_0 : i32, i32, i32
  }
  func.func @transform_1(%arg0: i32) -> (i32, i32, i32) {
    %c0_i32 = arith.constant 0 : i32
    %c0_i32_0 = arith.constant 0 : i32
    %c0_i32_1 = arith.constant 0 : i32
    %c0_i32_2 = arith.constant 0 : i32
    return %c0_i32, %c0_i32_0, %c0_i32_1 : i32, i32, i32
  }
  func.func @transform_2(%arg0: i32) -> (i32, i32) {
    %c0_i32 = arith.constant 0 : i32
    %c0_i32_0 = arith.constant 0 : i32
    %c0_i32_1 = arith.constant 0 : i32
    return %c0_i32, %c0_i32_0 : i32, i32
  }
  func.func @transform_3(%arg0: i32) -> (i32, i32, i32) {
    %c0_i32 = arith.constant 0 : i32
    %c0_i32_0 = arith.constant 0 : i32
    %c0_i32_1 = arith.constant 0 : i32
    return %arg0, %c0_i32, %c0_i32_0 : i32, i32, i32
  }
}

module attributes {stable_mosaic.version = 11 : i64} {
  func.func @kernel(%arg0: i32, %arg1: memref<1x102x128xbf16, #tpu.memory_space<vmem>>, %arg2: memref<9x128x128xbf16, #tpu.memory_space<vmem>>, %arg3: memref<1x128xf32, #tpu.memory_space<vmem>>, %arg4: memref<1x80x128xbf16, #tpu.memory_space<vmem>>, %arg5: memref<1x80x128xf32, #tpu.memory_space<vmem>>) attributes {dimension_semantics = [#tpu.dimension_semantics<parallel>], iteration_bounds = array<i64: 2>, scalar_prefetch = 0 : i64, scratch_operands = 0 : i64, tpu.core_type = #tpu.core_type<tc>, window_params = [{transform_indices = @transform_0, window_bounds = array<i64: 1, 102, 128>}, {pipeline_mode = #tpu.pipeline_mode<synchronous>, transform_indices = @transform_1, window_bounds = array<i64: 9, 128, 128>}, {pipeline_mode = #tpu.pipeline_mode<synchronous>, transform_indices = @transform_2, window_bounds = array<i64: 1, 128>}, {transform_indices = @transform_3, window_bounds = array<i64: 1, 80, 128>}, {transform_indices = @transform_4, window_bounds = array<i64: 1, 80, 128>}]} {
    %c0 = arith.constant 0 : index
    %c0_0 = arith.constant 0 : index
    %c0_1 = arith.constant 0 : index
    %0 = vector.load %arg1[%c0, %c0_0, %c0_1] : memref<1x102x128xbf16, #tpu.memory_space<vmem>>, vector<1x80x128xbf16>
    %1 = vector.shape_cast %0 : vector<1x80x128xbf16> to vector<80x128xbf16>
    %c0_2 = arith.constant 0 : index
    %c0_3 = arith.constant 0 : index
    %c0_4 = arith.constant 0 : index
    %2 = vector.load %arg2[%c0_2, %c0_3, %c0_4] : memref<9x128x128xbf16, #tpu.memory_space<vmem>>, vector<1x128x128xbf16>
    %3 = vector.shape_cast %2 : vector<1x128x128xbf16> to vector<128x128xbf16>
    %cst = arith.constant dense<0.000000e+00> : vector<80x128xf32>
    %4 = tpu.matmul %1, %3, %cst {dimension_numbers = #tpu.dot_dimension_numbers<[1], [0], [0], [1], [0, 0, 1, 1], [], []>} : vector<80x128xbf16>, vector<128x128xbf16>, vector<80x128xf32> -> vector<80x128xf32>
    %c0_5 = arith.constant 0 : index
    %c1 = arith.constant 1 : index
    %c0_6 = arith.constant 0 : index
    %5 = vector.load %arg1[%c0_5, %c1, %c0_6] : memref<1x102x128xbf16, #tpu.memory_space<vmem>>, vector<1x80x128xbf16>
    %6 = vector.shape_cast %5 : vector<1x80x128xbf16> to vector<80x128xbf16>
    %c1_7 = arith.constant 1 : index
    %c0_8 = arith.constant 0 : index
    %c0_9 = arith.constant 0 : index
    %7 = vector.load %arg2[%c1_7, %c0_8, %c0_9] : memref<9x128x128xbf16, #tpu.memory_space<vmem>>, vector<1x128x128xbf16>
    %8 = vector.shape_cast %7 : vector<1x128x128xbf16> to vector<128x128xbf16>
    %cst_10 = arith.constant dense<0.000000e+00> : vector<80x128xf32>
    %9 = tpu.matmul %6, %8, %cst_10 {dimension_numbers = #tpu.dot_dimension_numbers<[1], [0], [0], [1], [0, 0, 1, 1], [], []>} : vector<80x128xbf16>, vector<128x128xbf16>, vector<80x128xf32> -> vector<80x128xf32>
    %10 = arith.addf %4, %9 : vector<80x128xf32>
    %c0_11 = arith.constant 0 : index
    %c2 = arith.constant 2 : index
    %c0_12 = arith.constant 0 : index
    %11 = vector.load %arg1[%c0_11, %c2, %c0_12] : memref<1x102x128xbf16, #tpu.memory_space<vmem>>, vector<1x80x128xbf16>
    %12 = vector.shape_cast %11 : vector<1x80x128xbf16> to vector<80x128xbf16>
    %c2_13 = arith.constant 2 : index
    %c0_14 = arith.constant 0 : index
    %c0_15 = arith.constant 0 : index
    %13 = vector.load %arg2[%c2_13, %c0_14, %c0_15] : memref<9x128x128xbf16, #tpu.memory_space<vmem>>, vector<1x128x128xbf16>
    %14 = vector.shape_cast %13 : vector<1x128x128xbf16> to vector<128x128xbf16>
    %cst_16 = arith.constant dense<0.000000e+00> : vector<80x128xf32>
    %15 = tpu.matmul %12, %14, %cst_16 {dimension_numbers = #tpu.dot_dimension_numbers<[1], [0], [0], [1], [0, 0, 1, 1], [], []>} : vector<80x128xbf16>, vector<128x128xbf16>, vector<80x128xf32> -> vector<80x128xf32>
    %16 = arith.addf %10, %15 : vector<80x128xf32>
    %c0_17 = arith.constant 0 : index
    %c10 = arith.constant 10 : index
    %c0_18 = arith.constant 0 : index
    %17 = vector.load %arg1[%c0_17, %c10, %c0_18] : memref<1x102x128xbf16, #tpu.memory_space<vmem>>, vector<1x80x128xbf16>
    %18 = vector.shape_cast %17 : vector<1x80x128xbf16> to vector<80x128xbf16>
    %c3 = arith.constant 3 : index
    %c0_19 = arith.constant 0 : index
    %c0_20 = arith.constant 0 : index
    %19 = vector.load %arg2[%c3, %c0_19, %c0_20] : memref<9x128x128xbf16, #tpu.memory_space<vmem>>, vector<1x128x128xbf16>
    %20 = vector.shape_cast %19 : vector<1x128x128xbf16> to vector<128x128xbf16>
    %cst_21 = arith.constant dense<0.000000e+00> : vector<80x128xf32>
    %21 = tpu.matmul %18, %20, %cst_21 {dimension_numbers = #tpu.dot_dimension_numbers<[1], [0], [0], [1], [0, 0, 1, 1], [], []>} : vector<80x128xbf16>, vector<128x128xbf16>, vector<80x128xf32> -> vector<80x128xf32>
    %22 = arith.addf %16, %21 : vector<80x128xf32>
    %c0_22 = arith.constant 0 : index
    %c11 = arith.constant 11 : index
    %c0_23 = arith.constant 0 : index
    %23 = vector.load %arg1[%c0_22, %c11, %c0_23] : memref<1x102x128xbf16, #tpu.memory_space<vmem>>, vector<1x80x128xbf16>
    %24 = vector.shape_cast %23 : vector<1x80x128xbf16> to vector<80x128xbf16>
    %c4 = arith.constant 4 : index
    %c0_24 = arith.constant 0 : index
    %c0_25 = arith.constant 0 : index
    %25 = vector.load %arg2[%c4, %c0_24, %c0_25] : memref<9x128x128xbf16, #tpu.memory_space<vmem>>, vector<1x128x128xbf16>
    %26 = vector.shape_cast %25 : vector<1x128x128xbf16> to vector<128x128xbf16>
    %cst_26 = arith.constant dense<0.000000e+00> : vector<80x128xf32>
    %27 = tpu.matmul %24, %26, %cst_26 {dimension_numbers = #tpu.dot_dimension_numbers<[1], [0], [0], [1], [0, 0, 1, 1], [], []>} : vector<80x128xbf16>, vector<128x128xbf16>, vector<80x128xf32> -> vector<80x128xf32>
    %28 = arith.addf %22, %27 : vector<80x128xf32>
    %c0_27 = arith.constant 0 : index
    %c12 = arith.constant 12 : index
    %c0_28 = arith.constant 0 : index
    %29 = vector.load %arg1[%c0_27, %c12, %c0_28] : memref<1x102x128xbf16, #tpu.memory_space<vmem>>, vector<1x80x128xbf16>
    %30 = vector.shape_cast %29 : vector<1x80x128xbf16> to vector<80x128xbf16>
    %c5 = arith.constant 5 : index
    %c0_29 = arith.constant 0 : index
    %c0_30 = arith.constant 0 : index
    %31 = vector.load %arg2[%c5, %c0_29, %c0_30] : memref<9x128x128xbf16, #tpu.memory_space<vmem>>, vector<1x128x128xbf16>
    %32 = vector.shape_cast %31 : vector<1x128x128xbf16> to vector<128x128xbf16>
    %cst_31 = arith.constant dense<0.000000e+00> : vector<80x128xf32>
    %33 = tpu.matmul %30, %32, %cst_31 {dimension_numbers = #tpu.dot_dimension_numbers<[1], [0], [0], [1], [0, 0, 1, 1], [], []>} : vector<80x128xbf16>, vector<128x128xbf16>, vector<80x128xf32> -> vector<80x128xf32>
    %34 = arith.addf %28, %33 : vector<80x128xf32>
    %c0_32 = arith.constant 0 : index
    %c20 = arith.constant 20 : index
    %c0_33 = arith.constant 0 : index
    %35 = vector.load %arg1[%c0_32, %c20, %c0_33] : memref<1x102x128xbf16, #tpu.memory_space<vmem>>, vector<1x80x128xbf16>
    %36 = vector.shape_cast %35 : vector<1x80x128xbf16> to vector<80x128xbf16>
    %c6 = arith.constant 6 : index
    %c0_34 = arith.constant 0 : index
    %c0_35 = arith.constant 0 : index
    %37 = vector.load %arg2[%c6, %c0_34, %c0_35] : memref<9x128x128xbf16, #tpu.memory_space<vmem>>, vector<1x128x128xbf16>
    %38 = vector.shape_cast %37 : vector<1x128x128xbf16> to vector<128x128xbf16>
    %cst_36 = arith.constant dense<0.000000e+00> : vector<80x128xf32>
    %39 = tpu.matmul %36, %38, %cst_36 {dimension_numbers = #tpu.dot_dimension_numbers<[1], [0], [0], [1], [0, 0, 1, 1], [], []>} : vector<80x128xbf16>, vector<128x128xbf16>, vector<80x128xf32> -> vector<80x128xf32>
    %40 = arith.addf %34, %39 : vector<80x128xf32>
    %c0_37 = arith.constant 0 : index
    %c21 = arith.constant 21 : index
    %c0_38 = arith.constant 0 : index
    %41 = vector.load %arg1[%c0_37, %c21, %c0_38] : memref<1x102x128xbf16, #tpu.memory_space<vmem>>, vector<1x80x128xbf16>
    %42 = vector.shape_cast %41 : vector<1x80x128xbf16> to vector<80x128xbf16>
    %c7 = arith.constant 7 : index
    %c0_39 = arith.constant 0 : index
    %c0_40 = arith.constant 0 : index
    %43 = vector.load %arg2[%c7, %c0_39, %c0_40] : memref<9x128x128xbf16, #tpu.memory_space<vmem>>, vector<1x128x128xbf16>
    %44 = vector.shape_cast %43 : vector<1x128x128xbf16> to vector<128x128xbf16>
    %cst_41 = arith.constant dense<0.000000e+00> : vector<80x128xf32>
    %45 = tpu.matmul %42, %44, %cst_41 {dimension_numbers = #tpu.dot_dimension_numbers<[1], [0], [0], [1], [0, 0, 1, 1], [], []>} : vector<80x128xbf16>, vector<128x128xbf16>, vector<80x128xf32> -> vector<80x128xf32>
    %46 = arith.addf %40, %45 : vector<80x128xf32>
    %c0_42 = arith.constant 0 : index
    %c22 = arith.constant 22 : index
    %c0_43 = arith.constant 0 : index
    %47 = vector.load %arg1[%c0_42, %c22, %c0_43] : memref<1x102x128xbf16, #tpu.memory_space<vmem>>, vector<1x80x128xbf16>
    %48 = vector.shape_cast %47 : vector<1x80x128xbf16> to vector<80x128xbf16>
    %c8 = arith.constant 8 : index
    %c0_44 = arith.constant 0 : index
    %c0_45 = arith.constant 0 : index
    %49 = vector.load %arg2[%c8, %c0_44, %c0_45] : memref<9x128x128xbf16, #tpu.memory_space<vmem>>, vector<1x128x128xbf16>
    %50 = vector.shape_cast %49 : vector<1x128x128xbf16> to vector<128x128xbf16>
    %cst_46 = arith.constant dense<0.000000e+00> : vector<80x128xf32>
    %51 = tpu.matmul %48, %50, %cst_46 {dimension_numbers = #tpu.dot_dimension_numbers<[1], [0], [0], [1], [0, 0, 1, 1], [], []>} : vector<80x128xbf16>, vector<128x128xbf16>, vector<80x128xf32> -> vector<80x128xf32>
    %52 = arith.addf %46, %51 : vector<80x128xf32>
    %c0_47 = arith.constant 0 : index
    %c0_48 = arith.constant 0 : index
    %53 = vector.load %arg3[%c0_47, %c0_48] : memref<1x128xf32, #tpu.memory_space<vmem>>, vector<1x128xf32>
    %54 = vector.broadcast %53 : vector<1x128xf32> to vector<80x128xf32>
    %55 = arith.addf %52, %54 : vector<80x128xf32>
    %c0_49 = arith.constant 0 : index
    %c0_50 = arith.constant 0 : index
    %c0_51 = arith.constant 0 : index
    %56 = vector.load %arg4[%c0_49, %c0_50, %c0_51] : memref<1x80x128xbf16, #tpu.memory_space<vmem>>, vector<1x80x128xbf16>
    %57 = vector.shape_cast %56 : vector<1x80x128xbf16> to vector<80x128xbf16>
    %58 = arith.extf %57 : vector<80x128xbf16> to vector<80x128xf32>
    %59 = arith.addf %55, %58 : vector<80x128xf32>
    %c0_52 = arith.constant 0 : index
    %c0_53 = arith.constant 0 : index
    %c0_54 = arith.constant 0 : index
    %60 = vector.load %arg5[%c0_52, %c0_53, %c0_54] : memref<1x80x128xf32, #tpu.memory_space<vmem>>, vector<1x80x128xf32>
    %61 = vector.shape_cast %60 : vector<1x80x128xf32> to vector<80x128xf32>
    %62 = vector.shape_cast %59 : vector<80x128xf32> to vector<1x80x128xf32>
    tpu.vector_store %arg5[%c0_52, %c0_53, %c0_54], %62 {strides = array<i32>} : memref<1x80x128xf32, #tpu.memory_space<vmem>>, vector<1x80x128xf32>,
    return
  }
  func.func @transform_0(%arg0: i32) -> (i32, i32, i32) {
    %c0_i32 = arith.constant 0 : i32
    %c0_i32_0 = arith.constant 0 : i32
    %c0_i32_1 = arith.constant 0 : i32
    return %arg0, %c0_i32, %c0_i32_0 : i32, i32, i32
  }
  func.func @transform_1(%arg0: i32) -> (i32, i32, i32) {
    %c0_i32 = arith.constant 0 : i32
    %c0_i32_0 = arith.constant 0 : i32
    %c0_i32_1 = arith.constant 0 : i32
    %c0_i32_2 = arith.constant 0 : i32
    return %c0_i32, %c0_i32_0, %c0_i32_1 : i32, i32, i32
  }
  func.func @transform_2(%arg0: i32) -> (i32, i32) {
    %c0_i32 = arith.constant 0 : i32
    %c0_i32_0 = arith.constant 0 : i32
    %c0_i32_1 = arith.constant 0 : i32
    return %c0_i32, %c0_i32_0 : i32, i32
  }
  func.func @transform_3(%arg0: i32) -> (i32, i32, i32) {
    %c0_i32 = arith.constant 0 : i32
    %c0_i32_0 = arith.constant 0 : i32
    %c0_i32_1 = arith.constant 0 : i32
    return %arg0, %c0_i32, %c0_i32_0 : i32, i32, i32
  }
  func.func @transform_4(%arg0: i32) -> (i32, i32, i32) {
    %c0_i32 = arith.constant 0 : i32
    %c0_i32_0 = arith.constant 0 : i32
    %c0_i32_1 = arith.constant 0 : i32
    return %arg0, %c0_i32, %c0_i32_0 : i32, i32, i32
  }
}

</mosaic_0001>

<llo_original>
// kernel: basic_block_v1_forward.4
$region0: #{basic_block_v1_forward.4}
  #allocation0 [shape = 'u32[]', space=smem, size = 0x4, offset = 0x4, fixed_abs, tag = 'smem constant byte address 0x4 - core index']
  #allocation1 [shape = 'u32[144,128]{1,0:T(1,128)}', space=vmem, size = 0x12000, scoped, tag = 'internal scratch']
  %s0 = inlined_call_operand.hbm [shape: bf16[2,256,128], index: 0, kind: input, shape index: {}]
  %s1 = inlined_call_operand.hbm [shape: bf16[1,128,128], index: 1, kind: input, shape index: {}]
  %s2 = inlined_call_operand.hbm [shape: f32[1,128], index: 2, kind: input, shape index: {}]
  %s3 = inlined_call_operand.hbm [shape: bf16[2,64,128], index: 3, kind: output, shape index: {}]
  %s4 = sld [smem:[#allocation0]]
  $region57: #{basic_block_v1_forward.4} parent=0
    _
  %s6 = ssub.s32 1, %s4
  %s7 = scalar_select 0, %s6, %s4
  $region1: #{basic_block_v1_forward.4} parent=0
    #allocation2 [shape = 'u8[131072]{0}', space=vmem, size = 0x20000, scoped, tag = 'input window, operand 0']
    #allocation3 [shape = 's32[2]{0}', space=sflag, size = 0x8, scoped, tag = 'scoped memory for basic_block_v1_forward.4']
    #allocation4 [shape = 's32[2]{0}', space=sflag, size = 0x8, scoped, tag = 'scoped memory for basic_block_v1_forward.4']
    #allocation5 [shape = 'u8[32768]{0}', space=vmem, size = 0x8000, scoped, tag = 'input window, operand 1, single buffered']
    #allocation6 [shape = 's32[1]{0}', space=sflag, size = 0x4, scoped, tag = 'scoped memory for basic_block_v1_forward.4']
    #allocation7 [shape = 'u8[512]{0}', space=vmem, size = 0x400, scoped, tag = 'input window, operand 2, single buffered']
    #allocation8 [shape = 'u8[32768]{0}', space=vmem, size = 0x8000, scoped, tag = 'output window, operand 0']
    %8 = vsyncpa [#allocation3], 0
    %s9 = scalar_lea.sflag [#allocation3], 1
    %10 = vsyncpa %s9, 0
    %11 = vsyncpa [#allocation6], 0
    %12 = vsyncpa [#allocation4], 0
    %s13 = scalar_lea.sflag [#allocation4], 1
    %14 = vsyncpa %s13, 0
    loop: start=0, step=1, limit=4
    $region2: #{basic_block_v1_forward.4} parent=1 // loop_pre_header
      _
    $region3: #{basic_block_v1_forward.4} parent=1 // loop_header
      %s16 = sphi 0, %s20
      %p17 = scmp.ge.s32.totalorder %s16, 4
      %s26 = sphi 0, %s28
      %s29 = sphi 0, %s26
      %s30 = sphi 0, %s29
      %s46 = sphi 0, %s30
      %s50 = sphi 0, %s50
      %s52 = sphi 0, %s50
      %s53 = sphi 0, %s52
      %s67 = sphi 0, %s53
      %s71 = sphi 0, %s71
      %s73 = sphi 0, %s71
      %s74 = sphi 0, %s73
      %s88 = sphi 0, %s74
      %s94 = sphi 0, %s96
      %s97 = sphi 0, %s94
      %s98 = sphi 0, %s97
      %s114 = sphi 0, %s98
    $region4: #{basic_block_v1_forward.4} parent=1 // loop_header_branch
      %19 = sbr.rel (%p17) target = $region8
    $region5: #{basic_block_v1_forward.4} parent=1 // loop_body
      %s21 = ssub.s32 %s16, 1
      %s22 = ssub.s32 %s16, 2
      %s23 = sadd.s32 %s16, 1
      %s24 = ssub.s32 %s16, %s23
      %p25 = scmp.eq.s32.totalorder %s24, 0
      %s27 = sadd.s32 %s26, 1
      %s28 = scalar_select %p25, %s26, %s27
      %p31 = pneg %p25
      %p32 = scmp.eq.s32.totalorder %s16, 1
      %p33 = por %p31, %p32
      %p34 = scmp.ne.s32.totalorder %s26, %s29
      %p35 = scmp.eq.s32.totalorder %s16, 0
      %p36 = por %p34, %p35
      %p37 = scmp.ne.s32.totalorder %s26, %s29
      %p38 = scmp.eq.s32.totalorder %s21, 1
      %p39 = por %p37, %p38
      %p40 = scmp.ne.s32.totalorder %s29, %s30
      %p41 = scmp.eq.s32.totalorder %s21, 0
      %p42 = por %p40, %p41
      %p43 = scmp.ne.s32.totalorder %s29, %s30
      %p44 = scmp.eq.s32.totalorder %s22, 1
      %p45 = por %p43, %p44
      %p47 = scmp.ne.s32.totalorder %s30, %s46
      %p48 = scmp.eq.s32.totalorder %s22, 0
      %p49 = por %p47, %p48
      %s51 = sadd.s32 %s50, 1
      %p54 = scmp.eq.s32.totalorder %s16, 1
      %p55 = scmp.ne.s32.totalorder %s50, %s52
      %p56 = scmp.eq.s32.totalorder %s16, 0
      %p57 = por %p55, %p56
      %p58 = scmp.ne.s32.totalorder %s50, %s52
      %p59 = scmp.eq.s32.totalorder %s21, 1
      %p60 = por %p58, %p59
      %p61 = scmp.ne.s32.totalorder %s52, %s53
      %p62 = scmp.eq.s32.totalorder %s21, 0
      %p63 = por %p61, %p62
      %p64 = scmp.ne.s32.totalorder %s52, %s53
      %p65 = scmp.eq.s32.totalorder %s22, 1
      %p66 = por %p64, %p65
      %p68 = scmp.ne.s32.totalorder %s53, %s67
      %p69 = scmp.eq.s32.totalorder %s22, 0
      %p70 = por %p68, %p69
      %s72 = sadd.s32 %s71, 1
      %p75 = scmp.eq.s32.totalorder %s16, 1
      %p76 = scmp.ne.s32.totalorder %s71, %s73
      %p77 = scmp.eq.s32.totalorder %s16, 0
      %p78 = por %p76, %p77
      %p79 = scmp.ne.s32.totalorder %s71, %s73
      %p80 = scmp.eq.s32.totalorder %s21, 1
      %p81 = por %p79, %p80
      %p82 = scmp.ne.s32.totalorder %s73, %s74
      %p83 = scmp.eq.s32.totalorder %s21, 0
      %p84 = por %p82, %p83
      %p85 = scmp.ne.s32.totalorder %s73, %s74
      %p86 = scmp.eq.s32.totalorder %s22, 1
      %p87 = por %p85, %p86
      %p89 = scmp.ne.s32.totalorder %s74, %s88
      %p90 = scmp.eq.s32.totalorder %s22, 0
      %p91 = por %p89, %p90
      %s92 = ssub.s32 %s16, %s23
      %p93 = scmp.eq.s32.totalorder %s92, 0
      %s95 = sadd.s32 %s94, 1
      %s96 = scalar_select %p93, %s94, %s95
      %p99 = pneg %p93
      %p100 = scmp.eq.s32.totalorder %s16, 1
      %p101 = por %p99, %p100
      %p102 = scmp.ne.s32.totalorder %s94, %s97
      %p103 = scmp.eq.s32.totalorder %s16, 0
      %p104 = por %p102, %p103
      %p105 = scmp.ne.s32.totalorder %s94, %s97
      %p106 = scmp.eq.s32.totalorder %s21, 1
      %p107 = por %p105, %p106
      %p108 = scmp.ne.s32.totalorder %s97, %s98
      %p109 = scmp.eq.s32.totalorder %s21, 0
      %p110 = por %p108, %p109
      %p111 = scmp.ne.s32.totalorder %s97, %s98
      %p112 = scmp.eq.s32.totalorder %s22, 1
      %p113 = por %p111, %p112
      %p115 = scmp.ne.s32.totalorder %s98, %s114
      %p116 = scmp.eq.s32.totalorder %s22, 0
      %p117 = por %p115, %p116
      %p118 = scmp.le.s32.totalorder 1, %s16
      %p119 = scmp.lt.s32.totalorder %s16, 3
      %p120 = pnand %p118, %p119
      %p121 = pneg %p120
      // Predicated region
      $region9: #{basic_block_v1_forward.4} parent=5 // pred_check
        _
      $region10: #{basic_block_v1_forward.4} parent=5 // pred_check_branch
        %123 = sbr.rel (%p120) target = $region12
      $region11: #{basic_block_v1_forward.4} parent=5 // pred_region
        %s124 = ssub.s32 %s16, 1
        // Predicated region
        $region13: #{basic_block_v1_forward.4} parent=11 // pred_check
          %p125 = pneg %p63
        $region14: #{basic_block_v1_forward.4} parent=11 // pred_check_branch
          %127 = sbr.rel (%p125) target = $region16
        $region15: #{basic_block_v1_forward.4} parent=11 // pred_region
          %s129 = ssub.s32 1024, 1024
          %130 = vsyncadd [#allocation6], %s129
          %s131 = sshll.u32 [#allocation5], 4
          %s132 = int_to_ptr.vmem [resolvable:$true] %s131
          %137 = dma.hbm_to_vmem [thread:$0]  %s1, 1024, %s132, [#allocation6], 64, 64, 4
        $region16: #{basic_block_v1_forward.4} parent=11 // pred_fallthru
          _
        // Predicated region
        $region17: #{basic_block_v1_forward.4} parent=11 // pred_check
          %p138 = pneg %p84
        $region18: #{basic_block_v1_forward.4} parent=11 // pred_check_branch
          %140 = sbr.rel (%p138) target = $region20
        $region19: #{basic_block_v1_forward.4} parent=11 // pred_region
          %s142 = ssub.s32 16, 16
          %143 = vsyncadd [#allocation6], %s142
          %s145 = sshll.u32 [#allocation7], 4
          %s146 = int_to_ptr.vmem [resolvable:$true] %s145
          %148 = dma.hbm_to_vmem [thread:$0]  %s2, 16, %s146, [#allocation6]
        $region20: #{basic_block_v1_forward.4} parent=11 // pred_fallthru
          _
      $region12: #{basic_block_v1_forward.4} parent=5 // pred_fallthru
        _
      %p149 = scmp.lt.s32.totalorder %s16, 2
      // Predicated region
      $region21: #{basic_block_v1_forward.4} parent=5 // pred_check
        %p150 = pneg %p149
      $region22: #{basic_block_v1_forward.4} parent=5 // pred_check_branch
        %152 = sbr.rel (%p150) target = $region24
      $region23: #{basic_block_v1_forward.4} parent=5 // pred_region
        // Predicated region
        $region25: #{basic_block_v1_forward.4} parent=23 // pred_check
          %p153 = pneg %p36
        $region26: #{basic_block_v1_forward.4} parent=23 // pred_check_branch
          %155 = sbr.rel (%p153) target = $region28
        $region27: #{basic_block_v1_forward.4} parent=23 // pred_region
          %s156 = sand.u32 %s26, 1
          %s157 = scalar_lea.sflag [#allocation3], %s156
          %s158 = sand.u32 %s26, 1
          %s159 = smul.addr %s158, 128
          %s160 = scalar_lea.vmem [#allocation2], %s159
          %s162 = ssub.s32 2048, 2048
          %163 = vsyncadd %s157, %s162
          %s164 = smul.addr %s16, 32
          %s165 = smul.addr %s164, 64
          %s166 = scalar_lea.hbm %s0, %s165
          %s167 = sshll.u32 %s160, 4
          %s168 = int_to_ptr.vmem [resolvable:$true] %s167
          %173 = dma.hbm_to_vmem [thread:$0]  %s166, 2048, %s168, %s157, 64, 64, 4
        $region28: #{basic_block_v1_forward.4} parent=23 // pred_fallthru
          _
      $region24: #{basic_block_v1_forward.4} parent=5 // pred_fallthru
        _
      %p174 = scmp.le.s32.totalorder 1, %s16
      %p175 = scmp.lt.s32.totalorder %s16, 3
      %p176 = pnand %p174, %p175
      %p177 = pneg %p176
      // Predicated region
      $region29: #{basic_block_v1_forward.4} parent=5 // pred_check
        _
      $region30: #{basic_block_v1_forward.4} parent=5 // pred_check_branch
        %179 = sbr.rel (%p176) target = $region32
      $region31: #{basic_block_v1_forward.4} parent=5 // pred_region
        %s180 = ssub.s32 %s16, 1
        %s181 = sand.u32 %s29, 1
        %s182 = scalar_lea.sflag [#allocation3], %s181
        %s183 = sand.u32 %s29, 1
        %s184 = smul.addr %s183, 128
        %s185 = scalar_lea.vmem [#allocation2], %s184
        // Predicated region
        $region33: #{basic_block_v1_forward.4} parent=31 // pred_check
          %p186 = pneg %p42
        $region34: #{basic_block_v1_forward.4} parent=31 // pred_check_branch
          %188 = sbr.rel (%p186) target = $region36
        $region35: #{basic_block_v1_forward.4} parent=31 // pred_region
          %189 = dma.done %s182, 2048
        $region36: #{basic_block_v1_forward.4} parent=31 // pred_fallthru
          _
        // Predicated region
        $region37: #{basic_block_v1_forward.4} parent=31 // pred_check
          %p190 = pneg %p63
        $region38: #{basic_block_v1_forward.4} parent=31 // pred_check_branch
          %192 = sbr.rel (%p190) target = $region40
        $region39: #{basic_block_v1_forward.4} parent=31 // pred_region
          %193 = dma.done [#allocation6], 1024
        $region40: #{basic_block_v1_forward.4} parent=31 // pred_fallthru
          _
        // Predicated region
        $region41: #{basic_block_v1_forward.4} parent=31 // pred_check
          %p194 = pneg %p84
        $region42: #{basic_block_v1_forward.4} parent=31 // pred_check_branch
          %196 = sbr.rel (%p194) target = $region44
        $region43: #{basic_block_v1_forward.4} parent=31 // pred_region
          %197 = dma.done [#allocation6], 16
        $region44: #{basic_block_v1_forward.4} parent=31 // pred_fallthru
          _
        %s198 = sand.u32 %s29, 1
        %s199 = scalar_lea.sflag [#allocation3], %s198
        %s200 = sand.u32 %s29, 1
        %s201 = smul.addr %s200, 128
        %s202 = scalar_lea.vmem [#allocation2], %s201
        %p203 = pneg %p42
        %p204 = pneg %p39
        %p205 = pneg %p63
        %p206 = pneg %p60
        %p207 = pneg %p84
        %p208 = pneg %p81
        %p209 = pneg %p110
        %p210 = pneg %p107
        %s211 = sand.u32 %s97, 1
        %s212 = scalar_lea.sflag [#allocation4], %s211
        %s213 = sand.u32 %s97, 1
        %s214 = smul.addr %s213, 32
        %s215 = scalar_lea.vmem [#allocation8], %s214
        %v217 = vld [vmem:[%s185] sm:$0xf]
        %v218 = vld [vmem:[%s185 + $0x4] sm:$0xf]
        %v219 = vld [vmem:[%s185 + $0x8] sm:$0xf]
        %v220 = vld [vmem:[%s185 + $0xc] sm:$0xf]
        %v221 = vld [vmem:[%s185 + $0x10] sm:$0xf]
        %v222 = vld [vmem:[%s185 + $0x14] sm:$0xf]
        %v223 = vld [vmem:[%s185 + $0x18] sm:$0xf]
        %v224 = vld [vmem:[%s185 + $0x1c] sm:$0xf]
        %v225 = vld [vmem:[#allocation5] sm:$0xf]
        %v226 = vld [vmem:[#allocation5 + $0x4] sm:$0xf]
        %v227 = vld [vmem:[#allocation5 + $0x8] sm:$0xf]
        %v228 = vld [vmem:[#allocation5 + $0xc] sm:$0xf]
        %v229 = vld [vmem:[#allocation5 + $0x10] sm:$0xf]
        %v230 = vld [vmem:[#allocation5 + $0x14] sm:$0xf]
        %v231 = vld [vmem:[#allocation5 + $0x18] sm:$0xf]
        %v232 = vld [vmem:[#allocation5 + $0x1c] sm:$0xf]
        %v233 = vld [vmem:[#allocation5 + $0x20] sm:$0xf]
        %v234 = vld [vmem:[#allocation5 + $0x24] sm:$0xf]
        %v235 = vld [vmem:[#allocation5 + $0x28] sm:$0xf]
        %v236 = vld [vmem:[#allocation5 + $0x2c] sm:$0xf]
        %v237 = vld [vmem:[#allocation5 + $0x30] sm:$0xf]
        %v238 = vld [vmem:[#allocation5 + $0x34] sm:$0xf]
        %v239 = vld [vmem:[#allocation5 + $0x38] sm:$0xf]
        %v240 = vld [vmem:[#allocation5 + $0x3c] sm:$0xf]
        %v241 = vld [vmem:[#allocation7] sm:$0x1]
        %v243 = vlaneseq
        %v244 = vshrl.u32 %v243, 7
        %v245 = vsub.s32 0, %v244
        %v246 = vrot.slane %v241, %v245
        %v256 = vunpack.c.l.b16 %v217
        %v257 = vunpack.c.l.b16 %v218
        %v258 = vunpack.c.l.b16 %v219
        %v259 = vunpack.c.l.b16 %v220
        %v260 = vunpack.c.l.b16 %v221
        %v261 = vunpack.c.l.b16 %v222
        %v262 = vunpack.c.l.b16 %v223
        %v263 = vunpack.c.l.b16 %v224
        %v264 = vpack.c.b16 %v257, %v256
        %v265 = vpack.c.b16 %v259, %v258
        %v266 = vpack.c.b16 %v261, %v260
        %v267 = vpack.c.b16 %v263, %v262
        %v288 = vunpack.c.l.b16 %v225
        %v289 = vunpack.c.l.b16 %v226
        %v290 = vunpack.c.l.b16 %v227
        %v291 = vunpack.c.l.b16 %v228
        %v292 = vunpack.c.l.b16 %v229
        %v293 = vunpack.c.l.b16 %v230
        %v294 = vunpack.c.l.b16 %v231
        %v295 = vunpack.c.l.b16 %v232
        %v296 = vunpack.c.l.b16 %v233
        %v297 = vunpack.c.l.b16 %v234
        %v298 = vunpack.c.l.b16 %v235
        %v299 = vunpack.c.l.b16 %v236
        %v300 = vunpack.c.l.b16 %v237
        %v301 = vunpack.c.l.b16 %v238
        %v302 = vunpack.c.l.b16 %v239
        %v303 = vunpack.c.l.b16 %v240
        %v304 = vpack.c.b16 %v289, %v288
        %v305 = vpack.c.b16 %v291, %v290
        %v306 = vpack.c.b16 %v293, %v292
        %v307 = vpack.c.b16 %v295, %v294
        %v308 = vpack.c.b16 %v297, %v296
        %v309 = vpack.c.b16 %v299, %v298
        %v310 = vpack.c.b16 %v301, %v300
        %v311 = vpack.c.b16 %v303, %v302
        %320 = vmatprep.subr.bf16.mxu0 0
        %321 = vmatpush1.bf16.msra.mxu0 %v304
        %322 = vmatprep.subr.bf16.mxu0 0
        %323 = vmatpush1.bf16.msra.mxu0 %v305
        %324 = vmatprep.subr.bf16.mxu0 0
        %325 = vmatpush1.bf16.msra.mxu0 %v306
        %326 = vmatprep.subr.bf16.mxu0 0
        %327 = vmatpush1.bf16.msra.mxu0 %v307
        %328 = vmatprep.subr.bf16.mxu0 0
        %329 = vmatpush1.bf16.msra.mxu0 %v308
        %330 = vmatprep.subr.bf16.mxu0 0
        %331 = vmatpush1.bf16.msra.mxu0 %v309
        %332 = vmatprep.subr.bf16.mxu0 0
        %333 = vmatpush1.bf16.msra.mxu0 %v310
        %334 = vmatprep.subr.bf16.mxu0 0
        %335 = vmatpush1.bf16.msra.mxu0 %v311
        %336 = vmatprep.subr.bf16.mxu0 0
        %337 = vmatpush1.bf16.msra.mxu0 0
        %338 = vmatprep.subr.bf16.mxu0 0
        %339 = vmatpush1.bf16.msra.mxu0 0
        %340 = vmatprep.subr.bf16.mxu0 0
        %341 = vmatpush1.bf16.msra.mxu0 0
        %342 = vmatprep.subr.bf16.mxu0 0
        %343 = vmatpush1.bf16.msra.mxu0 0
        %344 = vmatprep.subr.bf16.mxu0 0
        %345 = vmatpush1.bf16.msra.mxu0 0
        %346 = vmatprep.subr.bf16.mxu0 0
        %347 = vmatpush1.bf16.msra.mxu0 0
        %348 = vmatprep.subr.bf16.mxu0 0
        %349 = vmatpush1.bf16.msra.mxu0 0
        %350 = vmatprep.subr.bf16.mxu0 0
        %351 = vmatpush1.bf16.msra.mxu0 0
        %352 = vmatprep.mubr.bf16.mxu0 0
        %353 = vmatmul.mubr.bf16.gmra.mrb[0].mxu0 %v264
        %v354 = vpop.f32.mrb[0].mxu0
        %v355 = vadd.f32 %v246, %v354
        %v356 = vpop.f32.mrb[0].mxu0
        %v357 = vpop.f32.mrb[0].mxu0
        %v358 = vadd.f32 %v246, %v357
        %v359 = vpop.f32.mrb[0].mxu0
        %360 = vmatprep.mubr.bf16.mxu0 0
        %361 = vmatmul.mubr.bf16.gmra.mrb[0].mxu0 %v265
        %v362 = vpop.f32.mrb[0].mxu0
        %v363 = vadd.f32 %v246, %v362
        %v364 = vpop.f32.mrb[0].mxu0
        %v365 = vpop.f32.mrb[0].mxu0
        %v366 = vadd.f32 %v246, %v365
        %v367 = vpop.f32.mrb[0].mxu0
        %368 = vmatprep.mubr.bf16.mxu0 0
        %369 = vmatmul.mubr.bf16.gmra.mrb[0].mxu0 %v266
        %v370 = vpop.f32.mrb[0].mxu0
        %v371 = vadd.f32 %v246, %v370
        %v372 = vpop.f32.mrb[0].mxu0
        %v373 = vpop.f32.mrb[0].mxu0
        %v374 = vadd.f32 %v246, %v373
        %v375 = vpop.f32.mrb[0].mxu0
        %376 = vmatprep.mubr.bf16.mxu0 0
        %377 = vmatmul.mubr.bf16.gmra.mrb[0].mxu0 %v267
        %v378 = vpop.f32.mrb[0].mxu0
        %v379 = vadd.f32 %v246, %v378
        %v380 = vpop.f32.mrb[0].mxu0
        %v381 = vpop.f32.mrb[0].mxu0
        %v382 = vadd.f32 %v246, %v381
        %v383 = vpop.f32.mrb[0].mxu0
        %384 = vdwg.mxu0
        %v385 = vpack.c.bf16 %v358, %v355
        %v386 = vpack.c.bf16 %v366, %v363
        %v387 = vpack.c.bf16 %v374, %v371
        %v388 = vpack.c.bf16 %v382, %v379
        %v393 = vunpack.c.l.b16 %v385
        %v394 = vunpack.c.h.b16 %v385
        %v395 = vunpack.c.l.b16 %v386
        %v396 = vunpack.c.h.b16 %v386
        %v397 = vunpack.c.l.b16 %v387
        %v398 = vunpack.c.h.b16 %v387
        %v399 = vunpack.c.l.b16 %v388
        %v400 = vunpack.c.h.b16 %v388
        %v401 = vpack.c.b16 %v393, %v393
        %v402 = vpack.c.b16 %v394, %v394
        %v403 = vpack.c.b16 %v395, %v395
        %v404 = vpack.c.b16 %v396, %v396
        %v405 = vpack.c.b16 %v397, %v397
        %v406 = vpack.c.b16 %v398, %v398
        %v407 = vpack.c.b16 %v399, %v399
        %v408 = vpack.c.b16 %v400, %v400
        %417 = vst [vmem:[%s215] sm:$0xf] %v401
        %418 = vst [vmem:[%s215 + $0x4] sm:$0xf] %v402
        %419 = vst [vmem:[%s215 + $0x8] sm:$0xf] %v403
        %420 = vst [vmem:[%s215 + $0xc] sm:$0xf] %v404
        %421 = vst [vmem:[%s215 + $0x10] sm:$0xf] %v405
        %422 = vst [vmem:[%s215 + $0x14] sm:$0xf] %v406
        %423 = vst [vmem:[%s215 + $0x18] sm:$0xf] %v407
        %424 = vst [vmem:[%s215 + $0x1c] sm:$0xf] %v408
        %s425 = sand.u32 %s97, 1
        %s426 = scalar_lea.sflag [#allocation4], %s425
        %s427 = sand.u32 %s97, 1
        %s428 = smul.addr %s427, 32
        %s429 = scalar_lea.vmem [#allocation8], %s428
        // Predicated region
        $region45: #{basic_block_v1_forward.4} parent=31 // pred_check
          %p430 = pneg %p107
        $region46: #{basic_block_v1_forward.4} parent=31 // pred_check_branch
          %432 = sbr.rel (%p430) target = $region48
        $region47: #{basic_block_v1_forward.4} parent=31 // pred_region
          %s434 = ssub.s32 512, 512
          %435 = vsyncadd %s426, %s434
          %s436 = smul.addr %s21, 8
          %s437 = smul.addr %s436, 64
          %s438 = scalar_lea.hbm %s3, %s437
          %s439 = sshll.u32 %s429, 4
          %s440 = int_to_ptr.vmem [resolvable:$true] %s439
          %445 = dma.vmem_to_hbm [thread:$0]  %s440, 512, %s438, %s426, 64, 64, 4
        $region48: #{basic_block_v1_forward.4} parent=31 // pred_fallthru
          _
      $region32: #{basic_block_v1_forward.4} parent=5 // pred_fallthru
        _
      %p446 = scmp.le.s32.totalorder 2, %s16
      // Predicated region
      $region49: #{basic_block_v1_forward.4} parent=5 // pred_check
        %p447 = pneg %p446
      $region50: #{basic_block_v1_forward.4} parent=5 // pred_check_branch
        %449 = sbr.rel (%p447) target = $region52
      $region51: #{basic_block_v1_forward.4} parent=5 // pred_region
        %s450 = ssub.s32 %s16, 2
        // Predicated region
        $region53: #{basic_block_v1_forward.4} parent=51 // pred_check
          %p451 = pneg %p113
        $region54: #{basic_block_v1_forward.4} parent=51 // pred_check_branch
          %453 = sbr.rel (%p451) target = $region56
        $region55: #{basic_block_v1_forward.4} parent=51 // pred_region
          %s454 = sand.u32 %s98, 1
          %s455 = scalar_lea.sflag [#allocation4], %s454
          %s456 = sand.u32 %s98, 1
          %s457 = smul.addr %s456, 32
          %s458 = scalar_lea.vmem [#allocation8], %s457
          %459 = dma.done %s455, 512
        $region56: #{basic_block_v1_forward.4} parent=51 // pred_fallthru
          _
      $region52: #{basic_block_v1_forward.4} parent=5 // pred_fallthru
        _
    $region6: #{basic_block_v1_forward.4} parent=1 // loop_footer
      %s20 = sadd.s32 1, %s16
    $region7: #{basic_block_v1_forward.4} parent=1 // loop_footer_branch
      %15 = sbr.rel target = $region3
    $region8: #{basic_block_v1_forward.4} parent=1 // loop_exit
      _
    %460 = vsyncpa [#allocation3], 1
    %s461 = scalar_lea.sflag [#allocation3], 1
    %462 = vsyncpa %s461, 1
    %463 = vsyncpa [#allocation6], 1
    %464 = vsyncpa [#allocation4], 1
    %s465 = scalar_lea.sflag [#allocation4], 1
    %466 = vsyncpa %s465, 1

// kernel: basic_block_v1_forward.3
$region0: #{basic_block_v1_forward.3}
  #allocation0 [shape = 'u32[]', space=smem, size = 0x4, offset = 0x4, fixed_abs, tag = 'smem constant byte address 0x4 - core index']
  #allocation1 [shape = 'u32[144,128]{1,0:T(1,128)}', space=vmem, size = 0x12000, scoped, tag = 'internal scratch']
  %s0 = inlined_call_operand.hbm [shape: bf16[2,324,128], index: 0, kind: input, shape index: {}]
  %s1 = inlined_call_operand.hbm [shape: bf16[9,128,128], index: 1, kind: input, shape index: {}]
  %s2 = inlined_call_operand.hbm [shape: f32[1,128], index: 2, kind: input, shape index: {}]
  %s3 = inlined_call_operand.hbm [shape: bf16[2,72,128], index: 3, kind: output, shape index: {}]
  %s4 = sld [smem:[#allocation0]]
  $region57: #{basic_block_v1_forward.3} parent=0
    _
  %s6 = ssub.s32 1, %s4
  %s7 = scalar_select 0, %s6, %s4
  $region1: #{basic_block_v1_forward.3} parent=0
    #allocation2 [shape = 'u8[167936]{0}', space=vmem, size = 0x29000, scoped, tag = 'input window, operand 0']
    #allocation3 [shape = 's32[2]{0}', space=sflag, size = 0x8, scoped, tag = 'scoped memory for basic_block_v1_forward.3']
    #allocation4 [shape = 's32[2]{0}', space=sflag, size = 0x8, scoped, tag = 'scoped memory for basic_block_v1_forward.3']
    #allocation5 [shape = 'u8[294912]{0}', space=vmem, size = 0x48000, scoped, tag = 'input window, operand 1, single buffered']
    #allocation6 [shape = 's32[1]{0}', space=sflag, size = 0x4, scoped, tag = 'scoped memory for basic_block_v1_forward.3']
    #allocation7 [shape = 'u8[512]{0}', space=vmem, size = 0x400, scoped, tag = 'input window, operand 2, single buffered']
    #allocation8 [shape = 'u8[36864]{0}', space=vmem, size = 0x9000, scoped, tag = 'output window, operand 0']
    %8 = vsyncpa [#allocation3], 0
    %s9 = scalar_lea.sflag [#allocation3], 1
    %10 = vsyncpa %s9, 0
    %11 = vsyncpa [#allocation6], 0
    %12 = vsyncpa [#allocation4], 0
    %s13 = scalar_lea.sflag [#allocation4], 1
    %14 = vsyncpa %s13, 0
    loop: start=0, step=1, limit=4
    $region2: #{basic_block_v1_forward.3} parent=1 // loop_pre_header
      _
    $region3: #{basic_block_v1_forward.3} parent=1 // loop_header
      %s16 = sphi 0, %s20
      %p17 = scmp.ge.s32.totalorder %s16, 4
      %s26 = sphi 0, %s28
      %s29 = sphi 0, %s26
      %s30 = sphi 0, %s29
      %s46 = sphi 0, %s30
      %s50 = sphi 0, %s50
      %s52 = sphi 0, %s50
      %s53 = sphi 0, %s52
      %s67 = sphi 0, %s53
      %s71 = sphi 0, %s71
      %s73 = sphi 0, %s71
      %s74 = sphi 0, %s73
      %s88 = sphi 0, %s74
      %s94 = sphi 0, %s96
      %s97 = sphi 0, %s94
      %s98 = sphi 0, %s97
      %s114 = sphi 0, %s98
    $region4: #{basic_block_v1_forward.3} parent=1 // loop_header_branch
      %19 = sbr.rel (%p17) target = $region8
    $region5: #{basic_block_v1_forward.3} parent=1 // loop_body
      %s21 = ssub.s32 %s16, 1
      %s22 = ssub.s32 %s16, 2
      %s23 = sadd.s32 %s16, 1
      %s24 = ssub.s32 %s16, %s23
      %p25 = scmp.eq.s32.totalorder %s24, 0
      %s27 = sadd.s32 %s26, 1
      %s28 = scalar_select %p25, %s26, %s27
      %p31 = pneg %p25
      %p32 = scmp.eq.s32.totalorder %s16, 1
      %p33 = por %p31, %p32
      %p34 = scmp.ne.s32.totalorder %s26, %s29
      %p35 = scmp.eq.s32.totalorder %s16, 0
      %p36 = por %p34, %p35
      %p37 = scmp.ne.s32.totalorder %s26, %s29
      %p38 = scmp.eq.s32.totalorder %s21, 1
      %p39 = por %p37, %p38
      %p40 = scmp.ne.s32.totalorder %s29, %s30
      %p41 = scmp.eq.s32.totalorder %s21, 0
      %p42 = por %p40, %p41
      %p43 = scmp.ne.s32.totalorder %s29, %s30
      %p44 = scmp.eq.s32.totalorder %s22, 1
      %p45 = por %p43, %p44
      %p47 = scmp.ne.s32.totalorder %s30, %s46
      %p48 = scmp.eq.s32.totalorder %s22, 0
      %p49 = por %p47, %p48
      %s51 = sadd.s32 %s50, 1
      %p54 = scmp.eq.s32.totalorder %s16, 1
      %p55 = scmp.ne.s32.totalorder %s50, %s52
      %p56 = scmp.eq.s32.totalorder %s16, 0
      %p57 = por %p55, %p56
      %p58 = scmp.ne.s32.totalorder %s50, %s52
      %p59 = scmp.eq.s32.totalorder %s21, 1
      %p60 = por %p58, %p59
      %p61 = scmp.ne.s32.totalorder %s52, %s53
      %p62 = scmp.eq.s32.totalorder %s21, 0
      %p63 = por %p61, %p62
      %p64 = scmp.ne.s32.totalorder %s52, %s53
      %p65 = scmp.eq.s32.totalorder %s22, 1
      %p66 = por %p64, %p65
      %p68 = scmp.ne.s32.totalorder %s53, %s67
      %p69 = scmp.eq.s32.totalorder %s22, 0
      %p70 = por %p68, %p69
      %s72 = sadd.s32 %s71, 1
      %p75 = scmp.eq.s32.totalorder %s16, 1
      %p76 = scmp.ne.s32.totalorder %s71, %s73
      %p77 = scmp.eq.s32.totalorder %s16, 0
      %p78 = por %p76, %p77
      %p79 = scmp.ne.s32.totalorder %s71, %s73
      %p80 = scmp.eq.s32.totalorder %s21, 1
      %p81 = por %p79, %p80
      %p82 = scmp.ne.s32.totalorder %s73, %s74
      %p83 = scmp.eq.s32.totalorder %s21, 0
      %p84 = por %p82, %p83
      %p85 = scmp.ne.s32.totalorder %s73, %s74
      %p86 = scmp.eq.s32.totalorder %s22, 1
      %p87 = por %p85, %p86
      %p89 = scmp.ne.s32.totalorder %s74, %s88
      %p90 = scmp.eq.s32.totalorder %s22, 0
      %p91 = por %p89, %p90
      %s92 = ssub.s32 %s16, %s23
      %p93 = scmp.eq.s32.totalorder %s92, 0
      %s95 = sadd.s32 %s94, 1
      %s96 = scalar_select %p93, %s94, %s95
      %p99 = pneg %p93
      %p100 = scmp.eq.s32.totalorder %s16, 1
      %p101 = por %p99, %p100
      %p102 = scmp.ne.s32.totalorder %s94, %s97
      %p103 = scmp.eq.s32.totalorder %s16, 0
      %p104 = por %p102, %p103
      %p105 = scmp.ne.s32.totalorder %s94, %s97
      %p106 = scmp.eq.s32.totalorder %s21, 1
      %p107 = por %p105, %p106
      %p108 = scmp.ne.s32.totalorder %s97, %s98
      %p109 = scmp.eq.s32.totalorder %s21, 0
      %p110 = por %p108, %p109
      %p111 = scmp.ne.s32.totalorder %s97, %s98
      %p112 = scmp.eq.s32.totalorder %s22, 1
      %p113 = por %p111, %p112
      %p115 = scmp.ne.s32.totalorder %s98, %s114
      %p116 = scmp.eq.s32.totalorder %s22, 0
      %p117 = por %p115, %p116
      %p118 = scmp.le.s32.totalorder 1, %s16
      %p119 = scmp.lt.s32.totalorder %s16, 3
      %p120 = pnand %p118, %p119
      %p121 = pneg %p120
      // Predicated region
      $region9: #{basic_block_v1_forward.3} parent=5 // pred_check
        _
      $region10: #{basic_block_v1_forward.3} parent=5 // pred_check_branch
        %123 = sbr.rel (%p120) target = $region12
      $region11: #{basic_block_v1_forward.3} parent=5 // pred_region
        %s124 = ssub.s32 %s16, 1
        // Predicated region
        $region13: #{basic_block_v1_forward.3} parent=11 // pred_check
          %p125 = pneg %p63
        $region14: #{basic_block_v1_forward.3} parent=11 // pred_check_branch
          %127 = sbr.rel (%p125) target = $region16
        $region15: #{basic_block_v1_forward.3} parent=11 // pred_region
          %s129 = ssub.s32 9216, 9216
          %130 = vsyncadd [#allocation6], %s129
          %s131 = sshll.u32 [#allocation5], 4
          %s132 = int_to_ptr.vmem [resolvable:$true] %s131
          %137 = dma.hbm_to_vmem [thread:$0]  %s1, 9216, %s132, [#allocation6], 64, 64, 4
        $region16: #{basic_block_v1_forward.3} parent=11 // pred_fallthru
          _
        // Predicated region
        $region17: #{basic_block_v1_forward.3} parent=11 // pred_check
          %p138 = pneg %p84
        $region18: #{basic_block_v1_forward.3} parent=11 // pred_check_branch
          %140 = sbr.rel (%p138) target = $region20
        $region19: #{basic_block_v1_forward.3} parent=11 // pred_region
          %s142 = ssub.s32 16, 16
          %143 = vsyncadd [#allocation6], %s142
          %s145 = sshll.u32 [#allocation7], 4
          %s146 = int_to_ptr.vmem [resolvable:$true] %s145
          %148 = dma.hbm_to_vmem [thread:$0]  %s2, 16, %s146, [#allocation6]
        $region20: #{basic_block_v1_forward.3} parent=11 // pred_fallthru
          _
      $region12: #{basic_block_v1_forward.3} parent=5 // pred_fallthru
        _
      %p149 = scmp.lt.s32.totalorder %s16, 2
      // Predicated region
      $region21: #{basic_block_v1_forward.3} parent=5 // pred_check
        %p150 = pneg %p149
      $region22: #{basic_block_v1_forward.3} parent=5 // pred_check_branch
        %152 = sbr.rel (%p150) target = $region24
      $region23: #{basic_block_v1_forward.3} parent=5 // pred_region
        // Predicated region
        $region25: #{basic_block_v1_forward.3} parent=23 // pred_check
          %p153 = pneg %p36
        $region26: #{basic_block_v1_forward.3} parent=23 // pred_check_branch
          %155 = sbr.rel (%p153) target = $region28
        $region27: #{basic_block_v1_forward.3} parent=23 // pred_region
          %s156 = sand.u32 %s26, 1
          %s157 = scalar_lea.sflag [#allocation3], %s156
          %s158 = sand.u32 %s26, 1
          %s159 = smul.addr %s158, 164
          %s160 = scalar_lea.vmem [#allocation2], %s159
          %s162 = ssub.s32 2624, 2624
          %163 = vsyncadd %s157, %s162
          %s164 = smul.addr %s16, 41
          %s165 = smul.addr %s164, 64
          %s166 = scalar_lea.hbm %s0, %s165
          %s167 = sshll.u32 %s160, 4
          %s168 = int_to_ptr.vmem [resolvable:$true] %s167
          %173 = dma.hbm_to_vmem [thread:$0]  %s166, 2624, %s168, %s157, 64, 64, 4
        $region28: #{basic_block_v1_forward.3} parent=23 // pred_fallthru
          _
      $region24: #{basic_block_v1_forward.3} parent=5 // pred_fallthru
        _
      %p174 = scmp.le.s32.totalorder 1, %s16
      %p175 = scmp.lt.s32.totalorder %s16, 3
      %p176 = pnand %p174, %p175
      %p177 = pneg %p176
      // Predicated region
      $region29: #{basic_block_v1_forward.3} parent=5 // pred_check
        _
      $region30: #{basic_block_v1_forward.3} parent=5 // pred_check_branch
        %179 = sbr.rel (%p176) target = $region32
      $region31: #{basic_block_v1_forward.3} parent=5 // pred_region
        %s180 = ssub.s32 %s16, 1
        %s181 = sand.u32 %s29, 1
        %s182 = scalar_lea.sflag [#allocation3], %s181
        %s183 = sand.u32 %s29, 1
        %s184 = smul.addr %s183, 164
        %s185 = scalar_lea.vmem [#allocation2], %s184
        // Predicated region
        $region33: #{basic_block_v1_forward.3} parent=31 // pred_check
          %p186 = pneg %p42
        $region34: #{basic_block_v1_forward.3} parent=31 // pred_check_branch
          %188 = sbr.rel (%p186) target = $region36
        $region35: #{basic_block_v1_forward.3} parent=31 // pred_region
          %189 = dma.done %s182, 2624
        $region36: #{basic_block_v1_forward.3} parent=31 // pred_fallthru
          _
        // Predicated region
        $region37: #{basic_block_v1_forward.3} parent=31 // pred_check
          %p190 = pneg %p63
        $region38: #{basic_block_v1_forward.3} parent=31 // pred_check_branch
          %192 = sbr.rel (%p190) target = $region40
        $region39: #{basic_block_v1_forward.3} parent=31 // pred_region
          %193 = dma.done [#allocation6], 9216
        $region40: #{basic_block_v1_forward.3} parent=31 // pred_fallthru
          _
        // Predicated region
        $region41: #{basic_block_v1_forward.3} parent=31 // pred_check
          %p194 = pneg %p84
        $region42: #{basic_block_v1_forward.3} parent=31 // pred_check_branch
          %196 = sbr.rel (%p194) target = $region44
        $region43: #{basic_block_v1_forward.3} parent=31 // pred_region
          %197 = dma.done [#allocation6], 16
        $region44: #{basic_block_v1_forward.3} parent=31 // pred_fallthru
          _
        %s198 = sand.u32 %s29, 1
        %s199 = scalar_lea.sflag [#allocation3], %s198
        %s200 = sand.u32 %s29, 1
        %s201 = smul.addr %s200, 164
        %s202 = scalar_lea.vmem [#allocation2], %s201
        %p203 = pneg %p42
        %p204 = pneg %p39
        %p205 = pneg %p63
        %p206 = pneg %p60
        %p207 = pneg %p84
        %p208 = pneg %p81
        %p209 = pneg %p110
        %p210 = pneg %p107
        %s211 = sand.u32 %s97, 1
        %s212 = scalar_lea.sflag [#allocation4], %s211
        %s213 = sand.u32 %s97, 1
        %s214 = smul.addr %s213, 36
        %s215 = scalar_lea.vmem [#allocation8], %s214
        %v217 = vld [vmem:[%s185] sm:$0xf]
        %v218 = vld [vmem:[%s185 + $0x4] sm:$0xf]
        %v219 = vld [vmem:[%s185 + $0x8] sm:$0xf]
        %v220 = vld [vmem:[%s185 + $0xc] sm:$0xf]
        %v221 = vld [vmem:[%s185 + $0x10] sm:$0xf]
        %v222 = vld [vmem:[%s185 + $0x14] sm:$0xf]
        %v223 = vld [vmem:[%s185 + $0x18] sm:$0xf]
        %v224 = vld [vmem:[%s185 + $0x1c] sm:$0xf]
        %v225 = vld [vmem:[%s185 + $0x20] sm:$0xf]
        %v226 = vld [vmem:[#allocation5] sm:$0xf]
        %v227 = vld [vmem:[#allocation5 + $0x4] sm:$0xf]
        %v228 = vld [vmem:[#allocation5 + $0x8] sm:$0xf]
        %v229 = vld [vmem:[#allocation5 + $0xc] sm:$0xf]
        %v230 = vld [vmem:[#allocation5 + $0x10] sm:$0xf]
        %v231 = vld [vmem:[#allocation5 + $0x14] sm:$0xf]
        %v232 = vld [vmem:[#allocation5 + $0x18] sm:$0xf]
        %v233 = vld [vmem:[#allocation5 + $0x1c] sm:$0xf]
        %v234 = vld [vmem:[#allocation5 + $0x20] sm:$0xf]
        %v235 = vld [vmem:[#allocation5 + $0x24] sm:$0xf]
        %v236 = vld [vmem:[#allocation5 + $0x28] sm:$0xf]
        %v237 = vld [vmem:[#allocation5 + $0x2c] sm:$0xf]
        %v238 = vld [vmem:[#allocation5 + $0x30] sm:$0xf]
        %v239 = vld [vmem:[#allocation5 + $0x34] sm:$0xf]
        %v240 = vld [vmem:[#allocation5 + $0x38] sm:$0xf]
        %v241 = vld [vmem:[#allocation5 + $0x3c] sm:$0xf]
        %v242 = vld [vmem:[%s185 + $0x28] sm:$0xf]
        %v243 = vld [vmem:[%s185 + $0x2c] sm:$0xf]
        %v244 = vld [vmem:[%s185 + $0x30] sm:$0xf]
        %v245 = vld [vmem:[%s185 + $0x34] sm:$0xf]
        %v246 = vld [vmem:[%s185 + $0x38] sm:$0xf]
        %v247 = vld [vmem:[%s185 + $0x3c] sm:$0xf]
        %v248 = vld [vmem:[%s185 + $0x40] sm:$0xf]
        %v249 = vld [vmem:[%s185 + $0x44] sm:$0xf]
        %v250 = vld [vmem:[%s185 + $0x48] sm:$0xf]
        %v251 = vld [vmem:[%s185 + $0x4c] sm:$0x1]
        %s252 = scalar_lea.vmem [#allocation5], 64
        %v253 = vld [vmem:[%s252] sm:$0xf]
        %v254 = vld [vmem:[%s252 + $0x4] sm:$0xf]
        %v255 = vld [vmem:[%s252 + $0x8] sm:$0xf]
        %v256 = vld [vmem:[%s252 + $0xc] sm:$0xf]
        %v257 = vld [vmem:[%s252 + $0x10] sm:$0xf]
        %v258 = vld [vmem:[%s252 + $0x14] sm:$0xf]
        %v259 = vld [vmem:[%s252 + $0x18] sm:$0xf]
        %v260 = vld [vmem:[%s252 + $0x1c] sm:$0xf]
        %v261 = vld [vmem:[%s252 + $0x20] sm:$0xf]
        %v262 = vld [vmem:[%s252 + $0x24] sm:$0xf]
        %v263 = vld [vmem:[%s252 + $0x28] sm:$0xf]
        %v264 = vld [vmem:[%s252 + $0x2c] sm:$0xf]
        %v265 = vld [vmem:[%s252 + $0x30] sm:$0xf]
        %v266 = vld [vmem:[%s252 + $0x34] sm:$0xf]
        %v267 = vld [vmem:[%s252 + $0x38] sm:$0xf]
        %v268 = vld [vmem:[%s252 + $0x3c] sm:$0xf]
        %v279 = vunpack.c.l.b16 %v242
        %v280 = vunpack.c.l.b16 %v243
        %v281 = vunpack.c.l.b16 %v244
        %v282 = vunpack.c.l.b16 %v245
        %v283 = vunpack.c.l.b16 %v246
        %v284 = vunpack.c.l.b16 %v247
        %v285 = vunpack.c.l.b16 %v248
        %v286 = vunpack.c.l.b16 %v249
        %v287 = vunpack.c.l.b16 %v250
        %v288 = vunpack.c.l.b16 %v251
        %v289 = vpack.c.b16 %v280, %v279
        %v290 = vpack.c.b16 %v282, %v281
        %v291 = vpack.c.b16 %v284, %v283
        %v292 = vpack.c.b16 %v286, %v285
        %v293 = vpack.c.b16 %v288, %v287
        %vm294 = vsmask.f32 7424
        %v296 = vshrl.u32 %v289, 16
        %v298 = vshll.u32 %v289, 16
        %v300 = vrot.slane %v298, 1
        %v301 = vor.u32 %v296, %v300
        %v303 = vshll.u32 %v290, 16
        %v305 = vrot.slane %v303, 1
        %v306 = vsel %vm294, %v301, %v305
        %v307 = vshrl.u32 %v290, 16
        %v309 = vor.u32 %v307, %v305
        %v311 = vshll.u32 %v291, 16
        %v313 = vrot.slane %v311, 1
        %v314 = vsel %vm294, %v309, %v313
        %v315 = vshrl.u32 %v291, 16
        %v317 = vor.u32 %v315, %v313
        %v319 = vshll.u32 %v292, 16
        %v321 = vrot.slane %v319, 1
        %v322 = vsel %vm294, %v317, %v321
        %v323 = vshrl.u32 %v292, 16
        %v325 = vor.u32 %v323, %v321
        %v327 = vshll.u32 %v293, 16
        %v329 = vrot.slane %v327, 1
        %v330 = vsel %vm294, %v325, %v329
        %v331 = vshrl.u32 %v293, 16
        %v333 = vor.u32 %v331, %v329
        %v355 = vunpack.c.l.b16 %v253
        %v356 = vunpack.c.l.b16 %v254
        %v357 = vunpack.c.l.b16 %v255
        %v358 = vunpack.c.l.b16 %v256
        %v359 = vunpack.c.l.b16 %v257
        %v360 = vunpack.c.l.b16 %v258
        %v361 = vunpack.c.l.b16 %v259
        %v362 = vunpack.c.l.b16 %v260
        %v363 = vunpack.c.l.b16 %v261
        %v364 = vunpack.c.l.b16 %v262
        %v365 = vunpack.c.l.b16 %v263
        %v366 = vunpack.c.l.b16 %v264
        %v367 = vunpack.c.l.b16 %v265
        %v368 = vunpack.c.l.b16 %v266
        %v369 = vunpack.c.l.b16 %v267
        %v370 = vunpack.c.l.b16 %v268
        %v371 = vpack.c.b16 %v356, %v355
        %v372 = vpack.c.b16 %v358, %v357
        %v373 = vpack.c.b16 %v360, %v359
        %v374 = vpack.c.b16 %v362, %v361
        %v375 = vpack.c.b16 %v364, %v363
        %v376 = vpack.c.b16 %v366, %v365
        %v377 = vpack.c.b16 %v368, %v367
        %v378 = vpack.c.b16 %v370, %v369
        %387 = vmatprep.subr.bf16.mxu0 0
        %388 = vmatpush1.bf16.msra.mxu0 %v371
        %389 = vmatprep.subr.bf16.mxu0 0
        %390 = vmatpush1.bf16.msra.mxu0 %v372
        %391 = vmatprep.subr.bf16.mxu0 0
        %392 = vmatpush1.bf16.msra.mxu0 %v373
        %393 = vmatprep.subr.bf16.mxu0 0
        %394 = vmatpush1.bf16.msra.mxu0 %v374
        %395 = vmatprep.subr.bf16.mxu0 0
        %396 = vmatpush1.bf16.msra.mxu0 %v375
        %397 = vmatprep.subr.bf16.mxu0 0
        %398 = vmatpush1.bf16.msra.mxu0 %v376
        %399 = vmatprep.subr.bf16.mxu0 0
        %400 = vmatpush1.bf16.msra.mxu0 %v377
        %401 = vmatprep.subr.bf16.mxu0 0
        %402 = vmatpush1.bf16.msra.mxu0 %v378
        %403 = vmatprep.subr.bf16.mxu0 0
        %404 = vmatpush1.bf16.msra.mxu0 0
        %405 = vmatprep.subr.bf16.mxu0 0
        %406 = vmatpush1.bf16.msra.mxu0 0
        %407 = vmatprep.subr.bf16.mxu0 0
        %408 = vmatpush1.bf16.msra.mxu0 0
        %409 = vmatprep.subr.bf16.mxu0 0
        %410 = vmatpush1.bf16.msra.mxu0 0
        %411 = vmatprep.subr.bf16.mxu0 0
        %412 = vmatpush1.bf16.msra.mxu0 0
        %413 = vmatprep.subr.bf16.mxu0 0
        %414 = vmatpush1.bf16.msra.mxu0 0
        %415 = vmatprep.subr.bf16.mxu0 0
        %416 = vmatpush1.bf16.msra.mxu0 0
        %417 = vmatprep.subr.bf16.mxu0 0
        %418 = vmatpush1.bf16.msra.mxu0 0
        %419 = vmatprep.mubr.bf16.mxu0 0
        %420 = vmatmul.mubr.bf16.gmra.mrb[0].mxu0 %v306
        %v421 = vpop.f32.mrb[0].mxu0
        %v422 = vadd.f32 0.0, %v421
        %v423 = vpop.f32.mrb[0].mxu0
        %v424 = vpop.f32.mrb[0].mxu0
        %v425 = vadd.f32 0.0, %v424
        %v426 = vpop.f32.mrb[0].mxu0
        %427 = vmatprep.mubr.bf16.mxu0 0
        %428 = vmatmul.mubr.bf16.gmra.mrb[0].mxu0 %v314
        %v429 = vpop.f32.mrb[0].mxu0
        %v430 = vadd.f32 0.0, %v429
        %v431 = vpop.f32.mrb[0].mxu0
        %v432 = vpop.f32.mrb[0].mxu0
        %v433 = vadd.f32 0.0, %v432
        %v434 = vpop.f32.mrb[0].mxu0
        %435 = vmatprep.mubr.bf16.mxu0 0
        %436 = vmatmul.mubr.bf16.gmra.mrb[0].mxu0 %v322
        %v437 = vpop.f32.mrb[0].mxu0
        %v438 = vadd.f32 0.0, %v437
        %v439 = vpop.f32.mrb[0].mxu0
        %v440 = vpop.f32.mrb[0].mxu0
        %v441 = vadd.f32 0.0, %v440
        %v442 = vpop.f32.mrb[0].mxu0
        %443 = vmatprep.mubr.bf16.mxu0 0
        %444 = vmatmul.mubr.bf16.gmra.mrb[0].mxu0 %v330
        %v445 = vpop.f32.mrb[0].mxu0
        %v446 = vadd.f32 0.0, %v445
        %v447 = vpop.f32.mrb[0].mxu0
        %v448 = vpop.f32.mrb[0].mxu0
        %v449 = vadd.f32 0.0, %v448
        %v450 = vpop.f32.mrb[0].mxu0
        %451 = vmatprep.mubr.bf16.mxu0 0
        %452 = vmatmul.mubr.bf16.gmra.mrb[0].mxu0 %v333
        %v453 = vpop.f32.mrb[0].mxu0
        %v454 = vadd.f32 0.0, %v453
        %v455 = vpop.f32.mrb[0].mxu0
        %v456 = vpop.f32.mrb[0].mxu0
        %v457 = vpop.f32.mrb[0].mxu0
        %458 = vdwg.mxu0
        %v468 = vunpack.c.l.b16 %v217
        %v469 = vunpack.c.l.b16 %v218
        %v470 = vunpack.c.l.b16 %v219
        %v471 = vunpack.c.l.b16 %v220
        %v472 = vunpack.c.l.b16 %v221
        %v473 = vunpack.c.l.b16 %v222
        %v474 = vunpack.c.l.b16 %v223
        %v475 = vunpack.c.l.b16 %v224
        %v476 = vunpack.c.l.b16 %v225
        %v477 = vpack.c.b16 %v469, %v468
        %v478 = vpack.c.b16 %v471, %v470
        %v479 = vpack.c.b16 %v473, %v472
        %v480 = vpack.c.b16 %v475, %v474
        %v481 = vpack.c.b16 %v476, %v476
        %v503 = vunpack.c.l.b16 %v226
        %v504 = vunpack.c.l.b16 %v227
        %v505 = vunpack.c.l.b16 %v228
        %v506 = vunpack.c.l.b16 %v229
        %v507 = vunpack.c.l.b16 %v230
        %v508 = vunpack.c.l.b16 %v231
        %v509 = vunpack.c.l.b16 %v232
        %v510 = vunpack.c.l.b16 %v233
        %v511 = vunpack.c.l.b16 %v234
        %v512 = vunpack.c.l.b16 %v235
        %v513 = vunpack.c.l.b16 %v236
        %v514 = vunpack.c.l.b16 %v237
        %v515 = vunpack.c.l.b16 %v238
        %v516 = vunpack.c.l.b16 %v239
        %v517 = vunpack.c.l.b16 %v240
        %v518 = vunpack.c.l.b16 %v241
        %v519 = vpack.c.b16 %v504, %v503
        %v520 = vpack.c.b16 %v506, %v505
        %v521 = vpack.c.b16 %v508, %v507
        %v522 = vpack.c.b16 %v510, %v509
        %v523 = vpack.c.b16 %v512, %v511
        %v524 = vpack.c.b16 %v514, %v513
        %v525 = vpack.c.b16 %v516, %v515
        %v526 = vpack.c.b16 %v518, %v517
        %535 = vmatprep.subr.bf16.mxu0 0
        %536 = vmatpush1.bf16.msra.mxu0 %v519
        %537 = vmatprep.subr.bf16.mxu0 0
        %538 = vmatpush1.bf16.msra.mxu0 %v520
        %539 = vmatprep.subr.bf16.mxu0 0
        %540 = vmatpush1.bf16.msra.mxu0 %v521
        %541 = vmatprep.subr.bf16.mxu0 0
        %542 = vmatpush1.bf16.msra.mxu0 %v522
        %543 = vmatprep.subr.bf16.mxu0 0
        %544 = vmatpush1.bf16.msra.mxu0 %v523
        %545 = vmatprep.subr.bf16.mxu0 0
        %546 = vmatpush1.bf16.msra.mxu0 %v524
        %547 = vmatprep.subr.bf16.mxu0 0
        %548 = vmatpush1.bf16.msra.mxu0 %v525
        %549 = vmatprep.subr.bf16.mxu0 0
        %550 = vmatpush1.bf16.msra.mxu0 %v526
        %551 = vmatprep.subr.bf16.mxu0 0
        %552 = vmatpush1.bf16.msra.mxu0 0
        %553 = vmatprep.subr.bf16.mxu0 0
        %554 = vmatpush1.bf16.msra.mxu0 0
        %555 = vmatprep.subr.bf16.mxu0 0
        %556 = vmatpush1.bf16.msra.mxu0 0
        %557 = vmatprep.subr.bf16.mxu0 0
        %558 = vmatpush1.bf16.msra.mxu0 0
        %559 = vmatprep.subr.bf16.mxu0 0
        %560 = vmatpush1.bf16.msra.mxu0 0
        %561 = vmatprep.subr.bf16.mxu0 0
        %562 = vmatpush1.bf16.msra.mxu0 0
        %563 = vmatprep.subr.bf16.mxu0 0
        %564 = vmatpush1.bf16.msra.mxu0 0
        %565 = vmatprep.subr.bf16.mxu0 0
        %566 = vmatpush1.bf16.msra.mxu0 0
        %567 = vmatprep.mubr.bf16.mxu0 0
        %568 = vmatmul.mubr.bf16.gmra.mrb[0].mxu0 %v477
        %v569 = vpop.f32.mrb[0].mxu0
        %v570 = vadd.f32 %v422, %v569
        %v571 = vpop.f32.mrb[0].mxu0
        %v572 = vpop.f32.mrb[0].mxu0
        %v573 = vadd.f32 %v425, %v572
        %v574 = vpop.f32.mrb[0].mxu0
        %575 = vmatprep.mubr.bf16.mxu0 0
        %576 = vmatmul.mubr.bf16.gmra.mrb[0].mxu0 %v478
        %v577 = vpop.f32.mrb[0].mxu0
        %v578 = vadd.f32 %v430, %v577
        %v579 = vpop.f32.mrb[0].mxu0
        %v580 = vpop.f32.mrb[0].mxu0
        %v581 = vadd.f32 %v433, %v580
        %v582 = vpop.f32.mrb[0].mxu0
        %583 = vmatprep.mubr.bf16.mxu0 0
        %584 = vmatmul.mubr.bf16.gmra.mrb[0].mxu0 %v479
        %v585 = vpop.f32.mrb[0].mxu0
        %v586 = vadd.f32 %v438, %v585
        %v587 = vpop.f32.mrb[0].mxu0
        %v588 = vpop.f32.mrb[0].mxu0
        %v589 = vadd.f32 %v441, %v588
        %v590 = vpop.f32.mrb[0].mxu0
        %591 = vmatprep.mubr.bf16.mxu0 0
        %592 = vmatmul.mubr.bf16.gmra.mrb[0].mxu0 %v480
        %v593 = vpop.f32.mrb[0].mxu0
        %v594 = vadd.f32 %v446, %v593
        %v595 = vpop.f32.mrb[0].mxu0
        %v596 = vpop.f32.mrb[0].mxu0
        %v597 = vadd.f32 %v449, %v596
        %v598 = vpop.f32.mrb[0].mxu0
        %599 = vmatprep.mubr.bf16.mxu0 0
        %600 = vmatmul.mubr.bf16.gmra.mrb[0].mxu0 %v481
        %v601 = vpop.f32.mrb[0].mxu0
        %v602 = vadd.f32 %v454, %v601
        %v603 = vpop.f32.mrb[0].mxu0
        %v604 = vpop.f32.mrb[0].mxu0
        %v605 = vpop.f32.mrb[0].mxu0
        %606 = vdwg.mxu0
        %v607 = vld [vmem:[%s185] sm:$0xf]
        %v608 = vld [vmem:[%s185 + $0x4] sm:$0xf]
        %v609 = vld [vmem:[%s185 + $0x8] sm:$0xf]
        %v610 = vld [vmem:[%s185 + $0xc] sm:$0xf]
        %v611 = vld [vmem:[%s185 + $0x10] sm:$0xf]
        %v612 = vld [vmem:[%s185 + $0x14] sm:$0xf]
        %v613 = vld [vmem:[%s185 + $0x18] sm:$0xf]
        %v614 = vld [vmem:[%s185 + $0x1c] sm:$0xf]
        %v615 = vld [vmem:[%s185 + $0x20] sm:$0xf]
        %v616 = vld [vmem:[%s185 + $0x24] sm:$0x1]
        %s617 = scalar_lea.vmem [#allocation5], 128
        %v618 = vld [vmem:[%s617] sm:$0xf]
        %v619 = vld [vmem:[%s617 + $0x4] sm:$0xf]
        %v620 = vld [vmem:[%s617 + $0x8] sm:$0xf]
        %v621 = vld [vmem:[%s617 + $0xc] sm:$0xf]
        %v622 = vld [vmem:[%s617 + $0x10] sm:$0xf]
        %v623 = vld [vmem:[%s617 + $0x14] sm:$0xf]
        %v624 = vld [vmem:[%s617 + $0x18] sm:$0xf]
        %v625 = vld [vmem:[%s617 + $0x1c] sm:$0xf]
        %v626 = vld [vmem:[%s617 + $0x20] sm:$0xf]
        %v627 = vld [vmem:[%s617 + $0x24] sm:$0xf]
        %v628 = vld [vmem:[%s617 + $0x28] sm:$0xf]
        %v629 = vld [vmem:[%s617 + $0x2c] sm:$0xf]
        %v630 = vld [vmem:[%s617 + $0x30] sm:$0xf]
        %v631 = vld [vmem:[%s617 + $0x34] sm:$0xf]
        %v632 = vld [vmem:[%s617 + $0x38] sm:$0xf]
        %v633 = vld [vmem:[%s617 + $0x3c] sm:$0xf]
        %v644 = vunpack.c.l.b16 %v607
        %v645 = vunpack.c.l.b16 %v608
        %v646 = vunpack.c.l.b16 %v609
        %v647 = vunpack.c.l.b16 %v610
        %v648 = vunpack.c.l.b16 %v611
        %v649 = vunpack.c.l.b16 %v612
        %v650 = vunpack.c.l.b16 %v613
        %v651 = vunpack.c.l.b16 %v614
        %v652 = vunpack.c.l.b16 %v615
        %v653 = vunpack.c.l.b16 %v616
        %v654 = vpack.c.b16 %v645, %v644
        %v655 = vpack.c.b16 %v647, %v646
        %v656 = vpack.c.b16 %v649, %v648
        %v657 = vpack.c.b16 %v651, %v650
        %v658 = vpack.c.b16 %v653, %v652
        %v660 = vshrl.u32 %v654, 16
        %v662 = vshll.u32 %v654, 16
        %v664 = vrot.slane %v662, 1
        %v665 = vor.u32 %v660, %v664
        %v667 = vshll.u32 %v655, 16
        %v669 = vrot.slane %v667, 1
        %v670 = vsel %vm294, %v665, %v669
        %v671 = vshrl.u32 %v655, 16
        %v673 = vor.u32 %v671, %v669
        %v675 = vshll.u32 %v656, 16
        %v677 = vrot.slane %v675, 1
        %v678 = vsel %vm294, %v673, %v677
        %v679 = vshrl.u32 %v656, 16
        %v681 = vor.u32 %v679, %v677
        %v683 = vshll.u32 %v657, 16
        %v685 = vrot.slane %v683, 1
        %v686 = vsel %vm294, %v681, %v685
        %v687 = vshrl.u32 %v657, 16
        %v689 = vor.u32 %v687, %v685
        %v691 = vshll.u32 %v658, 16
        %v693 = vrot.slane %v691, 1
        %v694 = vsel %vm294, %v689, %v693
        %v695 = vshrl.u32 %v658, 16
        %v697 = vor.u32 %v695, %v693
        %v719 = vunpack.c.l.b16 %v618
        %v720 = vunpack.c.l.b16 %v619
        %v721 = vunpack.c.l.b16 %v620
        %v722 = vunpack.c.l.b16 %v621
        %v723 = vunpack.c.l.b16 %v622
        %v724 = vunpack.c.l.b16 %v623
        %v725 = vunpack.c.l.b16 %v624
        %v726 = vunpack.c.l.b16 %v625
        %v727 = vunpack.c.l.b16 %v626
        %v728 = vunpack.c.l.b16 %v627
        %v729 = vunpack.c.l.b16 %v628
        %v730 = vunpack.c.l.b16 %v629
        %v731 = vunpack.c.l.b16 %v630
        %v732 = vunpack.c.l.b16 %v631
        %v733 = vunpack.c.l.b16 %v632
        %v734 = vunpack.c.l.b16 %v633
        %v735 = vpack.c.b16 %v720, %v719
        %v736 = vpack.c.b16 %v722, %v721
        %v737 = vpack.c.b16 %v724, %v723
        %v738 = vpack.c.b16 %v726, %v725
        %v739 = vpack.c.b16 %v728, %v727
        %v740 = vpack.c.b16 %v730, %v729
        %v741 = vpack.c.b16 %v732, %v731
        %v742 = vpack.c.b16 %v734, %v733
        %751 = vmatprep.subr.bf16.mxu0 0
        %752 = vmatpush1.bf16.msra.mxu0 %v735
        %753 = vmatprep.subr.bf16.mxu0 0
        %754 = vmatpush1.bf16.msra.mxu0 %v736
        %755 = vmatprep.subr.bf16.mxu0 0
        %756 = vmatpush1.bf16.msra.mxu0 %v737
        %757 = vmatprep.subr.bf16.mxu0 0
        %758 = vmatpush1.bf16.msra.mxu0 %v738
        %759 = vmatprep.subr.bf16.mxu0 0
        %760 = vmatpush1.bf16.msra.mxu0 %v739
        %761 = vmatprep.subr.bf16.mxu0 0
        %762 = vmatpush1.bf16.msra.mxu0 %v740
        %763 = vmatprep.subr.bf16.mxu0 0
        %764 = vmatpush1.bf16.msra.mxu0 %v741
        %765 = vmatprep.subr.bf16.mxu0 0
        %766 = vmatpush1.bf16.msra.mxu0 %v742
        %767 = vmatprep.subr.bf16.mxu0 0
        %768 = vmatpush1.bf16.msra.mxu0 0
        %769 = vmatprep.subr.bf16.mxu0 0
        %770 = vmatpush1.bf16.msra.mxu0 0
        %771 = vmatprep.subr.bf16.mxu0 0
        %772 = vmatpush1.bf16.msra.mxu0 0
        %773 = vmatprep.subr.bf16.mxu0 0
        %774 = vmatpush1.bf16.msra.mxu0 0
        %775 = vmatprep.subr.bf16.mxu0 0
        %776 = vmatpush1.bf16.msra.mxu0 0
        %777 = vmatprep.subr.bf16.mxu0 0
        %778 = vmatpush1.bf16.msra.mxu0 0
        %779 = vmatprep.subr.bf16.mxu0 0
        %780 = vmatpush1.bf16.msra.mxu0 0
        %781 = vmatprep.subr.bf16.mxu0 0
        %782 = vmatpush1.bf16.msra.mxu0 0
        %783 = vmatprep.mubr.bf16.mxu0 0
        %784 = vmatmul.mubr.bf16.gmra.mrb[0].mxu0 %v670
        %v785 = vpop.f32.mrb[0].mxu0
        %v786 = vadd.f32 0.0, %v785
        %v787 = vpop.f32.mrb[0].mxu0
        %v788 = vpop.f32.mrb[0].mxu0
        %v789 = vadd.f32 0.0, %v788
        %v790 = vpop.f32.mrb[0].mxu0
        %791 = vmatprep.mubr.bf16.mxu0 0
        %792 = vmatmul.mubr.bf16.gmra.mrb[0].mxu0 %v678
        %v793 = vpop.f32.mrb[0].mxu0
        %v794 = vadd.f32 0.0, %v793
        %v795 = vpop.f32.mrb[0].mxu0
        %v796 = vpop.f32.mrb[0].mxu0
        %v797 = vadd.f32 0.0, %v796
        %v798 = vpop.f32.mrb[0].mxu0
        %799 = vmatprep.mubr.bf16.mxu0 0
        %800 = vmatmul.mubr.bf16.gmra.mrb[0].mxu0 %v686
        %v801 = vpop.f32.mrb[0].mxu0
        %v802 = vadd.f32 0.0, %v801
        %v803 = vpop.f32.mrb[0].mxu0
        %v804 = vpop.f32.mrb[0].mxu0
        %v805 = vadd.f32 0.0, %v804
        %v806 = vpop.f32.mrb[0].mxu0
        %807 = vmatprep.mubr.bf16.mxu0 0
        %808 = vmatmul.mubr.bf16.gmra.mrb[0].mxu0 %v694
        %v809 = vpop.f32.mrb[0].mxu0
        %v810 = vadd.f32 0.0, %v809
        %v811 = vpop.f32.mrb[0].mxu0
        %v812 = vpop.f32.mrb[0].mxu0
        %v813 = vadd.f32 0.0, %v812
        %v814 = vpop.f32.mrb[0].mxu0
        %815 = vmatprep.mubr.bf16.mxu0 0
        %816 = vmatmul.mubr.bf16.gmra.mrb[0].mxu0 %v697
        %v817 = vpop.f32.mrb[0].mxu0
        %v818 = vadd.f32 0.0, %v817
        %v819 = vpop.f32.mrb[0].mxu0
        %v820 = vpop.f32.mrb[0].mxu0
        %v821 = vpop.f32.mrb[0].mxu0
        %822 = vdwg.mxu0
        %v823 = vadd.f32 %v570, %v786
        %v824 = vadd.f32 %v573, %v789
        %v825 = vadd.f32 %v578, %v794
        %v826 = vadd.f32 %v581, %v797
        %v827 = vadd.f32 %v586, %v802
        %v828 = vadd.f32 %v589, %v805
        %v829 = vadd.f32 %v594, %v810
        %v830 = vadd.f32 %v597, %v813
        %v831 = vadd.f32 %v602, %v818
        %v832 = vld [vmem:[%s185 + $0x50] sm:$0xe]
        %v833 = vld [vmem:[%s185 + $0x54] sm:$0xf]
        %v834 = vld [vmem:[%s185 + $0x58] sm:$0xf]
        %v835 = vld [vmem:[%s185 + $0x5c] sm:$0xf]
        %v836 = vld [vmem:[%s185 + $0x60] sm:$0xf]
        %v837 = vld [vmem:[%s185 + $0x64] sm:$0xf]
        %v838 = vld [vmem:[%s185 + $0x68] sm:$0xf]
        %v839 = vld [vmem:[%s185 + $0x6c] sm:$0xf]
        %v840 = vld [vmem:[%s185 + $0x70] sm:$0xf]
        %v841 = vld [vmem:[%s185 + $0x74] sm:$0x1]
        %s842 = scalar_lea.vmem [#allocation5], 192
        %v843 = vld [vmem:[%s842] sm:$0xf]
        %v844 = vld [vmem:[%s842 + $0x4] sm:$0xf]
        %v845 = vld [vmem:[%s842 + $0x8] sm:$0xf]
        %v846 = vld [vmem:[%s842 + $0xc] sm:$0xf]
        %v847 = vld [vmem:[%s842 + $0x10] sm:$0xf]
        %v848 = vld [vmem:[%s842 + $0x14] sm:$0xf]
        %v849 = vld [vmem:[%s842 + $0x18] sm:$0xf]
        %v850 = vld [vmem:[%s842 + $0x1c] sm:$0xf]
        %v851 = vld [vmem:[%s842 + $0x20] sm:$0xf]
        %v852 = vld [vmem:[%s842 + $0x24] sm:$0xf]
        %v853 = vld [vmem:[%s842 + $0x28] sm:$0xf]
        %v854 = vld [vmem:[%s842 + $0x2c] sm:$0xf]
        %v855 = vld [vmem:[%s842 + $0x30] sm:$0xf]
        %v856 = vld [vmem:[%s842 + $0x34] sm:$0xf]
        %v857 = vld [vmem:[%s842 + $0x38] sm:$0xf]
        %v858 = vld [vmem:[%s842 + $0x3c] sm:$0xf]
        %v869 = vunpack.c.l.b16 %v832
        %v870 = vunpack.c.l.b16 %v833
        %v871 = vunpack.c.l.b16 %v834
        %v872 = vunpack.c.l.b16 %v835
        %v873 = vunpack.c.l.b16 %v836
        %v874 = vunpack.c.l.b16 %v837
        %v875 = vunpack.c.l.b16 %v838
        %v876 = vunpack.c.l.b16 %v839
        %v877 = vunpack.c.l.b16 %v840
        %v878 = vunpack.c.l.b16 %v841
        %v879 = vpack.c.b16 %v870, %v869
        %v880 = vpack.c.b16 %v872, %v871
        %v881 = vpack.c.b16 %v874, %v873
        %v882 = vpack.c.b16 %v876, %v875
        %v883 = vpack.c.b16 %v878, %v877
        %vm884 = vcmask 1046528
        %v885 = vrot.slane %v879, 1
        %v886 = vrot.slane %v880, 1
        %v887 = vsel %vm884, %v885, %v886
        %v888 = vrot.slane %v881, 1
        %v889 = vsel %vm884, %v886, %v888
        %v890 = vrot.slane %v882, 1
        %v891 = vsel %vm884, %v888, %v890
        %v892 = vrot.slane %v883, 1
        %v893 = vsel %vm884, %v890, %v892
        %v915 = vunpack.c.l.b16 %v843
        %v916 = vunpack.c.l.b16 %v844
        %v917 = vunpack.c.l.b16 %v845
        %v918 = vunpack.c.l.b16 %v846
        %v919 = vunpack.c.l.b16 %v847
        %v920 = vunpack.c.l.b16 %v848
        %v921 = vunpack.c.l.b16 %v849
        %v922 = vunpack.c.l.b16 %v850
        %v923 = vunpack.c.l.b16 %v851
        %v924 = vunpack.c.l.b16 %v852
        %v925 = vunpack.c.l.b16 %v853
        %v926 = vunpack.c.l.b16 %v854
        %v927 = vunpack.c.l.b16 %v855
        %v928 = vunpack.c.l.b16 %v856
        %v929 = vunpack.c.l.b16 %v857
        %v930 = vunpack.c.l.b16 %v858
        %v931 = vpack.c.b16 %v916, %v915
        %v932 = vpack.c.b16 %v918, %v917
        %v933 = vpack.c.b16 %v920, %v919
        %v934 = vpack.c.b16 %v922, %v921
        %v935 = vpack.c.b16 %v924, %v923
        %v936 = vpack.c.b16 %v926, %v925
        %v937 = vpack.c.b16 %v928, %v927
        %v938 = vpack.c.b16 %v930, %v929
        %947 = vmatprep.subr.bf16.mxu0 0
        %948 = vmatpush1.bf16.msra.mxu0 %v931
        %949 = vmatprep.subr.bf16.mxu0 0
        %950 = vmatpush1.bf16.msra.mxu0 %v932
        %951 = vmatprep.subr.bf16.mxu0 0
        %952 = vmatpush1.bf16.msra.mxu0 %v933
        %953 = vmatprep.subr.bf16.mxu0 0
        %954 = vmatpush1.bf16.msra.mxu0 %v934
        %955 = vmatprep.subr.bf16.mxu0 0
        %956 = vmatpush1.bf16.msra.mxu0 %v935
        %957 = vmatprep.subr.bf16.mxu0 0
        %958 = vmatpush1.bf16.msra.mxu0 %v936
        %959 = vmatprep.subr.bf16.mxu0 0
        %960 = vmatpush1.bf16.msra.mxu0 %v937
        %961 = vmatprep.subr.bf16.mxu0 0
        %962 = vmatpush1.bf16.msra.mxu0 %v938
        %963 = vmatprep.subr.bf16.mxu0 0
        %964 = vmatpush1.bf16.msra.mxu0 0
        %965 = vmatprep.subr.bf16.mxu0 0
        %966 = vmatpush1.bf16.msra.mxu0 0
        %967 = vmatprep.subr.bf16.mxu0 0
        %968 = vmatpush1.bf16.msra.mxu0 0
        %969 = vmatprep.subr.bf16.mxu0 0
        %970 = vmatpush1.bf16.msra.mxu0 0
        %971 = vmatprep.subr.bf16.mxu0 0
        %972 = vmatpush1.bf16.msra.mxu0 0
        %973 = vmatprep.subr.bf16.mxu0 0
        %974 = vmatpush1.bf16.msra.mxu0 0
        %975 = vmatprep.subr.bf16.mxu0 0
        %976 = vmatpush1.bf16.msra.mxu0 0
        %977 = vmatprep.subr.bf16.mxu0 0
        %978 = vmatpush1.bf16.msra.mxu0 0
        %979 = vmatprep.mubr.bf16.mxu0 0
        %980 = vmatmul.mubr.bf16.gmra.mrb[0].mxu0 %v887
        %v981 = vpop.f32.mrb[0].mxu0
        %v982 = vadd.f32 0.0, %v981
        %v983 = vpop.f32.mrb[0].mxu0
        %v984 = vpop.f32.mrb[0].mxu0
        %v985 = vadd.f32 0.0, %v984
        %v986 = vpop.f32.mrb[0].mxu0
        %987 = vmatprep.mubr.bf16.mxu0 0
        %988 = vmatmul.mubr.bf16.gmra.mrb[0].mxu0 %v889
        %v989 = vpop.f32.mrb[0].mxu0
        %v990 = vadd.f32 0.0, %v989
        %v991 = vpop.f32.mrb[0].mxu0
        %v992 = vpop.f32.mrb[0].mxu0
        %v993 = vadd.f32 0.0, %v992
        %v994 = vpop.f32.mrb[0].mxu0
        %995 = vmatprep.mubr.bf16.mxu0 0
        %996 = vmatmul.mubr.bf16.gmra.mrb[0].mxu0 %v891
        %v997 = vpop.f32.mrb[0].mxu0
        %v998 = vadd.f32 0.0, %v997
        %v999 = vpop.f32.mrb[0].mxu0
        %v1000 = vpop.f32.mrb[0].mxu0
        %v1001 = vadd.f32 0.0, %v1000
        %v1002 = vpop.f32.mrb[0].mxu0
        %1003 = vmatprep.mubr.bf16.mxu0 0
        %1004 = vmatmul.mubr.bf16.gmra.mrb[0].mxu0 %v893
        %v1005 = vpop.f32.mrb[0].mxu0
        %v1006 = vadd.f32 0.0, %v1005
        %v1007 = vpop.f32.mrb[0].mxu0
        %v1008 = vpop.f32.mrb[0].mxu0
        %v1009 = vadd.f32 0.0, %v1008
        %v1010 = vpop.f32.mrb[0].mxu0
        %1011 = vmatprep.mubr.bf16.mxu0 0
        %1012 = vmatmul.mubr.bf16.gmra.mrb[0].mxu0 %v892
        %v1013 = vpop.f32.mrb[0].mxu0
        %v1014 = vadd.f32 0.0, %v1013
        %v1015 = vpop.f32.mrb[0].mxu0
        %v1016 = vpop.f32.mrb[0].mxu0
        %v1017 = vpop.f32.mrb[0].mxu0
        %1018 = vdwg.mxu0
        %v1019 = vadd.f32 %v823, %v982
        %v1020 = vadd.f32 %v824, %v985
        %v1021 = vadd.f32 %v825, %v990
        %v1022 = vadd.f32 %v826, %v993
        %v1023 = vadd.f32 %v827, %v998
        %v1024 = vadd.f32 %v828, %v1001
        %v1025 = vadd.f32 %v829, %v1006
        %v1026 = vadd.f32 %v830, %v1009
        %v1027 = vadd.f32 %v831, %v1014
        %v1028 = vld [vmem:[%s185 + $0x78] sm:$0xe]
        %v1029 = vld [vmem:[%s185 + $0x7c] sm:$0xf]
        %v1030 = vld [vmem:[%s185 + $0x80] sm:$0xf]
        %v1031 = vld [vmem:[%s185 + $0x84] sm:$0xf]
        %v1032 = vld [vmem:[%s185 + $0x88] sm:$0xf]
        %v1033 = vld [vmem:[%s185 + $0x8c] sm:$0xf]
        %v1034 = vld [vmem:[%s185 + $0x90] sm:$0xf]
        %v1035 = vld [vmem:[%s185 + $0x94] sm:$0xf]
        %v1036 = vld [vmem:[%s185 + $0x98] sm:$0xf]
        %v1037 = vld [vmem:[%s185 + $0x9c] sm:$0x3]
        %s1038 = scalar_lea.vmem [#allocation5], 256
        %v1039 = vld [vmem:[%s1038] sm:$0xf]
        %v1040 = vld [vmem:[%s1038 + $0x4] sm:$0xf]
        %v1041 = vld [vmem:[%s1038 + $0x8] sm:$0xf]
        %v1042 = vld [vmem:[%s1038 + $0xc] sm:$0xf]
        %v1043 = vld [vmem:[%s1038 + $0x10] sm:$0xf]
        %v1044 = vld [vmem:[%s1038 + $0x14] sm:$0xf]
        %v1045 = vld [vmem:[%s1038 + $0x18] sm:$0xf]
        %v1046 = vld [vmem:[%s1038 + $0x1c] sm:$0xf]
        %v1047 = vld [vmem:[%s1038 + $0x20] sm:$0xf]
        %v1048 = vld [vmem:[%s1038 + $0x24] sm:$0xf]
        %v1049 = vld [vmem:[%s1038 + $0x28] sm:$0xf]
        %v1050 = vld [vmem:[%s1038 + $0x2c] sm:$0xf]
        %v1051 = vld [vmem:[%s1038 + $0x30] sm:$0xf]
        %v1052 = vld [vmem:[%s1038 + $0x34] sm:$0xf]
        %v1053 = vld [vmem:[%s1038 + $0x38] sm:$0xf]
        %v1054 = vld [vmem:[%s1038 + $0x3c] sm:$0xf]
        %v1065 = vunpack.c.l.b16 %v1028
        %v1066 = vunpack.c.l.b16 %v1029
        %v1067 = vunpack.c.l.b16 %v1030
        %v1068 = vunpack.c.l.b16 %v1031
        %v1069 = vunpack.c.l.b16 %v1032
        %v1070 = vunpack.c.l.b16 %v1033
        %v1071 = vunpack.c.l.b16 %v1034
        %v1072 = vunpack.c.l.b16 %v1035
        %v1073 = vunpack.c.l.b16 %v1036
        %v1074 = vunpack.c.l.b16 %v1037
        %v1075 = vpack.c.b16 %v1066, %v1065
        %v1076 = vpack.c.b16 %v1068, %v1067
        %v1077 = vpack.c.b16 %v1070, %v1069
        %v1078 = vpack.c.b16 %v1072, %v1071
        %v1079 = vpack.c.b16 %v1074, %v1073
        %vm1080 = vsmask.f32 6400
        %v1082 = vshrl.u32 %v1075, 16
        %v1084 = vrot.slane %v1082, 1
        %v1085 = vshll.u32 %v1075, 16
        %v1087 = vrot.slane %v1085, 2
        %v1088 = vor.u32 %v1084, %v1087
        %v1090 = vshrl.u32 %v1076, 16
        %v1092 = vrot.slane %v1090, 1
        %v1093 = vshll.u32 %v1076, 16
        %v1095 = vrot.slane %v1093, 2
        %v1096 = vor.u32 %v1092, %v1095
        %v1097 = vsel %vm1080, %v1088, %v1096
        %v1099 = vshrl.u32 %v1077, 16
        %v1101 = vrot.slane %v1099, 1
        %v1102 = vshll.u32 %v1077, 16
        %v1104 = vrot.slane %v1102, 2
        %v1105 = vor.u32 %v1101, %v1104
        %v1106 = vsel %vm1080, %v1096, %v1105
        %v1108 = vshrl.u32 %v1078, 16
        %v1110 = vrot.slane %v1108, 1
        %v1111 = vshll.u32 %v1078, 16
        %v1113 = vrot.slane %v1111, 2
        %v1114 = vor.u32 %v1110, %v1113
        %v1115 = vsel %vm1080, %v1105, %v1114
        %v1117 = vshrl.u32 %v1079, 16
        %v1119 = vrot.slane %v1117, 1
        %v1120 = vshll.u32 %v1079, 16
        %v1122 = vrot.slane %v1120, 2
        %v1123 = vor.u32 %v1119, %v1122
        %v1124 = vsel %vm1080, %v1114, %v1123
        %v1146 = vunpack.c.l.b16 %v1039
        %v1147 = vunpack.c.l.b16 %v1040
        %v1148 = vunpack.c.l.b16 %v1041
        %v1149 = vunpack.c.l.b16 %v1042
        %v1150 = vunpack.c.l.b16 %v1043
        %v1151 = vunpack.c.l.b16 %v1044
        %v1152 = vunpack.c.l.b16 %v1045
        %v1153 = vunpack.c.l.b16 %v1046
        %v1154 = vunpack.c.l.b16 %v1047
        %v1155 = vunpack.c.l.b16 %v1048
        %v1156 = vunpack.c.l.b16 %v1049
        %v1157 = vunpack.c.l.b16 %v1050
        %v1158 = vunpack.c.l.b16 %v1051
        %v1159 = vunpack.c.l.b16 %v1052
        %v1160 = vunpack.c.l.b16 %v1053
        %v1161 = vunpack.c.l.b16 %v1054
        %v1162 = vpack.c.b16 %v1147, %v1146
        %v1163 = vpack.c.b16 %v1149, %v1148
        %v1164 = vpack.c.b16 %v1151, %v1150
        %v1165 = vpack.c.b16 %v1153, %v1152
        %v1166 = vpack.c.b16 %v1155, %v1154
        %v1167 = vpack.c.b16 %v1157, %v1156
        %v1168 = vpack.c.b16 %v1159, %v1158
        %v1169 = vpack.c.b16 %v1161, %v1160
        %1178 = vmatprep.subr.bf16.mxu0 0
        %1179 = vmatpush1.bf16.msra.mxu0 %v1162
        %1180 = vmatprep.subr.bf16.mxu0 0
        %1181 = vmatpush1.bf16.msra.mxu0 %v1163
        %1182 = vmatprep.subr.bf16.mxu0 0
        %1183 = vmatpush1.bf16.msra.mxu0 %v1164
        %1184 = vmatprep.subr.bf16.mxu0 0
        %1185 = vmatpush1.bf16.msra.mxu0 %v1165
        %1186 = vmatprep.subr.bf16.mxu0 0
        %1187 = vmatpush1.bf16.msra.mxu0 %v1166
        %1188 = vmatprep.subr.bf16.mxu0 0
        %1189 = vmatpush1.bf16.msra.mxu0 %v1167
        %1190 = vmatprep.subr.bf16.mxu0 0
        %1191 = vmatpush1.bf16.msra.mxu0 %v1168
        %1192 = vmatprep.subr.bf16.mxu0 0
        %1193 = vmatpush1.bf16.msra.mxu0 %v1169
        %1194 = vmatprep.subr.bf16.mxu0 0
        %1195 = vmatpush1.bf16.msra.mxu0 0
        %1196 = vmatprep.subr.bf16.mxu0 0
        %1197 = vmatpush1.bf16.msra.mxu0 0
        %1198 = vmatprep.subr.bf16.mxu0 0
        %1199 = vmatpush1.bf16.msra.mxu0 0
        %1200 = vmatprep.subr.bf16.mxu0 0
        %1201 = vmatpush1.bf16.msra.mxu0 0
        %1202 = vmatprep.subr.bf16.mxu0 0
        %1203 = vmatpush1.bf16.msra.mxu0 0
        %1204 = vmatprep.subr.bf16.mxu0 0
        %1205 = vmatpush1.bf16.msra.mxu0 0
        %1206 = vmatprep.subr.bf16.mxu0 0
        %1207 = vmatpush1.bf16.msra.mxu0 0
        %1208 = vmatprep.subr.bf16.mxu0 0
        %1209 = vmatpush1.bf16.msra.mxu0 0
        %1210 = vmatprep.mubr.bf16.mxu0 0
        %1211 = vmatmul.mubr.bf16.gmra.mrb[0].mxu0 %v1097
        %v1212 = vpop.f32.mrb[0].mxu0
        %v1213 = vadd.f32 0.0, %v1212
        %v1214 = vpop.f32.mrb[0].mxu0
        %v1215 = vpop.f32.mrb[0].mxu0
        %v1216 = vadd.f32 0.0, %v1215
        %v1217 = vpop.f32.mrb[0].mxu0
        %1218 = vmatprep.mubr.bf16.mxu0 0
        %1219 = vmatmul.mubr.bf16.gmra.mrb[0].mxu0 %v1106
        %v1220 = vpop.f32.mrb[0].mxu0
        %v1221 = vadd.f32 0.0, %v1220
        %v1222 = vpop.f32.mrb[0].mxu0
        %v1223 = vpop.f32.mrb[0].mxu0
        %v1224 = vadd.f32 0.0, %v1223
        %v1225 = vpop.f32.mrb[0].mxu0
        %1226 = vmatprep.mubr.bf16.mxu0 0
        %1227 = vmatmul.mubr.bf16.gmra.mrb[0].mxu0 %v1115
        %v1228 = vpop.f32.mrb[0].mxu0
        %v1229 = vadd.f32 0.0, %v1228
        %v1230 = vpop.f32.mrb[0].mxu0
        %v1231 = vpop.f32.mrb[0].mxu0
        %v1232 = vadd.f32 0.0, %v1231
        %v1233 = vpop.f32.mrb[0].mxu0
        %1234 = vmatprep.mubr.bf16.mxu0 0
        %1235 = vmatmul.mubr.bf16.gmra.mrb[0].mxu0 %v1124
        %v1236 = vpop.f32.mrb[0].mxu0
        %v1237 = vadd.f32 0.0, %v1236
        %v1238 = vpop.f32.mrb[0].mxu0
        %v1239 = vpop.f32.mrb[0].mxu0
        %v1240 = vadd.f32 0.0, %v1239
        %v1241 = vpop.f32.mrb[0].mxu0
        %1242 = vmatprep.mubr.bf16.mxu0 0
        %1243 = vmatmul.mubr.bf16.gmra.mrb[0].mxu0 %v1123
        %v1244 = vpop.f32.mrb[0].mxu0
        %v1245 = vadd.f32 0.0, %v1244
        %v1246 = vpop.f32.mrb[0].mxu0
        %v1247 = vpop.f32.mrb[0].mxu0
        %v1248 = vpop.f32.mrb[0].mxu0
        %1249 = vdwg.mxu0
        %v1250 = vadd.f32 %v1019, %v1213
        %v1251 = vadd.f32 %v1020, %v1216
        %v1252 = vadd.f32 %v1021, %v1221
        %v1253 = vadd.f32 %v1022, %v1224
        %v1254 = vadd.f32 %v1023, %v1229
        %v1255 = vadd.f32 %v1024, %v1232
        %v1256 = vadd.f32 %v1025, %v1237
        %v1257 = vadd.f32 %v1026, %v1240
        %v1258 = vadd.f32 %v1027, %v1245
        %v1259 = vld [vmem:[%s185 + $0x74] sm:$0x3]
        %s1260 = scalar_lea.vmem [#allocation5], 320
        %v1261 = vld [vmem:[%s1260] sm:$0xf]
        %v1262 = vld [vmem:[%s1260 + $0x4] sm:$0xf]
        %v1263 = vld [vmem:[%s1260 + $0x8] sm:$0xf]
        %v1264 = vld [vmem:[%s1260 + $0xc] sm:$0xf]
        %v1265 = vld [vmem:[%s1260 + $0x10] sm:$0xf]
        %v1266 = vld [vmem:[%s1260 + $0x14] sm:$0xf]
        %v1267 = vld [vmem:[%s1260 + $0x18] sm:$0xf]
        %v1268 = vld [vmem:[%s1260 + $0x1c] sm:$0xf]
        %v1269 = vld [vmem:[%s1260 + $0x20] sm:$0xf]
        %v1270 = vld [vmem:[%s1260 + $0x24] sm:$0xf]
        %v1271 = vld [vmem:[%s1260 + $0x28] sm:$0xf]
        %v1272 = vld [vmem:[%s1260 + $0x2c] sm:$0xf]
        %v1273 = vld [vmem:[%s1260 + $0x30] sm:$0xf]
        %v1274 = vld [vmem:[%s1260 + $0x34] sm:$0xf]
        %v1275 = vld [vmem:[%s1260 + $0x38] sm:$0xf]
        %v1276 = vld [vmem:[%s1260 + $0x3c] sm:$0xf]
        %v1278 = vunpack.c.l.b16 %v1259
        %v1279 = vpack.c.b16 %v1278, %v877
        %v1281 = vshrl.u32 %v879, 16
        %v1283 = vrot.slane %v1281, 1
        %v1284 = vshll.u32 %v879, 16
        %v1286 = vrot.slane %v1284, 2
        %v1287 = vor.u32 %v1283, %v1286
        %v1289 = vshrl.u32 %v880, 16
        %v1291 = vrot.slane %v1289, 1
        %v1292 = vshll.u32 %v880, 16
        %v1294 = vrot.slane %v1292, 2
        %v1295 = vor.u32 %v1291, %v1294
        %v1296 = vsel %vm1080, %v1287, %v1295
        %v1298 = vshrl.u32 %v881, 16
        %v1300 = vrot.slane %v1298, 1
        %v1301 = vshll.u32 %v881, 16
        %v1303 = vrot.slane %v1301, 2
        %v1304 = vor.u32 %v1300, %v1303
        %v1305 = vsel %vm1080, %v1295, %v1304
        %v1307 = vshrl.u32 %v882, 16
        %v1309 = vrot.slane %v1307, 1
        %v1310 = vshll.u32 %v882, 16
        %v1312 = vrot.slane %v1310, 2
        %v1313 = vor.u32 %v1309, %v1312
        %v1314 = vsel %vm1080, %v1304, %v1313
        %v1316 = vshrl.u32 %v1279, 16
        %v1318 = vrot.slane %v1316, 1
        %v1319 = vshll.u32 %v1279, 16
        %v1321 = vrot.slane %v1319, 2
        %v1322 = vor.u32 %v1318, %v1321
        %v1323 = vsel %vm1080, %v1313, %v1322
        %v1345 = vunpack.c.l.b16 %v1261
        %v1346 = vunpack.c.l.b16 %v1262
        %v1347 = vunpack.c.l.b16 %v1263
        %v1348 = vunpack.c.l.b16 %v1264
        %v1349 = vunpack.c.l.b16 %v1265
        %v1350 = vunpack.c.l.b16 %v1266
        %v1351 = vunpack.c.l.b16 %v1267
        %v1352 = vunpack.c.l.b16 %v1268
        %v1353 = vunpack.c.l.b16 %v1269
        %v1354 = vunpack.c.l.b16 %v1270
        %v1355 = vunpack.c.l.b16 %v1271
        %v1356 = vunpack.c.l.b16 %v1272
        %v1357 = vunpack.c.l.b16 %v1273
        %v1358 = vunpack.c.l.b16 %v1274
        %v1359 = vunpack.c.l.b16 %v1275
        %v1360 = vunpack.c.l.b16 %v1276
        %v1361 = vpack.c.b16 %v1346, %v1345
        %v1362 = vpack.c.b16 %v1348, %v1347
        %v1363 = vpack.c.b16 %v1350, %v1349
        %v1364 = vpack.c.b16 %v1352, %v1351
        %v1365 = vpack.c.b16 %v1354, %v1353
        %v1366 = vpack.c.b16 %v1356, %v1355
        %v1367 = vpack.c.b16 %v1358, %v1357
        %v1368 = vpack.c.b16 %v1360, %v1359
        %1377 = vmatprep.subr.bf16.mxu0 0
        %1378 = vmatpush1.bf16.msra.mxu0 %v1361
        %1379 = vmatprep.subr.bf16.mxu0 0
        %1380 = vmatpush1.bf16.msra.mxu0 %v1362
        %1381 = vmatprep.subr.bf16.mxu0 0
        %1382 = vmatpush1.bf16.msra.mxu0 %v1363
        %1383 = vmatprep.subr.bf16.mxu0 0
        %1384 = vmatpush1.bf16.msra.mxu0 %v1364
        %1385 = vmatprep.subr.bf16.mxu0 0
        %1386 = vmatpush1.bf16.msra.mxu0 %v1365
        %1387 = vmatprep.subr.bf16.mxu0 0
        %1388 = vmatpush1.bf16.msra.mxu0 %v1366
        %1389 = vmatprep.subr.bf16.mxu0 0
        %1390 = vmatpush1.bf16.msra.mxu0 %v1367
        %1391 = vmatprep.subr.bf16.mxu0 0
        %1392 = vmatpush1.bf16.msra.mxu0 %v1368
        %1393 = vmatprep.subr.bf16.mxu0 0
        %1394 = vmatpush1.bf16.msra.mxu0 0
        %1395 = vmatprep.subr.bf16.mxu0 0
        %1396 = vmatpush1.bf16.msra.mxu0 0
        %1397 = vmatprep.subr.bf16.mxu0 0
        %1398 = vmatpush1.bf16.msra.mxu0 0
        %1399 = vmatprep.subr.bf16.mxu0 0
        %1400 = vmatpush1.bf16.msra.mxu0 0
        %1401 = vmatprep.subr.bf16.mxu0 0
        %1402 = vmatpush1.bf16.msra.mxu0 0
        %1403 = vmatprep.subr.bf16.mxu0 0
        %1404 = vmatpush1.bf16.msra.mxu0 0
        %1405 = vmatprep.subr.bf16.mxu0 0
        %1406 = vmatpush1.bf16.msra.mxu0 0
        %1407 = vmatprep.subr.bf16.mxu0 0
        %1408 = vmatpush1.bf16.msra.mxu0 0
        %1409 = vmatprep.mubr.bf16.mxu0 0
        %1410 = vmatmul.mubr.bf16.gmra.mrb[0].mxu0 %v1296
        %v1411 = vpop.f32.mrb[0].mxu0
        %v1412 = vadd.f32 0.0, %v1411
        %v1413 = vpop.f32.mrb[0].mxu0
        %v1414 = vpop.f32.mrb[0].mxu0
        %v1415 = vadd.f32 0.0, %v1414
        %v1416 = vpop.f32.mrb[0].mxu0
        %1417 = vmatprep.mubr.bf16.mxu0 0
        %1418 = vmatmul.mubr.bf16.gmra.mrb[0].mxu0 %v1305
        %v1419 = vpop.f32.mrb[0].mxu0
        %v1420 = vadd.f32 0.0, %v1419
        %v1421 = vpop.f32.mrb[0].mxu0
        %v1422 = vpop.f32.mrb[0].mxu0
        %v1423 = vadd.f32 0.0, %v1422
        %v1424 = vpop.f32.mrb[0].mxu0
        %1425 = vmatprep.mubr.bf16.mxu0 0
        %1426 = vmatmul.mubr.bf16.gmra.mrb[0].mxu0 %v1314
        %v1427 = vpop.f32.mrb[0].mxu0
        %v1428 = vadd.f32 0.0, %v1427
        %v1429 = vpop.f32.mrb[0].mxu0
        %v1430 = vpop.f32.mrb[0].mxu0
        %v1431 = vadd.f32 0.0, %v1430
        %v1432 = vpop.f32.mrb[0].mxu0
        %1433 = vmatprep.mubr.bf16.mxu0 0
        %1434 = vmatmul.mubr.bf16.gmra.mrb[0].mxu0 %v1323
        %v1435 = vpop.f32.mrb[0].mxu0
        %v1436 = vadd.f32 0.0, %v1435
        %v1437 = vpop.f32.mrb[0].mxu0
        %v1438 = vpop.f32.mrb[0].mxu0
        %v1439 = vadd.f32 0.0, %v1438
        %v1440 = vpop.f32.mrb[0].mxu0
        %1441 = vmatprep.mubr.bf16.mxu0 0
        %1442 = vmatmul.mubr.bf16.gmra.mrb[0].mxu0 %v1322
        %v1443 = vpop.f32.mrb[0].mxu0
        %v1444 = vadd.f32 0.0, %v1443
        %v1445 = vpop.f32.mrb[0].mxu0
        %v1446 = vpop.f32.mrb[0].mxu0
        %v1447 = vpop.f32.mrb[0].mxu0
        %1448 = vdwg.mxu0
        %v1449 = vadd.f32 %v1250, %v1412
        %v1450 = vadd.f32 %v1251, %v1415
        %v1451 = vadd.f32 %v1252, %v1420
        %v1452 = vadd.f32 %v1253, %v1423
        %v1453 = vadd.f32 %v1254, %v1428
        %v1454 = vadd.f32 %v1255, %v1431
        %v1455 = vadd.f32 %v1256, %v1436
        %v1456 = vadd.f32 %v1257, %v1439
        %v1457 = vadd.f32 %v1258, %v1444
        %v1458 = vld [vmem:[%s185 + $0x4] sm:$0xf]
        %v1459 = vld [vmem:[%s185 + $0x8] sm:$0xf]
        %v1460 = vld [vmem:[%s185 + $0xc] sm:$0xf]
        %v1461 = vld [vmem:[%s185 + $0x10] sm:$0xf]
        %v1462 = vld [vmem:[%s185 + $0x14] sm:$0xf]
        %v1463 = vld [vmem:[%s185 + $0x18] sm:$0xf]
        %v1464 = vld [vmem:[%s185 + $0x1c] sm:$0xf]
        %v1465 = vld [vmem:[%s185 + $0x20] sm:$0xf]
        %v1466 = vld [vmem:[%s185 + $0x24] sm:$0xf]
        %v1467 = vld [vmem:[%s185 + $0x28] sm:$0x1]
        %s1468 = scalar_lea.vmem [#allocation5], 384
        %v1469 = vld [vmem:[%s1468] sm:$0xf]
        %v1470 = vld [vmem:[%s1468 + $0x4] sm:$0xf]
        %v1471 = vld [vmem:[%s1468 + $0x8] sm:$0xf]
        %v1472 = vld [vmem:[%s1468 + $0xc] sm:$0xf]
        %v1473 = vld [vmem:[%s1468 + $0x10] sm:$0xf]
        %v1474 = vld [vmem:[%s1468 + $0x14] sm:$0xf]
        %v1475 = vld [vmem:[%s1468 + $0x18] sm:$0xf]
        %v1476 = vld [vmem:[%s1468 + $0x1c] sm:$0xf]
        %v1477 = vld [vmem:[%s1468 + $0x20] sm:$0xf]
        %v1478 = vld [vmem:[%s1468 + $0x24] sm:$0xf]
        %v1479 = vld [vmem:[%s1468 + $0x28] sm:$0xf]
        %v1480 = vld [vmem:[%s1468 + $0x2c] sm:$0xf]
        %v1481 = vld [vmem:[%s1468 + $0x30] sm:$0xf]
        %v1482 = vld [vmem:[%s1468 + $0x34] sm:$0xf]
        %v1483 = vld [vmem:[%s1468 + $0x38] sm:$0xf]
        %v1484 = vld [vmem:[%s1468 + $0x3c] sm:$0xf]
        %v1495 = vunpack.c.l.b16 %v1458
        %v1496 = vunpack.c.l.b16 %v1459
        %v1497 = vunpack.c.l.b16 %v1460
        %v1498 = vunpack.c.l.b16 %v1461
        %v1499 = vunpack.c.l.b16 %v1462
        %v1500 = vunpack.c.l.b16 %v1463
        %v1501 = vunpack.c.l.b16 %v1464
        %v1502 = vunpack.c.l.b16 %v1465
        %v1503 = vunpack.c.l.b16 %v1466
        %v1504 = vunpack.c.l.b16 %v1467
        %v1505 = vpack.c.b16 %v1496, %v1495
        %v1506 = vpack.c.b16 %v1498, %v1497
        %v1507 = vpack.c.b16 %v1500, %v1499
        %v1508 = vpack.c.b16 %v1502, %v1501
        %v1509 = vpack.c.b16 %v1504, %v1503
        %v1511 = vshrl.u32 %v1505, 16
        %v1513 = vshll.u32 %v1505, 16
        %v1515 = vrot.slane %v1513, 1
        %v1516 = vor.u32 %v1511, %v1515
        %v1518 = vshll.u32 %v1506, 16
        %v1520 = vrot.slane %v1518, 1
        %v1521 = vsel %vm294, %v1516, %v1520
        %v1522 = vshrl.u32 %v1506, 16
        %v1524 = vor.u32 %v1522, %v1520
        %v1526 = vshll.u32 %v1507, 16
        %v1528 = vrot.slane %v1526, 1
        %v1529 = vsel %vm294, %v1524, %v1528
        %v1530 = vshrl.u32 %v1507, 16
        %v1532 = vor.u32 %v1530, %v1528
        %v1534 = vshll.u32 %v1508, 16
        %v1536 = vrot.slane %v1534, 1
        %v1537 = vsel %vm294, %v1532, %v1536
        %v1538 = vshrl.u32 %v1508, 16
        %v1540 = vor.u32 %v1538, %v1536
        %v1542 = vshll.u32 %v1509, 16
        %v1544 = vrot.slane %v1542, 1
        %v1545 = vsel %vm294, %v1540, %v1544
        %v1546 = vshrl.u32 %v1509, 16
        %v1548 = vor.u32 %v1546, %v1544
        %v1570 = vunpack.c.l.b16 %v1469
        %v1571 = vunpack.c.l.b16 %v1470
        %v1572 = vunpack.c.l.b16 %v1471
        %v1573 = vunpack.c.l.b16 %v1472
        %v1574 = vunpack.c.l.b16 %v1473
        %v1575 = vunpack.c.l.b16 %v1474
        %v1576 = vunpack.c.l.b16 %v1475
        %v1577 = vunpack.c.l.b16 %v1476
        %v1578 = vunpack.c.l.b16 %v1477
        %v1579 = vunpack.c.l.b16 %v1478
        %v1580 = vunpack.c.l.b16 %v1479
        %v1581 = vunpack.c.l.b16 %v1480
        %v1582 = vunpack.c.l.b16 %v1481
        %v1583 = vunpack.c.l.b16 %v1482
        %v1584 = vunpack.c.l.b16 %v1483
        %v1585 = vunpack.c.l.b16 %v1484
        %v1586 = vpack.c.b16 %v1571, %v1570
        %v1587 = vpack.c.b16 %v1573, %v1572
        %v1588 = vpack.c.b16 %v1575, %v1574
        %v1589 = vpack.c.b16 %v1577, %v1576
        %v1590 = vpack.c.b16 %v1579, %v1578
        %v1591 = vpack.c.b16 %v1581, %v1580
        %v1592 = vpack.c.b16 %v1583, %v1582
        %v1593 = vpack.c.b16 %v1585, %v1584
        %1602 = vmatprep.subr.bf16.mxu0 0
        %1603 = vmatpush1.bf16.msra.mxu0 %v1586
        %1604 = vmatprep.subr.bf16.mxu0 0
        %1605 = vmatpush1.bf16.msra.mxu0 %v1587
        %1606 = vmatprep.subr.bf16.mxu0 0
        %1607 = vmatpush1.bf16.msra.mxu0 %v1588
        %1608 = vmatprep.subr.bf16.mxu0 0
        %1609 = vmatpush1.bf16.msra.mxu0 %v1589
        %1610 = vmatprep.subr.bf16.mxu0 0
        %1611 = vmatpush1.bf16.msra.mxu0 %v1590
        %1612 = vmatprep.subr.bf16.mxu0 0
        %1613 = vmatpush1.bf16.msra.mxu0 %v1591
        %1614 = vmatprep.subr.bf16.mxu0 0
        %1615 = vmatpush1.bf16.msra.mxu0 %v1592
        %1616 = vmatprep.subr.bf16.mxu0 0
        %1617 = vmatpush1.bf16.msra.mxu0 %v1593
        %1618 = vmatprep.subr.bf16.mxu0 0
        %1619 = vmatpush1.bf16.msra.mxu0 0
        %1620 = vmatprep.subr.bf16.mxu0 0
        %1621 = vmatpush1.bf16.msra.mxu0 0
        %1622 = vmatprep.subr.bf16.mxu0 0
        %1623 = vmatpush1.bf16.msra.mxu0 0
        %1624 = vmatprep.subr.bf16.mxu0 0
        %1625 = vmatpush1.bf16.msra.mxu0 0
        %1626 = vmatprep.subr.bf16.mxu0 0
        %1627 = vmatpush1.bf16.msra.mxu0 0
        %1628 = vmatprep.subr.bf16.mxu0 0
        %1629 = vmatpush1.bf16.msra.mxu0 0
        %1630 = vmatprep.subr.bf16.mxu0 0
        %1631 = vmatpush1.bf16.msra.mxu0 0
        %1632 = vmatprep.subr.bf16.mxu0 0
        %1633 = vmatpush1.bf16.msra.mxu0 0
        %1634 = vmatprep.mubr.bf16.mxu0 0
        %1635 = vmatmul.mubr.bf16.gmra.mrb[0].mxu0 %v1521
        %v1636 = vpop.f32.mrb[0].mxu0
        %v1637 = vadd.f32 0.0, %v1636
        %v1638 = vpop.f32.mrb[0].mxu0
        %v1639 = vpop.f32.mrb[0].mxu0
        %v1640 = vadd.f32 0.0, %v1639
        %v1641 = vpop.f32.mrb[0].mxu0
        %1642 = vmatprep.mubr.bf16.mxu0 0
        %1643 = vmatmul.mubr.bf16.gmra.mrb[0].mxu0 %v1529
        %v1644 = vpop.f32.mrb[0].mxu0
        %v1645 = vadd.f32 0.0, %v1644
        %v1646 = vpop.f32.mrb[0].mxu0
        %v1647 = vpop.f32.mrb[0].mxu0
        %v1648 = vadd.f32 0.0, %v1647
        %v1649 = vpop.f32.mrb[0].mxu0
        %1650 = vmatprep.mubr.bf16.mxu0 0
        %1651 = vmatmul.mubr.bf16.gmra.mrb[0].mxu0 %v1537
        %v1652 = vpop.f32.mrb[0].mxu0
        %v1653 = vadd.f32 0.0, %v1652
        %v1654 = vpop.f32.mrb[0].mxu0
        %v1655 = vpop.f32.mrb[0].mxu0
        %v1656 = vadd.f32 0.0, %v1655
        %v1657 = vpop.f32.mrb[0].mxu0
        %1658 = vmatprep.mubr.bf16.mxu0 0
        %1659 = vmatmul.mubr.bf16.gmra.mrb[0].mxu0 %v1545
        %v1660 = vpop.f32.mrb[0].mxu0
        %v1661 = vadd.f32 0.0, %v1660
        %v1662 = vpop.f32.mrb[0].mxu0
        %v1663 = vpop.f32.mrb[0].mxu0
        %v1664 = vadd.f32 0.0, %v1663
        %v1665 = vpop.f32.mrb[0].mxu0
        %1666 = vmatprep.mubr.bf16.mxu0 0
        %1667 = vmatmul.mubr.bf16.gmra.mrb[0].mxu0 %v1548
        %v1668 = vpop.f32.mrb[0].mxu0
        %v1669 = vadd.f32 0.0, %v1668
        %v1670 = vpop.f32.mrb[0].mxu0
        %v1671 = vpop.f32.mrb[0].mxu0
        %v1672 = vpop.f32.mrb[0].mxu0
        %1673 = vdwg.mxu0
        %v1674 = vadd.f32 %v1449, %v1637
        %v1675 = vadd.f32 %v1450, %v1640
        %v1676 = vadd.f32 %v1451, %v1645
        %v1677 = vadd.f32 %v1452, %v1648
        %v1678 = vadd.f32 %v1453, %v1653
        %v1679 = vadd.f32 %v1454, %v1656
        %v1680 = vadd.f32 %v1455, %v1661
        %v1681 = vadd.f32 %v1456, %v1664
        %v1682 = vadd.f32 %v1457, %v1669
        %v1683 = vld [vmem:[%s185 + $0x2c] sm:$0xe]
        %v1684 = vld [vmem:[%s185 + $0x30] sm:$0xf]
        %v1685 = vld [vmem:[%s185 + $0x34] sm:$0xf]
        %v1686 = vld [vmem:[%s185 + $0x38] sm:$0xf]
        %v1687 = vld [vmem:[%s185 + $0x3c] sm:$0xf]
        %v1688 = vld [vmem:[%s185 + $0x40] sm:$0xf]
        %v1689 = vld [vmem:[%s185 + $0x44] sm:$0xf]
        %v1690 = vld [vmem:[%s185 + $0x48] sm:$0xf]
        %v1691 = vld [vmem:[%s185 + $0x4c] sm:$0xf]
        %v1692 = vld [vmem:[%s185 + $0x50] sm:$0x1]
        %s1693 = scalar_lea.vmem [#allocation5], 448
        %v1694 = vld [vmem:[%s1693] sm:$0xf]
        %v1695 = vld [vmem:[%s1693 + $0x4] sm:$0xf]
        %v1696 = vld [vmem:[%s1693 + $0x8] sm:$0xf]
        %v1697 = vld [vmem:[%s1693 + $0xc] sm:$0xf]
        %v1698 = vld [vmem:[%s1693 + $0x10] sm:$0xf]
        %v1699 = vld [vmem:[%s1693 + $0x14] sm:$0xf]
        %v1700 = vld [vmem:[%s1693 + $0x18] sm:$0xf]
        %v1701 = vld [vmem:[%s1693 + $0x1c] sm:$0xf]
        %v1702 = vld [vmem:[%s1693 + $0x20] sm:$0xf]
        %v1703 = vld [vmem:[%s1693 + $0x24] sm:$0xf]
        %v1704 = vld [vmem:[%s1693 + $0x28] sm:$0xf]
        %v1705 = vld [vmem:[%s1693 + $0x2c] sm:$0xf]
        %v1706 = vld [vmem:[%s1693 + $0x30] sm:$0xf]
        %v1707 = vld [vmem:[%s1693 + $0x34] sm:$0xf]
        %v1708 = vld [vmem:[%s1693 + $0x38] sm:$0xf]
        %v1709 = vld [vmem:[%s1693 + $0x3c] sm:$0xf]
        %v1720 = vunpack.c.l.b16 %v1683
        %v1721 = vunpack.c.l.b16 %v1684
        %v1722 = vunpack.c.l.b16 %v1685
        %v1723 = vunpack.c.l.b16 %v1686
        %v1724 = vunpack.c.l.b16 %v1687
        %v1725 = vunpack.c.l.b16 %v1688
        %v1726 = vunpack.c.l.b16 %v1689
        %v1727 = vunpack.c.l.b16 %v1690
        %v1728 = vunpack.c.l.b16 %v1691
        %v1729 = vunpack.c.l.b16 %v1692
        %v1730 = vpack.c.b16 %v1721, %v1720
        %v1731 = vpack.c.b16 %v1723, %v1722
        %v1732 = vpack.c.b16 %v1725, %v1724
        %v1733 = vpack.c.b16 %v1727, %v1726
        %v1734 = vpack.c.b16 %v1729, %v1728
        %v1735 = vrot.slane %v1730, 1
        %v1736 = vrot.slane %v1731, 1
        %v1737 = vsel %vm884, %v1735, %v1736
        %v1738 = vrot.slane %v1732, 1
        %v1739 = vsel %vm884, %v1736, %v1738
        %v1740 = vrot.slane %v1733, 1
        %v1741 = vsel %vm884, %v1738, %v1740
        %v1742 = vrot.slane %v1734, 1
        %v1743 = vsel %vm884, %v1740, %v1742
        %v1765 = vunpack.c.l.b16 %v1694
        %v1766 = vunpack.c.l.b16 %v1695
        %v1767 = vunpack.c.l.b16 %v1696
        %v1768 = vunpack.c.l.b16 %v1697
        %v1769 = vunpack.c.l.b16 %v1698
        %v1770 = vunpack.c.l.b16 %v1699
        %v1771 = vunpack.c.l.b16 %v1700
        %v1772 = vunpack.c.l.b16 %v1701
        %v1773 = vunpack.c.l.b16 %v1702
        %v1774 = vunpack.c.l.b16 %v1703
        %v1775 = vunpack.c.l.b16 %v1704
        %v1776 = vunpack.c.l.b16 %v1705
        %v1777 = vunpack.c.l.b16 %v1706
        %v1778 = vunpack.c.l.b16 %v1707
        %v1779 = vunpack.c.l.b16 %v1708
        %v1780 = vunpack.c.l.b16 %v1709
        %v1781 = vpack.c.b16 %v1766, %v1765
        %v1782 = vpack.c.b16 %v1768, %v1767
        %v1783 = vpack.c.b16 %v1770, %v1769
        %v1784 = vpack.c.b16 %v1772, %v1771
        %v1785 = vpack.c.b16 %v1774, %v1773
        %v1786 = vpack.c.b16 %v1776, %v1775
        %v1787 = vpack.c.b16 %v1778, %v1777
        %v1788 = vpack.c.b16 %v1780, %v1779
        %1797 = vmatprep.subr.bf16.mxu0 0
        %1798 = vmatpush1.bf16.msra.mxu0 %v1781
        %1799 = vmatprep.subr.bf16.mxu0 0
        %1800 = vmatpush1.bf16.msra.mxu0 %v1782
        %1801 = vmatprep.subr.bf16.mxu0 0
        %1802 = vmatpush1.bf16.msra.mxu0 %v1783
        %1803 = vmatprep.subr.bf16.mxu0 0
        %1804 = vmatpush1.bf16.msra.mxu0 %v1784
        %1805 = vmatprep.subr.bf16.mxu0 0
        %1806 = vmatpush1.bf16.msra.mxu0 %v1785
        %1807 = vmatprep.subr.bf16.mxu0 0
        %1808 = vmatpush1.bf16.msra.mxu0 %v1786
        %1809 = vmatprep.subr.bf16.mxu0 0
        %1810 = vmatpush1.bf16.msra.mxu0 %v1787
        %1811 = vmatprep.subr.bf16.mxu0 0
        %1812 = vmatpush1.bf16.msra.mxu0 %v1788
        %1813 = vmatprep.subr.bf16.mxu0 0
        %1814 = vmatpush1.bf16.msra.mxu0 0
        %1815 = vmatprep.subr.bf16.mxu0 0
        %1816 = vmatpush1.bf16.msra.mxu0 0
        %1817 = vmatprep.subr.bf16.mxu0 0
        %1818 = vmatpush1.bf16.msra.mxu0 0
        %1819 = vmatprep.subr.bf16.mxu0 0
        %1820 = vmatpush1.bf16.msra.mxu0 0
        %1821 = vmatprep.subr.bf16.mxu0 0
        %1822 = vmatpush1.bf16.msra.mxu0 0
        %1823 = vmatprep.subr.bf16.mxu0 0
        %1824 = vmatpush1.bf16.msra.mxu0 0
        %1825 = vmatprep.subr.bf16.mxu0 0
        %1826 = vmatpush1.bf16.msra.mxu0 0
        %1827 = vmatprep.subr.bf16.mxu0 0
        %1828 = vmatpush1.bf16.msra.mxu0 0
        %1829 = vmatprep.mubr.bf16.mxu0 0
        %1830 = vmatmul.mubr.bf16.gmra.mrb[0].mxu0 %v1737
        %v1831 = vpop.f32.mrb[0].mxu0
        %v1832 = vadd.f32 0.0, %v1831
        %v1833 = vpop.f32.mrb[0].mxu0
        %v1834 = vpop.f32.mrb[0].mxu0
        %v1835 = vadd.f32 0.0, %v1834
        %v1836 = vpop.f32.mrb[0].mxu0
        %1837 = vmatprep.mubr.bf16.mxu0 0
        %1838 = vmatmul.mubr.bf16.gmra.mrb[0].mxu0 %v1739
        %v1839 = vpop.f32.mrb[0].mxu0
        %v1840 = vadd.f32 0.0, %v1839
        %v1841 = vpop.f32.mrb[0].mxu0
        %v1842 = vpop.f32.mrb[0].mxu0
        %v1843 = vadd.f32 0.0, %v1842
        %v1844 = vpop.f32.mrb[0].mxu0
        %1845 = vmatprep.mubr.bf16.mxu0 0
        %1846 = vmatmul.mubr.bf16.gmra.mrb[0].mxu0 %v1741
        %v1847 = vpop.f32.mrb[0].mxu0
        %v1848 = vadd.f32 0.0, %v1847
        %v1849 = vpop.f32.mrb[0].mxu0
        %v1850 = vpop.f32.mrb[0].mxu0
        %v1851 = vadd.f32 0.0, %v1850
        %v1852 = vpop.f32.mrb[0].mxu0
        %1853 = vmatprep.mubr.bf16.mxu0 0
        %1854 = vmatmul.mubr.bf16.gmra.mrb[0].mxu0 %v1743
        %v1855 = vpop.f32.mrb[0].mxu0
        %v1856 = vadd.f32 0.0, %v1855
        %v1857 = vpop.f32.mrb[0].mxu0
        %v1858 = vpop.f32.mrb[0].mxu0
        %v1859 = vadd.f32 0.0, %v1858
        %v1860 = vpop.f32.mrb[0].mxu0
        %1861 = vmatprep.mubr.bf16.mxu0 0
        %1862 = vmatmul.mubr.bf16.gmra.mrb[0].mxu0 %v1742
        %v1863 = vpop.f32.mrb[0].mxu0
        %v1864 = vadd.f32 0.0, %v1863
        %v1865 = vpop.f32.mrb[0].mxu0
        %v1866 = vpop.f32.mrb[0].mxu0
        %v1867 = vpop.f32.mrb[0].mxu0
        %1868 = vdwg.mxu0
        %v1869 = vadd.f32 %v1674, %v1832
        %v1870 = vadd.f32 %v1675, %v1835
        %v1871 = vadd.f32 %v1676, %v1840
        %v1872 = vadd.f32 %v1677, %v1843
        %v1873 = vadd.f32 %v1678, %v1848
        %v1874 = vadd.f32 %v1679, %v1851
        %v1875 = vadd.f32 %v1680, %v1856
        %v1876 = vadd.f32 %v1681, %v1859
        %v1877 = vadd.f32 %v1682, %v1864
        %v1878 = vld [vmem:[%s185 + $0x4] sm:$0xe]
        %s1879 = scalar_lea.vmem [#allocation5], 512
        %v1880 = vld [vmem:[%s1879] sm:$0xf]
        %v1881 = vld [vmem:[%s1879 + $0x4] sm:$0xf]
        %v1882 = vld [vmem:[%s1879 + $0x8] sm:$0xf]
        %v1883 = vld [vmem:[%s1879 + $0xc] sm:$0xf]
        %v1884 = vld [vmem:[%s1879 + $0x10] sm:$0xf]
        %v1885 = vld [vmem:[%s1879 + $0x14] sm:$0xf]
        %v1886 = vld [vmem:[%s1879 + $0x18] sm:$0xf]
        %v1887 = vld [vmem:[%s1879 + $0x1c] sm:$0xf]
        %v1888 = vld [vmem:[%s1879 + $0x20] sm:$0xf]
        %v1889 = vld [vmem:[%s1879 + $0x24] sm:$0xf]
        %v1890 = vld [vmem:[%s1879 + $0x28] sm:$0xf]
        %v1891 = vld [vmem:[%s1879 + $0x2c] sm:$0xf]
        %v1892 = vld [vmem:[%s1879 + $0x30] sm:$0xf]
        %v1893 = vld [vmem:[%s1879 + $0x34] sm:$0xf]
        %v1894 = vld [vmem:[%s1879 + $0x38] sm:$0xf]
        %v1895 = vld [vmem:[%s1879 + $0x3c] sm:$0xf]
        %v1897 = vunpack.c.l.b16 %v1878
        %v1898 = vpack.c.b16 %v1496, %v1897
        %v1899 = vrot.slane %v1898, 1
        %v1900 = vrot.slane %v1506, 1
        %v1901 = vsel %vm884, %v1899, %v1900
        %v1902 = vrot.slane %v1507, 1
        %v1903 = vsel %vm884, %v1900, %v1902
        %v1904 = vrot.slane %v1508, 1
        %v1905 = vsel %vm884, %v1902, %v1904
        %v1906 = vrot.slane %v1509, 1
        %v1907 = vsel %vm884, %v1904, %v1906
        %v1929 = vunpack.c.l.b16 %v1880
        %v1930 = vunpack.c.l.b16 %v1881
        %v1931 = vunpack.c.l.b16 %v1882
        %v1932 = vunpack.c.l.b16 %v1883
        %v1933 = vunpack.c.l.b16 %v1884
        %v1934 = vunpack.c.l.b16 %v1885
        %v1935 = vunpack.c.l.b16 %v1886
        %v1936 = vunpack.c.l.b16 %v1887
        %v1937 = vunpack.c.l.b16 %v1888
        %v1938 = vunpack.c.l.b16 %v1889
        %v1939 = vunpack.c.l.b16 %v1890
        %v1940 = vunpack.c.l.b16 %v1891
        %v1941 = vunpack.c.l.b16 %v1892
        %v1942 = vunpack.c.l.b16 %v1893
        %v1943 = vunpack.c.l.b16 %v1894
        %v1944 = vunpack.c.l.b16 %v1895
        %v1945 = vpack.c.b16 %v1930, %v1929
        %v1946 = vpack.c.b16 %v1932, %v1931
        %v1947 = vpack.c.b16 %v1934, %v1933
        %v1948 = vpack.c.b16 %v1936, %v1935
        %v1949 = vpack.c.b16 %v1938, %v1937
        %v1950 = vpack.c.b16 %v1940, %v1939
        %v1951 = vpack.c.b16 %v1942, %v1941
        %v1952 = vpack.c.b16 %v1944, %v1943
        %1961 = vmatprep.subr.bf16.mxu0 0
        %1962 = vmatpush1.bf16.msra.mxu0 %v1945
        %1963 = vmatprep.subr.bf16.mxu0 0
        %1964 = vmatpush1.bf16.msra.mxu0 %v1946
        %1965 = vmatprep.subr.bf16.mxu0 0
        %1966 = vmatpush1.bf16.msra.mxu0 %v1947
        %1967 = vmatprep.subr.bf16.mxu0 0
        %1968 = vmatpush1.bf16.msra.mxu0 %v1948
        %1969 = vmatprep.subr.bf16.mxu0 0
        %1970 = vmatpush1.bf16.msra.mxu0 %v1949
        %1971 = vmatprep.subr.bf16.mxu0 0
        %1972 = vmatpush1.bf16.msra.mxu0 %v1950
        %1973 = vmatprep.subr.bf16.mxu0 0
        %1974 = vmatpush1.bf16.msra.mxu0 %v1951
        %1975 = vmatprep.subr.bf16.mxu0 0
        %1976 = vmatpush1.bf16.msra.mxu0 %v1952
        %1977 = vmatprep.subr.bf16.mxu0 0
        %1978 = vmatpush1.bf16.msra.mxu0 0
        %1979 = vmatprep.subr.bf16.mxu0 0
        %1980 = vmatpush1.bf16.msra.mxu0 0
        %1981 = vmatprep.subr.bf16.mxu0 0
        %1982 = vmatpush1.bf16.msra.mxu0 0
        %1983 = vmatprep.subr.bf16.mxu0 0
        %1984 = vmatpush1.bf16.msra.mxu0 0
        %1985 = vmatprep.subr.bf16.mxu0 0
        %1986 = vmatpush1.bf16.msra.mxu0 0
        %1987 = vmatprep.subr.bf16.mxu0 0
        %1988 = vmatpush1.bf16.msra.mxu0 0
        %1989 = vmatprep.subr.bf16.mxu0 0
        %1990 = vmatpush1.bf16.msra.mxu0 0
        %1991 = vmatprep.subr.bf16.mxu0 0
        %1992 = vmatpush1.bf16.msra.mxu0 0
        %1993 = vmatprep.mubr.bf16.mxu0 0
        %1994 = vmatmul.mubr.bf16.gmra.mrb[0].mxu0 %v1901
        %v1995 = vpop.f32.mrb[0].mxu0
        %v1996 = vadd.f32 0.0, %v1995
        %v1997 = vpop.f32.mrb[0].mxu0
        %v1998 = vpop.f32.mrb[0].mxu0
        %v1999 = vadd.f32 0.0, %v1998
        %v2000 = vpop.f32.mrb[0].mxu0
        %2001 = vmatprep.mubr.bf16.mxu0 0
        %2002 = vmatmul.mubr.bf16.gmra.mrb[0].mxu0 %v1903
        %v2003 = vpop.f32.mrb[0].mxu0
        %v2004 = vadd.f32 0.0, %v2003
        %v2005 = vpop.f32.mrb[0].mxu0
        %v2006 = vpop.f32.mrb[0].mxu0
        %v2007 = vadd.f32 0.0, %v2006
        %v2008 = vpop.f32.mrb[0].mxu0
        %2009 = vmatprep.mubr.bf16.mxu0 0
        %2010 = vmatmul.mubr.bf16.gmra.mrb[0].mxu0 %v1905
        %v2011 = vpop.f32.mrb[0].mxu0
        %v2012 = vadd.f32 0.0, %v2011
        %v2013 = vpop.f32.mrb[0].mxu0
        %v2014 = vpop.f32.mrb[0].mxu0
        %v2015 = vadd.f32 0.0, %v2014
        %v2016 = vpop.f32.mrb[0].mxu0
        %2017 = vmatprep.mubr.bf16.mxu0 0
        %2018 = vmatmul.mubr.bf16.gmra.mrb[0].mxu0 %v1907
        %v2019 = vpop.f32.mrb[0].mxu0
        %v2020 = vadd.f32 0.0, %v2019
        %v2021 = vpop.f32.mrb[0].mxu0
        %v2022 = vpop.f32.mrb[0].mxu0
        %v2023 = vadd.f32 0.0, %v2022
        %v2024 = vpop.f32.mrb[0].mxu0
        %2025 = vmatprep.mubr.bf16.mxu0 0
        %2026 = vmatmul.mubr.bf16.gmra.mrb[0].mxu0 %v1906
        %v2027 = vpop.f32.mrb[0].mxu0
        %v2028 = vadd.f32 0.0, %v2027
        %v2029 = vpop.f32.mrb[0].mxu0
        %v2030 = vpop.f32.mrb[0].mxu0
        %v2031 = vpop.f32.mrb[0].mxu0
        %2032 = vdwg.mxu0
        %v2033 = vadd.f32 %v1869, %v1996
        %v2034 = vadd.f32 %v1870, %v1999
        %v2035 = vadd.f32 %v1871, %v2004
        %v2036 = vadd.f32 %v1872, %v2007
        %v2037 = vadd.f32 %v1873, %v2012
        %v2038 = vadd.f32 %v1874, %v2015
        %v2039 = vadd.f32 %v1875, %v2020
        %v2040 = vadd.f32 %v1876, %v2023
        %v2041 = vadd.f32 %v1877, %v2028
        %v2042 = vld [vmem:[#allocation7] sm:$0x1]
        %v2044 = vlaneseq
        %v2045 = vshrl.u32 %v2044, 7
        %v2046 = vsub.s32 0, %v2045
        %v2047 = vrot.slane %v2042, %v2046
        %v2049 = vadd.f32 %v2033, %v2047
        %v2050 = vadd.f32 %v2034, %v2047
        %v2051 = vadd.f32 %v2035, %v2047
        %v2052 = vadd.f32 %v2036, %v2047
        %v2053 = vadd.f32 %v2037, %v2047
        %v2054 = vadd.f32 %v2038, %v2047
        %v2055 = vadd.f32 %v2039, %v2047
        %v2056 = vadd.f32 %v2040, %v2047
        %v2057 = vadd.f32 %v2041, %v2047
        %v2058 = vpack.c.bf16 %v2050, %v2049
        %v2059 = vpack.c.bf16 %v2052, %v2051
        %v2060 = vpack.c.bf16 %v2054, %v2053
        %v2061 = vpack.c.bf16 %v2056, %v2055
        %v2062 = vpack.c.bf16 %v2057, %v2057
        %v2068 = vunpack.c.l.b16 %v2058
        %v2069 = vunpack.c.h.b16 %v2058
        %v2070 = vunpack.c.l.b16 %v2059
        %v2071 = vunpack.c.h.b16 %v2059
        %v2072 = vunpack.c.l.b16 %v2060
        %v2073 = vunpack.c.h.b16 %v2060
        %v2074 = vunpack.c.l.b16 %v2061
        %v2075 = vunpack.c.h.b16 %v2061
        %v2076 = vunpack.c.l.b16 %v2062
        %v2077 = vpack.c.b16 %v2068, %v2068
        %v2078 = vpack.c.b16 %v2069, %v2069
        %v2079 = vpack.c.b16 %v2070, %v2070
        %v2080 = vpack.c.b16 %v2071, %v2071
        %v2081 = vpack.c.b16 %v2072, %v2072
        %v2082 = vpack.c.b16 %v2073, %v2073
        %v2083 = vpack.c.b16 %v2074, %v2074
        %v2084 = vpack.c.b16 %v2075, %v2075
        %v2085 = vpack.c.b16 %v2076, %v2076
        %2095 = vst [vmem:[%s215] sm:$0xf] %v2077
        %2096 = vst [vmem:[%s215 + $0x4] sm:$0xf] %v2078
        %2097 = vst [vmem:[%s215 + $0x8] sm:$0xf] %v2079
        %2098 = vst [vmem:[%s215 + $0xc] sm:$0xf] %v2080
        %2099 = vst [vmem:[%s215 + $0x10] sm:$0xf] %v2081
        %2100 = vst [vmem:[%s215 + $0x14] sm:$0xf] %v2082
        %2101 = vst [vmem:[%s215 + $0x18] sm:$0xf] %v2083
        %2102 = vst [vmem:[%s215 + $0x1c] sm:$0xf] %v2084
        %2103 = vst [vmem:[%s215 + $0x20] sm:$0xf] %v2085
        %s2104 = sand.u32 %s97, 1
        %s2105 = scalar_lea.sflag [#allocation4], %s2104
        %s2106 = sand.u32 %s97, 1
        %s2107 = smul.addr %s2106, 36
        %s2108 = scalar_lea.vmem [#allocation8], %s2107
        // Predicated region
        $region45: #{basic_block_v1_forward.3} parent=31 // pred_check
          %p2109 = pneg %p107
        $region46: #{basic_block_v1_forward.3} parent=31 // pred_check_branch
          %2111 = sbr.rel (%p2109) target = $region48
        $region47: #{basic_block_v1_forward.3} parent=31 // pred_region
          %s2113 = ssub.s32 576, 576
          %2114 = vsyncadd %s2105, %s2113
          %s2115 = smul.addr %s21, 9
          %s2116 = smul.addr %s2115, 64
          %s2117 = scalar_lea.hbm %s3, %s2116
          %s2118 = sshll.u32 %s2108, 4
          %s2119 = int_to_ptr.vmem [resolvable:$true] %s2118
          %2124 = dma.vmem_to_hbm [thread:$0]  %s2119, 576, %s2117, %s2105, 64, 64, 4
        $region48: #{basic_block_v1_forward.3} parent=31 // pred_fallthru
          _
      $region32: #{basic_block_v1_forward.3} parent=5 // pred_fallthru
        _
      %p2125 = scmp.le.s32.totalorder 2, %s16
      // Predicated region
      $region49: #{basic_block_v1_forward.3} parent=5 // pred_check
        %p2126 = pneg %p2125
      $region50: #{basic_block_v1_forward.3} parent=5 // pred_check_branch
        %2128 = sbr.rel (%p2126) target = $region52
      $region51: #{basic_block_v1_forward.3} parent=5 // pred_region
        %s2129 = ssub.s32 %s16, 2
        // Predicated region
        $region53: #{basic_block_v1_forward.3} parent=51 // pred_check
          %p2130 = pneg %p113
        $region54: #{basic_block_v1_forward.3} parent=51 // pred_check_branch
          %2132 = sbr.rel (%p2130) target = $region56
        $region55: #{basic_block_v1_forward.3} parent=51 // pred_region
          %s2133 = sand.u32 %s98, 1
          %s2134 = scalar_lea.sflag [#allocation4], %s2133
          %s2135 = sand.u32 %s98, 1
          %s2136 = smul.addr %s2135, 36
          %s2137 = scalar_lea.vmem [#allocation8], %s2136
          %2138 = dma.done %s2134, 576
        $region56: #{basic_block_v1_forward.3} parent=51 // pred_fallthru
          _
      $region52: #{basic_block_v1_forward.3} parent=5 // pred_fallthru
        _
    $region6: #{basic_block_v1_forward.3} parent=1 // loop_footer
      %s20 = sadd.s32 1, %s16
    $region7: #{basic_block_v1_forward.3} parent=1 // loop_footer_branch
      %15 = sbr.rel target = $region3
    $region8: #{basic_block_v1_forward.3} parent=1 // loop_exit
      _
    %2139 = vsyncpa [#allocation3], 1
    %s2140 = scalar_lea.sflag [#allocation3], 1
    %2141 = vsyncpa %s2140, 1
    %2142 = vsyncpa [#allocation6], 1
    %2143 = vsyncpa [#allocation4], 1
    %s2144 = scalar_lea.sflag [#allocation4], 1
    %2145 = vsyncpa %s2144, 1

// kernel: basic_block_v1_forward.5
$region0: #{basic_block_v1_forward.5}
  #allocation0 [shape = 'u32[]', space=smem, size = 0x4, offset = 0x4, fixed_abs, tag = 'smem constant byte address 0x4 - core index']
  #allocation1 [shape = 'u32[144,128]{1,0:T(1,128)}', space=vmem, size = 0x12000, scoped, tag = 'internal scratch']
  %s0 = inlined_call_operand.hbm [shape: bf16[2,102,128], index: 0, kind: input, shape index: {}]
  %s1 = inlined_call_operand.hbm [shape: bf16[9,128,128], index: 1, kind: input, shape index: {}]
  %s2 = inlined_call_operand.hbm [shape: f32[1,128], index: 2, kind: input, shape index: {}]
  %s3 = inlined_call_operand.hbm [shape: bf16[2,80,128], index: 3, kind: input, shape index: {}]
  %s4 = inlined_call_operand.hbm [shape: f32[2,80,128], index: 4, kind: output, shape index: {}]
  %s5 = sld [smem:[#allocation0]]
  $region65: #{basic_block_v1_forward.5} parent=0
    _
  %s7 = ssub.s32 1, %s5
  %s8 = scalar_select 0, %s7, %s5
  $region1: #{basic_block_v1_forward.5} parent=0
    #allocation2 [shape = 'u8[53248]{0}', space=vmem, size = 0xd000, scoped, tag = 'input window, operand 0']
    #allocation3 [shape = 's32[2]{0}', space=sflag, size = 0x8, scoped, tag = 'scoped memory for basic_block_v1_forward.5']
    #allocation4 [shape = 's32[2]{0}', space=sflag, size = 0x8, scoped, tag = 'scoped memory for basic_block_v1_forward.5']
    #allocation5 [shape = 'u8[294912]{0}', space=vmem, size = 0x48000, scoped, tag = 'input window, operand 1, single buffered']
    #allocation6 [shape = 's32[1]{0}', space=sflag, size = 0x4, scoped, tag = 'scoped memory for basic_block_v1_forward.5']
    #allocation7 [shape = 'u8[512]{0}', space=vmem, size = 0x400, scoped, tag = 'input window, operand 2, single buffered']
    #allocation8 [shape = 'u8[40960]{0}', space=vmem, size = 0xa000, scoped, tag = 'input window, operand 3']
    #allocation9 [shape = 's32[2]{0}', space=sflag, size = 0x8, scoped, tag = 'scoped memory for basic_block_v1_forward.5']
    #allocation10 [shape = 'u8[81920]{0}', space=vmem, size = 0x14000, scoped, tag = 'output window, operand 0']
    %9 = vsyncpa [#allocation3], 0
    %s10 = scalar_lea.sflag [#allocation3], 1
    %11 = vsyncpa %s10, 0
    %12 = vsyncpa [#allocation6], 0
    %13 = vsyncpa [#allocation9], 0
    %s14 = scalar_lea.sflag [#allocation9], 1
    %15 = vsyncpa %s14, 0
    %16 = vsyncpa [#allocation4], 0
    %s17 = scalar_lea.sflag [#allocation4], 1
    %18 = vsyncpa %s17, 0
    loop: start=0, step=1, limit=4
    $region2: #{basic_block_v1_forward.5} parent=1 // loop_pre_header
      _
    $region3: #{basic_block_v1_forward.5} parent=1 // loop_header
      %s20 = sphi 0, %s24
      %p21 = scmp.ge.s32.totalorder %s20, 4
      %s30 = sphi 0, %s32
      %s33 = sphi 0, %s30
      %s34 = sphi 0, %s33
      %s50 = sphi 0, %s34
      %s54 = sphi 0, %s54
      %s56 = sphi 0, %s54
      %s57 = sphi 0, %s56
      %s71 = sphi 0, %s57
      %s75 = sphi 0, %s75
      %s77 = sphi 0, %s75
      %s78 = sphi 0, %s77
      %s92 = sphi 0, %s78
      %s98 = sphi 0, %s100
      %s101 = sphi 0, %s98
      %s102 = sphi 0, %s101
      %s118 = sphi 0, %s102
      %s124 = sphi 0, %s126
      %s127 = sphi 0, %s124
      %s128 = sphi 0, %s127
      %s144 = sphi 0, %s128
    $region4: #{basic_block_v1_forward.5} parent=1 // loop_header_branch
      %23 = sbr.rel (%p21) target = $region8
    $region5: #{basic_block_v1_forward.5} parent=1 // loop_body
      %s25 = ssub.s32 %s20, 1
      %s26 = ssub.s32 %s20, 2
      %s27 = sadd.s32 %s20, 1
      %s28 = ssub.s32 %s20, %s27
      %p29 = scmp.eq.s32.totalorder %s28, 0
      %s31 = sadd.s32 %s30, 1
      %s32 = scalar_select %p29, %s30, %s31
      %p35 = pneg %p29
      %p36 = scmp.eq.s32.totalorder %s20, 1
      %p37 = por %p35, %p36
      %p38 = scmp.ne.s32.totalorder %s30, %s33
      %p39 = scmp.eq.s32.totalorder %s20, 0
      %p40 = por %p38, %p39
      %p41 = scmp.ne.s32.totalorder %s30, %s33
      %p42 = scmp.eq.s32.totalorder %s25, 1
      %p43 = por %p41, %p42
      %p44 = scmp.ne.s32.totalorder %s33, %s34
      %p45 = scmp.eq.s32.totalorder %s25, 0
      %p46 = por %p44, %p45
      %p47 = scmp.ne.s32.totalorder %s33, %s34
      %p48 = scmp.eq.s32.totalorder %s26, 1
      %p49 = por %p47, %p48
      %p51 = scmp.ne.s32.totalorder %s34, %s50
      %p52 = scmp.eq.s32.totalorder %s26, 0
      %p53 = por %p51, %p52
      %s55 = sadd.s32 %s54, 1
      %p58 = scmp.eq.s32.totalorder %s20, 1
      %p59 = scmp.ne.s32.totalorder %s54, %s56
      %p60 = scmp.eq.s32.totalorder %s20, 0
      %p61 = por %p59, %p60
      %p62 = scmp.ne.s32.totalorder %s54, %s56
      %p63 = scmp.eq.s32.totalorder %s25, 1
      %p64 = por %p62, %p63
      %p65 = scmp.ne.s32.totalorder %s56, %s57
      %p66 = scmp.eq.s32.totalorder %s25, 0
      %p67 = por %p65, %p66
      %p68 = scmp.ne.s32.totalorder %s56, %s57
      %p69 = scmp.eq.s32.totalorder %s26, 1
      %p70 = por %p68, %p69
      %p72 = scmp.ne.s32.totalorder %s57, %s71
      %p73 = scmp.eq.s32.totalorder %s26, 0
      %p74 = por %p72, %p73
      %s76 = sadd.s32 %s75, 1
      %p79 = scmp.eq.s32.totalorder %s20, 1
      %p80 = scmp.ne.s32.totalorder %s75, %s77
      %p81 = scmp.eq.s32.totalorder %s20, 0
      %p82 = por %p80, %p81
      %p83 = scmp.ne.s32.totalorder %s75, %s77
      %p84 = scmp.eq.s32.totalorder %s25, 1
      %p85 = por %p83, %p84
      %p86 = scmp.ne.s32.totalorder %s77, %s78
      %p87 = scmp.eq.s32.totalorder %s25, 0
      %p88 = por %p86, %p87
      %p89 = scmp.ne.s32.totalorder %s77, %s78
      %p90 = scmp.eq.s32.totalorder %s26, 1
      %p91 = por %p89, %p90
      %p93 = scmp.ne.s32.totalorder %s78, %s92
      %p94 = scmp.eq.s32.totalorder %s26, 0
      %p95 = por %p93, %p94
      %s96 = ssub.s32 %s20, %s27
      %p97 = scmp.eq.s32.totalorder %s96, 0
      %s99 = sadd.s32 %s98, 1
      %s100 = scalar_select %p97, %s98, %s99
      %p103 = pneg %p97
      %p104 = scmp.eq.s32.totalorder %s20, 1
      %p105 = por %p103, %p104
      %p106 = scmp.ne.s32.totalorder %s98, %s101
      %p107 = scmp.eq.s32.totalorder %s20, 0
      %p108 = por %p106, %p107
      %p109 = scmp.ne.s32.totalorder %s98, %s101
      %p110 = scmp.eq.s32.totalorder %s25, 1
      %p111 = por %p109, %p110
      %p112 = scmp.ne.s32.totalorder %s101, %s102
      %p113 = scmp.eq.s32.totalorder %s25, 0
      %p114 = por %p112, %p113
      %p115 = scmp.ne.s32.totalorder %s101, %s102
      %p116 = scmp.eq.s32.totalorder %s26, 1
      %p117 = por %p115, %p116
      %p119 = scmp.ne.s32.totalorder %s102, %s118
      %p120 = scmp.eq.s32.totalorder %s26, 0
      %p121 = por %p119, %p120
      %s122 = ssub.s32 %s20, %s27
      %p123 = scmp.eq.s32.totalorder %s122, 0
      %s125 = sadd.s32 %s124, 1
      %s126 = scalar_select %p123, %s124, %s125
      %p129 = pneg %p123
      %p130 = scmp.eq.s32.totalorder %s20, 1
      %p131 = por %p129, %p130
      %p132 = scmp.ne.s32.totalorder %s124, %s127
      %p133 = scmp.eq.s32.totalorder %s20, 0
      %p134 = por %p132, %p133
      %p135 = scmp.ne.s32.totalorder %s124, %s127
      %p136 = scmp.eq.s32.totalorder %s25, 1
      %p137 = por %p135, %p136
      %p138 = scmp.ne.s32.totalorder %s127, %s128
      %p139 = scmp.eq.s32.totalorder %s25, 0
      %p140 = por %p138, %p139
      %p141 = scmp.ne.s32.totalorder %s127, %s128
      %p142 = scmp.eq.s32.totalorder %s26, 1
      %p143 = por %p141, %p142
      %p145 = scmp.ne.s32.totalorder %s128, %s144
      %p146 = scmp.eq.s32.totalorder %s26, 0
      %p147 = por %p145, %p146
      %p148 = scmp.le.s32.totalorder 1, %s20
      %p149 = scmp.lt.s32.totalorder %s20, 3
      %p150 = pnand %p148, %p149
      %p151 = pneg %p150
      // Predicated region
      $region9: #{basic_block_v1_forward.5} parent=5 // pred_check
        _
      $region10: #{basic_block_v1_forward.5} parent=5 // pred_check_branch
        %153 = sbr.rel (%p150) target = $region12
      $region11: #{basic_block_v1_forward.5} parent=5 // pred_region
        %s154 = ssub.s32 %s20, 1
        // Predicated region
        $region13: #{basic_block_v1_forward.5} parent=11 // pred_check
          %p155 = pneg %p67
        $region14: #{basic_block_v1_forward.5} parent=11 // pred_check_branch
          %157 = sbr.rel (%p155) target = $region16
        $region15: #{basic_block_v1_forward.5} parent=11 // pred_region
          %s159 = ssub.s32 9216, 9216
          %160 = vsyncadd [#allocation6], %s159
          %s161 = sshll.u32 [#allocation5], 4
          %s162 = int_to_ptr.vmem [resolvable:$true] %s161
          %167 = dma.hbm_to_vmem [thread:$0]  %s1, 9216, %s162, [#allocation6], 64, 64, 4
        $region16: #{basic_block_v1_forward.5} parent=11 // pred_fallthru
          _
        // Predicated region
        $region17: #{basic_block_v1_forward.5} parent=11 // pred_check
          %p168 = pneg %p88
        $region18: #{basic_block_v1_forward.5} parent=11 // pred_check_branch
          %170 = sbr.rel (%p168) target = $region20
        $region19: #{basic_block_v1_forward.5} parent=11 // pred_region
          %s172 = ssub.s32 16, 16
          %173 = vsyncadd [#allocation6], %s172
          %s175 = sshll.u32 [#allocation7], 4
          %s176 = int_to_ptr.vmem [resolvable:$true] %s175
          %178 = dma.hbm_to_vmem [thread:$0]  %s2, 16, %s176, [#allocation6]
        $region20: #{basic_block_v1_forward.5} parent=11 // pred_fallthru
          _
      $region12: #{basic_block_v1_forward.5} parent=5 // pred_fallthru
        _
      %p179 = scmp.lt.s32.totalorder %s20, 2
      // Predicated region
      $region21: #{basic_block_v1_forward.5} parent=5 // pred_check
        %p180 = pneg %p179
      $region22: #{basic_block_v1_forward.5} parent=5 // pred_check_branch
        %182 = sbr.rel (%p180) target = $region24
      $region23: #{basic_block_v1_forward.5} parent=5 // pred_region
        // Predicated region
        $region25: #{basic_block_v1_forward.5} parent=23 // pred_check
          %p183 = pneg %p40
        $region26: #{basic_block_v1_forward.5} parent=23 // pred_check_branch
          %185 = sbr.rel (%p183) target = $region28
        $region27: #{basic_block_v1_forward.5} parent=23 // pred_region
          %s186 = sand.u32 %s30, 1
          %s187 = scalar_lea.sflag [#allocation3], %s186
          %s188 = sand.u32 %s30, 1
          %s189 = smul.addr %s188, 52
          %s190 = scalar_lea.vmem [#allocation2], %s189
          %s192 = ssub.s32 832, 832
          %193 = vsyncadd %s187, %s192
          %s194 = smul.addr %s20, 13
          %s195 = smul.addr %s194, 64
          %s196 = scalar_lea.hbm %s0, %s195
          %s197 = sshll.u32 %s190, 4
          %s198 = int_to_ptr.vmem [resolvable:$true] %s197
          %203 = dma.hbm_to_vmem [thread:$0]  %s196, 832, %s198, %s187, 64, 64, 4
        $region28: #{basic_block_v1_forward.5} parent=23 // pred_fallthru
          _
        // Predicated region
        $region29: #{basic_block_v1_forward.5} parent=23 // pred_check
          %p204 = pneg %p108
        $region30: #{basic_block_v1_forward.5} parent=23 // pred_check_branch
          %206 = sbr.rel (%p204) target = $region32
        $region31: #{basic_block_v1_forward.5} parent=23 // pred_region
          %s207 = sand.u32 %s98, 1
          %s208 = scalar_lea.sflag [#allocation9], %s207
          %s209 = sand.u32 %s98, 1
          %s210 = smul.addr %s209, 40
          %s211 = scalar_lea.vmem [#allocation8], %s210
          %s213 = ssub.s32 640, 640
          %214 = vsyncadd %s208, %s213
          %s215 = smul.addr %s20, 10
          %s216 = smul.addr %s215, 64
          %s217 = scalar_lea.hbm %s3, %s216
          %s218 = sshll.u32 %s211, 4
          %s219 = int_to_ptr.vmem [resolvable:$true] %s218
          %224 = dma.hbm_to_vmem [thread:$0]  %s217, 640, %s219, %s208, 64, 64, 4
        $region32: #{basic_block_v1_forward.5} parent=23 // pred_fallthru
          _
      $region24: #{basic_block_v1_forward.5} parent=5 // pred_fallthru
        _
      %p225 = scmp.le.s32.totalorder 1, %s20
      %p226 = scmp.lt.s32.totalorder %s20, 3
      %p227 = pnand %p225, %p226
      %p228 = pneg %p227
      // Predicated region
      $region33: #{basic_block_v1_forward.5} parent=5 // pred_check
        _
      $region34: #{basic_block_v1_forward.5} parent=5 // pred_check_branch
        %230 = sbr.rel (%p227) target = $region36
      $region35: #{basic_block_v1_forward.5} parent=5 // pred_region
        %s231 = ssub.s32 %s20, 1
        %s232 = sand.u32 %s33, 1
        %s233 = scalar_lea.sflag [#allocation3], %s232
        %s234 = sand.u32 %s33, 1
        %s235 = smul.addr %s234, 52
        %s236 = scalar_lea.vmem [#allocation2], %s235
        // Predicated region
        $region37: #{basic_block_v1_forward.5} parent=35 // pred_check
          %p237 = pneg %p46
        $region38: #{basic_block_v1_forward.5} parent=35 // pred_check_branch
          %239 = sbr.rel (%p237) target = $region40
        $region39: #{basic_block_v1_forward.5} parent=35 // pred_region
          %240 = dma.done %s233, 832
        $region40: #{basic_block_v1_forward.5} parent=35 // pred_fallthru
          _
        // Predicated region
        $region41: #{basic_block_v1_forward.5} parent=35 // pred_check
          %p241 = pneg %p67
        $region42: #{basic_block_v1_forward.5} parent=35 // pred_check_branch
          %243 = sbr.rel (%p241) target = $region44
        $region43: #{basic_block_v1_forward.5} parent=35 // pred_region
          %244 = dma.done [#allocation6], 9216
        $region44: #{basic_block_v1_forward.5} parent=35 // pred_fallthru
          _
        // Predicated region
        $region45: #{basic_block_v1_forward.5} parent=35 // pred_check
          %p245 = pneg %p88
        $region46: #{basic_block_v1_forward.5} parent=35 // pred_check_branch
          %247 = sbr.rel (%p245) target = $region48
        $region47: #{basic_block_v1_forward.5} parent=35 // pred_region
          %248 = dma.done [#allocation6], 16
        $region48: #{basic_block_v1_forward.5} parent=35 // pred_fallthru
          _
        %s249 = sand.u32 %s101, 1
        %s250 = scalar_lea.sflag [#allocation9], %s249
        %s251 = sand.u32 %s101, 1
        %s252 = smul.addr %s251, 40
        %s253 = scalar_lea.vmem [#allocation8], %s252
        // Predicated region
        $region49: #{basic_block_v1_forward.5} parent=35 // pred_check
          %p254 = pneg %p114
        $region50: #{basic_block_v1_forward.5} parent=35 // pred_check_branch
          %256 = sbr.rel (%p254) target = $region52
        $region51: #{basic_block_v1_forward.5} parent=35 // pred_region
          %257 = dma.done %s250, 640
        $region52: #{basic_block_v1_forward.5} parent=35 // pred_fallthru
          _
        %s258 = sand.u32 %s33, 1
        %s259 = scalar_lea.sflag [#allocation3], %s258
        %s260 = sand.u32 %s33, 1
        %s261 = smul.addr %s260, 52
        %s262 = scalar_lea.vmem [#allocation2], %s261
        %p263 = pneg %p46
        %p264 = pneg %p43
        %p265 = pneg %p67
        %p266 = pneg %p64
        %p267 = pneg %p88
        %p268 = pneg %p85
        %s269 = sand.u32 %s101, 1
        %s270 = scalar_lea.sflag [#allocation9], %s269
        %s271 = sand.u32 %s101, 1
        %s272 = smul.addr %s271, 40
        %s273 = scalar_lea.vmem [#allocation8], %s272
        %p274 = pneg %p114
        %p275 = pneg %p111
        %p276 = pneg %p140
        %p277 = pneg %p137
        %s278 = sand.u32 %s127, 1
        %s279 = scalar_lea.sflag [#allocation4], %s278
        %s280 = sand.u32 %s127, 1
        %s281 = smul.addr %s280, 80
        %s282 = scalar_lea.vmem [#allocation10], %s281
        %v284 = vld [vmem:[%s236] sm:$0xf]
        %v285 = vld [vmem:[%s236 + $0x4] sm:$0xf]
        %v286 = vld [vmem:[%s236 + $0x8] sm:$0xf]
        %v287 = vld [vmem:[%s236 + $0xc] sm:$0xf]
        %v288 = vld [vmem:[%s236 + $0x10] sm:$0xf]
        %v289 = vld [vmem:[%s236 + $0x14] sm:$0xf]
        %v290 = vld [vmem:[%s236 + $0x18] sm:$0xf]
        %v291 = vld [vmem:[%s236 + $0x1c] sm:$0xf]
        %v292 = vld [vmem:[%s236 + $0x20] sm:$0xf]
        %v293 = vld [vmem:[%s236 + $0x24] sm:$0xf]
        %v294 = vld [vmem:[#allocation5] sm:$0xf]
        %v295 = vld [vmem:[#allocation5 + $0x4] sm:$0xf]
        %v296 = vld [vmem:[#allocation5 + $0x8] sm:$0xf]
        %v297 = vld [vmem:[#allocation5 + $0xc] sm:$0xf]
        %v298 = vld [vmem:[#allocation5 + $0x10] sm:$0xf]
        %v299 = vld [vmem:[#allocation5 + $0x14] sm:$0xf]
        %v300 = vld [vmem:[#allocation5 + $0x18] sm:$0xf]
        %v301 = vld [vmem:[#allocation5 + $0x1c] sm:$0xf]
        %v302 = vld [vmem:[#allocation5 + $0x20] sm:$0xf]
        %v303 = vld [vmem:[#allocation5 + $0x24] sm:$0xf]
        %v304 = vld [vmem:[#allocation5 + $0x28] sm:$0xf]
        %v305 = vld [vmem:[#allocation5 + $0x2c] sm:$0xf]
        %v306 = vld [vmem:[#allocation5 + $0x30] sm:$0xf]
        %v307 = vld [vmem:[#allocation5 + $0x34] sm:$0xf]
        %v308 = vld [vmem:[#allocation5 + $0x38] sm:$0xf]
        %v309 = vld [vmem:[#allocation5 + $0x3c] sm:$0xf]
        %v310 = vld [vmem:[%s236 + $0x28] sm:$0x1]
        %s311 = scalar_lea.vmem [#allocation5], 64
        %v312 = vld [vmem:[%s311] sm:$0xf]
        %v313 = vld [vmem:[%s311 + $0x4] sm:$0xf]
        %v314 = vld [vmem:[%s311 + $0x8] sm:$0xf]
        %v315 = vld [vmem:[%s311 + $0xc] sm:$0xf]
        %v316 = vld [vmem:[%s311 + $0x10] sm:$0xf]
        %v317 = vld [vmem:[%s311 + $0x14] sm:$0xf]
        %v318 = vld [vmem:[%s311 + $0x18] sm:$0xf]
        %v319 = vld [vmem:[%s311 + $0x1c] sm:$0xf]
        %v320 = vld [vmem:[%s311 + $0x20] sm:$0xf]
        %v321 = vld [vmem:[%s311 + $0x24] sm:$0xf]
        %v322 = vld [vmem:[%s311 + $0x28] sm:$0xf]
        %v323 = vld [vmem:[%s311 + $0x2c] sm:$0xf]
        %v324 = vld [vmem:[%s311 + $0x30] sm:$0xf]
        %v325 = vld [vmem:[%s311 + $0x34] sm:$0xf]
        %v326 = vld [vmem:[%s311 + $0x38] sm:$0xf]
        %v327 = vld [vmem:[%s311 + $0x3c] sm:$0xf]
        %v339 = vunpack.c.l.b16 %v284
        %v340 = vunpack.c.l.b16 %v285
        %v341 = vunpack.c.l.b16 %v286
        %v342 = vunpack.c.l.b16 %v287
        %v343 = vunpack.c.l.b16 %v288
        %v344 = vunpack.c.l.b16 %v289
        %v345 = vunpack.c.l.b16 %v290
        %v346 = vunpack.c.l.b16 %v291
        %v347 = vunpack.c.l.b16 %v292
        %v348 = vunpack.c.l.b16 %v293
        %v349 = vunpack.c.l.b16 %v310
        %v350 = vpack.c.b16 %v340, %v339
        %v351 = vpack.c.b16 %v342, %v341
        %v352 = vpack.c.b16 %v344, %v343
        %v353 = vpack.c.b16 %v346, %v345
        %v354 = vpack.c.b16 %v348, %v347
        %v355 = vpack.c.b16 %v349, %v349
        %vm356 = vsmask.f32 7424
        %v358 = vshrl.u32 %v350, 16
        %v360 = vshll.u32 %v350, 16
        %v362 = vrot.slane %v360, 1
        %v363 = vor.u32 %v358, %v362
        %v365 = vshll.u32 %v351, 16
        %v367 = vrot.slane %v365, 1
        %v368 = vsel %vm356, %v363, %v367
        %v369 = vshrl.u32 %v351, 16
        %v371 = vor.u32 %v369, %v367
        %v373 = vshll.u32 %v352, 16
        %v375 = vrot.slane %v373, 1
        %v376 = vsel %vm356, %v371, %v375
        %v377 = vshrl.u32 %v352, 16
        %v379 = vor.u32 %v377, %v375
        %v381 = vshll.u32 %v353, 16
        %v383 = vrot.slane %v381, 1
        %v384 = vsel %vm356, %v379, %v383
        %v385 = vshrl.u32 %v353, 16
        %v387 = vor.u32 %v385, %v383
        %v389 = vshll.u32 %v354, 16
        %v391 = vrot.slane %v389, 1
        %v392 = vsel %vm356, %v387, %v391
        %v393 = vshrl.u32 %v354, 16
        %v395 = vor.u32 %v393, %v391
        %v397 = vshll.u32 %v355, 16
        %v399 = vrot.slane %v397, 1
        %v400 = vsel %vm356, %v395, %v399
        %v422 = vunpack.c.l.b16 %v312
        %v423 = vunpack.c.l.b16 %v313
        %v424 = vunpack.c.l.b16 %v314
        %v425 = vunpack.c.l.b16 %v315
        %v426 = vunpack.c.l.b16 %v316
        %v427 = vunpack.c.l.b16 %v317
        %v428 = vunpack.c.l.b16 %v318
        %v429 = vunpack.c.l.b16 %v319
        %v430 = vunpack.c.l.b16 %v320
        %v431 = vunpack.c.l.b16 %v321
        %v432 = vunpack.c.l.b16 %v322
        %v433 = vunpack.c.l.b16 %v323
        %v434 = vunpack.c.l.b16 %v324
        %v435 = vunpack.c.l.b16 %v325
        %v436 = vunpack.c.l.b16 %v326
        %v437 = vunpack.c.l.b16 %v327
        %v438 = vpack.c.b16 %v423, %v422
        %v439 = vpack.c.b16 %v425, %v424
        %v440 = vpack.c.b16 %v427, %v426
        %v441 = vpack.c.b16 %v429, %v428
        %v442 = vpack.c.b16 %v431, %v430
        %v443 = vpack.c.b16 %v433, %v432
        %v444 = vpack.c.b16 %v435, %v434
        %v445 = vpack.c.b16 %v437, %v436
        %454 = vmatprep.subr.bf16.mxu0 0
        %455 = vmatpush1.bf16.msra.mxu0 %v438
        %456 = vmatprep.subr.bf16.mxu0 0
        %457 = vmatpush1.bf16.msra.mxu0 %v439
        %458 = vmatprep.subr.bf16.mxu0 0
        %459 = vmatpush1.bf16.msra.mxu0 %v440
        %460 = vmatprep.subr.bf16.mxu0 0
        %461 = vmatpush1.bf16.msra.mxu0 %v441
        %462 = vmatprep.subr.bf16.mxu0 0
        %463 = vmatpush1.bf16.msra.mxu0 %v442
        %464 = vmatprep.subr.bf16.mxu0 0
        %465 = vmatpush1.bf16.msra.mxu0 %v443
        %466 = vmatprep.subr.bf16.mxu0 0
        %467 = vmatpush1.bf16.msra.mxu0 %v444
        %468 = vmatprep.subr.bf16.mxu0 0
        %469 = vmatpush1.bf16.msra.mxu0 %v445
        %470 = vmatprep.subr.bf16.mxu0 0
        %471 = vmatpush1.bf16.msra.mxu0 0
        %472 = vmatprep.subr.bf16.mxu0 0
        %473 = vmatpush1.bf16.msra.mxu0 0
        %474 = vmatprep.subr.bf16.mxu0 0
        %475 = vmatpush1.bf16.msra.mxu0 0
        %476 = vmatprep.subr.bf16.mxu0 0
        %477 = vmatpush1.bf16.msra.mxu0 0
        %478 = vmatprep.subr.bf16.mxu0 0
        %479 = vmatpush1.bf16.msra.mxu0 0
        %480 = vmatprep.subr.bf16.mxu0 0
        %481 = vmatpush1.bf16.msra.mxu0 0
        %482 = vmatprep.subr.bf16.mxu0 0
        %483 = vmatpush1.bf16.msra.mxu0 0
        %484 = vmatprep.subr.bf16.mxu0 0
        %485 = vmatpush1.bf16.msra.mxu0 0
        %486 = vmatprep.mubr.bf16.mxu0 0
        %487 = vmatmul.mubr.bf16.gmra.mrb[0].mxu0 %v368
        %v488 = vpop.f32.mrb[0].mxu0
        %v489 = vadd.f32 0.0, %v488
        %v490 = vpop.f32.mrb[0].mxu0
        %v491 = vpop.f32.mrb[0].mxu0
        %v492 = vadd.f32 0.0, %v491
        %v493 = vpop.f32.mrb[0].mxu0
        %494 = vmatprep.mubr.bf16.mxu0 0
        %495 = vmatmul.mubr.bf16.gmra.mrb[0].mxu0 %v376
        %v496 = vpop.f32.mrb[0].mxu0
        %v497 = vadd.f32 0.0, %v496
        %v498 = vpop.f32.mrb[0].mxu0
        %v499 = vpop.f32.mrb[0].mxu0
        %v500 = vadd.f32 0.0, %v499
        %v501 = vpop.f32.mrb[0].mxu0
        %502 = vmatprep.mubr.bf16.mxu0 0
        %503 = vmatmul.mubr.bf16.gmra.mrb[0].mxu0 %v384
        %v504 = vpop.f32.mrb[0].mxu0
        %v505 = vadd.f32 0.0, %v504
        %v506 = vpop.f32.mrb[0].mxu0
        %v507 = vpop.f32.mrb[0].mxu0
        %v508 = vadd.f32 0.0, %v507
        %v509 = vpop.f32.mrb[0].mxu0
        %510 = vmatprep.mubr.bf16.mxu0 0
        %511 = vmatmul.mubr.bf16.gmra.mrb[0].mxu0 %v392
        %v512 = vpop.f32.mrb[0].mxu0
        %v513 = vadd.f32 0.0, %v512
        %v514 = vpop.f32.mrb[0].mxu0
        %v515 = vpop.f32.mrb[0].mxu0
        %v516 = vadd.f32 0.0, %v515
        %v517 = vpop.f32.mrb[0].mxu0
        %518 = vmatprep.mubr.bf16.mxu0 0
        %519 = vmatmul.mubr.bf16.gmra.mrb[0].mxu0 %v400
        %v520 = vpop.f32.mrb[0].mxu0
        %v521 = vadd.f32 0.0, %v520
        %v522 = vpop.f32.mrb[0].mxu0
        %v523 = vpop.f32.mrb[0].mxu0
        %v524 = vadd.f32 0.0, %v523
        %v525 = vpop.f32.mrb[0].mxu0
        %526 = vdwg.mxu0
        %v548 = vunpack.c.l.b16 %v294
        %v549 = vunpack.c.l.b16 %v295
        %v550 = vunpack.c.l.b16 %v296
        %v551 = vunpack.c.l.b16 %v297
        %v552 = vunpack.c.l.b16 %v298
        %v553 = vunpack.c.l.b16 %v299
        %v554 = vunpack.c.l.b16 %v300
        %v555 = vunpack.c.l.b16 %v301
        %v556 = vunpack.c.l.b16 %v302
        %v557 = vunpack.c.l.b16 %v303
        %v558 = vunpack.c.l.b16 %v304
        %v559 = vunpack.c.l.b16 %v305
        %v560 = vunpack.c.l.b16 %v306
        %v561 = vunpack.c.l.b16 %v307
        %v562 = vunpack.c.l.b16 %v308
        %v563 = vunpack.c.l.b16 %v309
        %v564 = vpack.c.b16 %v549, %v548
        %v565 = vpack.c.b16 %v551, %v550
        %v566 = vpack.c.b16 %v553, %v552
        %v567 = vpack.c.b16 %v555, %v554
        %v568 = vpack.c.b16 %v557, %v556
        %v569 = vpack.c.b16 %v559, %v558
        %v570 = vpack.c.b16 %v561, %v560
        %v571 = vpack.c.b16 %v563, %v562
        %580 = vmatprep.subr.bf16.mxu0 0
        %581 = vmatpush1.bf16.msra.mxu0 %v564
        %582 = vmatprep.subr.bf16.mxu0 0
        %583 = vmatpush1.bf16.msra.mxu0 %v565
        %584 = vmatprep.subr.bf16.mxu0 0
        %585 = vmatpush1.bf16.msra.mxu0 %v566
        %586 = vmatprep.subr.bf16.mxu0 0
        %587 = vmatpush1.bf16.msra.mxu0 %v567
        %588 = vmatprep.subr.bf16.mxu0 0
        %589 = vmatpush1.bf16.msra.mxu0 %v568
        %590 = vmatprep.subr.bf16.mxu0 0
        %591 = vmatpush1.bf16.msra.mxu0 %v569
        %592 = vmatprep.subr.bf16.mxu0 0
        %593 = vmatpush1.bf16.msra.mxu0 %v570
        %594 = vmatprep.subr.bf16.mxu0 0
        %595 = vmatpush1.bf16.msra.mxu0 %v571
        %596 = vmatprep.subr.bf16.mxu0 0
        %597 = vmatpush1.bf16.msra.mxu0 0
        %598 = vmatprep.subr.bf16.mxu0 0
        %599 = vmatpush1.bf16.msra.mxu0 0
        %600 = vmatprep.subr.bf16.mxu0 0
        %601 = vmatpush1.bf16.msra.mxu0 0
        %602 = vmatprep.subr.bf16.mxu0 0
        %603 = vmatpush1.bf16.msra.mxu0 0
        %604 = vmatprep.subr.bf16.mxu0 0
        %605 = vmatpush1.bf16.msra.mxu0 0
        %606 = vmatprep.subr.bf16.mxu0 0
        %607 = vmatpush1.bf16.msra.mxu0 0
        %608 = vmatprep.subr.bf16.mxu0 0
        %609 = vmatpush1.bf16.msra.mxu0 0
        %610 = vmatprep.subr.bf16.mxu0 0
        %611 = vmatpush1.bf16.msra.mxu0 0
        %612 = vmatprep.mubr.bf16.mxu0 0
        %613 = vmatmul.mubr.bf16.gmra.mrb[0].mxu0 %v350
        %v614 = vpop.f32.mrb[0].mxu0
        %v615 = vadd.f32 %v489, %v614
        %v616 = vpop.f32.mrb[0].mxu0
        %v617 = vpop.f32.mrb[0].mxu0
        %v618 = vadd.f32 %v492, %v617
        %v619 = vpop.f32.mrb[0].mxu0
        %620 = vmatprep.mubr.bf16.mxu0 0
        %621 = vmatmul.mubr.bf16.gmra.mrb[0].mxu0 %v351
        %v622 = vpop.f32.mrb[0].mxu0
        %v623 = vadd.f32 %v497, %v622
        %v624 = vpop.f32.mrb[0].mxu0
        %v625 = vpop.f32.mrb[0].mxu0
        %v626 = vadd.f32 %v500, %v625
        %v627 = vpop.f32.mrb[0].mxu0
        %628 = vmatprep.mubr.bf16.mxu0 0
        %629 = vmatmul.mubr.bf16.gmra.mrb[0].mxu0 %v352
        %v630 = vpop.f32.mrb[0].mxu0
        %v631 = vadd.f32 %v505, %v630
        %v632 = vpop.f32.mrb[0].mxu0
        %v633 = vpop.f32.mrb[0].mxu0
        %v634 = vadd.f32 %v508, %v633
        %v635 = vpop.f32.mrb[0].mxu0
        %636 = vmatprep.mubr.bf16.mxu0 0
        %637 = vmatmul.mubr.bf16.gmra.mrb[0].mxu0 %v353
        %v638 = vpop.f32.mrb[0].mxu0
        %v639 = vadd.f32 %v513, %v638
        %v640 = vpop.f32.mrb[0].mxu0
        %v641 = vpop.f32.mrb[0].mxu0
        %v642 = vadd.f32 %v516, %v641
        %v643 = vpop.f32.mrb[0].mxu0
        %644 = vmatprep.mubr.bf16.mxu0 0
        %645 = vmatmul.mubr.bf16.gmra.mrb[0].mxu0 %v354
        %v646 = vpop.f32.mrb[0].mxu0
        %v647 = vadd.f32 %v521, %v646
        %v648 = vpop.f32.mrb[0].mxu0
        %v649 = vpop.f32.mrb[0].mxu0
        %v650 = vadd.f32 %v524, %v649
        %v651 = vpop.f32.mrb[0].mxu0
        %652 = vdwg.mxu0
        %v653 = vld [vmem:[%s236] sm:$0xe]
        %s654 = scalar_lea.vmem [#allocation5], 128
        %v655 = vld [vmem:[%s654] sm:$0xf]
        %v656 = vld [vmem:[%s654 + $0x4] sm:$0xf]
        %v657 = vld [vmem:[%s654 + $0x8] sm:$0xf]
        %v658 = vld [vmem:[%s654 + $0xc] sm:$0xf]
        %v659 = vld [vmem:[%s654 + $0x10] sm:$0xf]
        %v660 = vld [vmem:[%s654 + $0x14] sm:$0xf]
        %v661 = vld [vmem:[%s654 + $0x18] sm:$0xf]
        %v662 = vld [vmem:[%s654 + $0x1c] sm:$0xf]
        %v663 = vld [vmem:[%s654 + $0x20] sm:$0xf]
        %v664 = vld [vmem:[%s654 + $0x24] sm:$0xf]
        %v665 = vld [vmem:[%s654 + $0x28] sm:$0xf]
        %v666 = vld [vmem:[%s654 + $0x2c] sm:$0xf]
        %v667 = vld [vmem:[%s654 + $0x30] sm:$0xf]
        %v668 = vld [vmem:[%s654 + $0x34] sm:$0xf]
        %v669 = vld [vmem:[%s654 + $0x38] sm:$0xf]
        %v670 = vld [vmem:[%s654 + $0x3c] sm:$0xf]
        %v672 = vunpack.c.l.b16 %v653
        %v673 = vpack.c.b16 %v340, %v672
        %vm674 = vcmask 1046528
        %v675 = vrot.slane %v673, 1
        %v676 = vrot.slane %v351, 1
        %v677 = vsel %vm674, %v675, %v676
        %v678 = vrot.slane %v352, 1
        %v679 = vsel %vm674, %v676, %v678
        %v680 = vrot.slane %v353, 1
        %v681 = vsel %vm674, %v678, %v680
        %v682 = vrot.slane %v354, 1
        %v683 = vsel %vm674, %v680, %v682
        %v684 = vrot.slane %v355, 1
        %v685 = vsel %vm674, %v682, %v684
        %v707 = vunpack.c.l.b16 %v655
        %v708 = vunpack.c.l.b16 %v656
        %v709 = vunpack.c.l.b16 %v657
        %v710 = vunpack.c.l.b16 %v658
        %v711 = vunpack.c.l.b16 %v659
        %v712 = vunpack.c.l.b16 %v660
        %v713 = vunpack.c.l.b16 %v661
        %v714 = vunpack.c.l.b16 %v662
        %v715 = vunpack.c.l.b16 %v663
        %v716 = vunpack.c.l.b16 %v664
        %v717 = vunpack.c.l.b16 %v665
        %v718 = vunpack.c.l.b16 %v666
        %v719 = vunpack.c.l.b16 %v667
        %v720 = vunpack.c.l.b16 %v668
        %v721 = vunpack.c.l.b16 %v669
        %v722 = vunpack.c.l.b16 %v670
        %v723 = vpack.c.b16 %v708, %v707
        %v724 = vpack.c.b16 %v710, %v709
        %v725 = vpack.c.b16 %v712, %v711
        %v726 = vpack.c.b16 %v714, %v713
        %v727 = vpack.c.b16 %v716, %v715
        %v728 = vpack.c.b16 %v718, %v717
        %v729 = vpack.c.b16 %v720, %v719
        %v730 = vpack.c.b16 %v722, %v721
        %739 = vmatprep.subr.bf16.mxu0 0
        %740 = vmatpush1.bf16.msra.mxu0 %v723
        %741 = vmatprep.subr.bf16.mxu0 0
        %742 = vmatpush1.bf16.msra.mxu0 %v724
        %743 = vmatprep.subr.bf16.mxu0 0
        %744 = vmatpush1.bf16.msra.mxu0 %v725
        %745 = vmatprep.subr.bf16.mxu0 0
        %746 = vmatpush1.bf16.msra.mxu0 %v726
        %747 = vmatprep.subr.bf16.mxu0 0
        %748 = vmatpush1.bf16.msra.mxu0 %v727
        %749 = vmatprep.subr.bf16.mxu0 0
        %750 = vmatpush1.bf16.msra.mxu0 %v728
        %751 = vmatprep.subr.bf16.mxu0 0
        %752 = vmatpush1.bf16.msra.mxu0 %v729
        %753 = vmatprep.subr.bf16.mxu0 0
        %754 = vmatpush1.bf16.msra.mxu0 %v730
        %755 = vmatprep.subr.bf16.mxu0 0
        %756 = vmatpush1.bf16.msra.mxu0 0
        %757 = vmatprep.subr.bf16.mxu0 0
        %758 = vmatpush1.bf16.msra.mxu0 0
        %759 = vmatprep.subr.bf16.mxu0 0
        %760 = vmatpush1.bf16.msra.mxu0 0
        %761 = vmatprep.subr.bf16.mxu0 0
        %762 = vmatpush1.bf16.msra.mxu0 0
        %763 = vmatprep.subr.bf16.mxu0 0
        %764 = vmatpush1.bf16.msra.mxu0 0
        %765 = vmatprep.subr.bf16.mxu0 0
        %766 = vmatpush1.bf16.msra.mxu0 0
        %767 = vmatprep.subr.bf16.mxu0 0
        %768 = vmatpush1.bf16.msra.mxu0 0
        %769 = vmatprep.subr.bf16.mxu0 0
        %770 = vmatpush1.bf16.msra.mxu0 0
        %771 = vmatprep.mubr.bf16.mxu0 0
        %772 = vmatmul.mubr.bf16.gmra.mrb[0].mxu0 %v677
        %v773 = vpop.f32.mrb[0].mxu0
        %v774 = vadd.f32 0.0, %v773
        %v775 = vpop.f32.mrb[0].mxu0
        %v776 = vpop.f32.mrb[0].mxu0
        %v777 = vadd.f32 0.0, %v776
        %v778 = vpop.f32.mrb[0].mxu0
        %779 = vmatprep.mubr.bf16.mxu0 0
        %780 = vmatmul.mubr.bf16.gmra.mrb[0].mxu0 %v679
        %v781 = vpop.f32.mrb[0].mxu0
        %v782 = vadd.f32 0.0, %v781
        %v783 = vpop.f32.mrb[0].mxu0
        %v784 = vpop.f32.mrb[0].mxu0
        %v785 = vadd.f32 0.0, %v784
        %v786 = vpop.f32.mrb[0].mxu0
        %787 = vmatprep.mubr.bf16.mxu0 0
        %788 = vmatmul.mubr.bf16.gmra.mrb[0].mxu0 %v681
        %v789 = vpop.f32.mrb[0].mxu0
        %v790 = vadd.f32 0.0, %v789
        %v791 = vpop.f32.mrb[0].mxu0
        %v792 = vpop.f32.mrb[0].mxu0
        %v793 = vadd.f32 0.0, %v792
        %v794 = vpop.f32.mrb[0].mxu0
        %795 = vmatprep.mubr.bf16.mxu0 0
        %796 = vmatmul.mubr.bf16.gmra.mrb[0].mxu0 %v683
        %v797 = vpop.f32.mrb[0].mxu0
        %v798 = vadd.f32 0.0, %v797
        %v799 = vpop.f32.mrb[0].mxu0
        %v800 = vpop.f32.mrb[0].mxu0
        %v801 = vadd.f32 0.0, %v800
        %v802 = vpop.f32.mrb[0].mxu0
        %803 = vmatprep.mubr.bf16.mxu0 0
        %804 = vmatmul.mubr.bf16.gmra.mrb[0].mxu0 %v685
        %v805 = vpop.f32.mrb[0].mxu0
        %v806 = vadd.f32 0.0, %v805
        %v807 = vpop.f32.mrb[0].mxu0
        %v808 = vpop.f32.mrb[0].mxu0
        %v809 = vadd.f32 0.0, %v808
        %v810 = vpop.f32.mrb[0].mxu0
        %811 = vdwg.mxu0
        %v812 = vadd.f32 %v615, %v774
        %v813 = vadd.f32 %v618, %v777
        %v814 = vadd.f32 %v623, %v782
        %v815 = vadd.f32 %v626, %v785
        %v816 = vadd.f32 %v631, %v790
        %v817 = vadd.f32 %v634, %v793
        %v818 = vadd.f32 %v639, %v798
        %v819 = vadd.f32 %v642, %v801
        %v820 = vadd.f32 %v647, %v806
        %v821 = vadd.f32 %v650, %v809
        %v822 = vld [vmem:[%s236 + $0x4] sm:$0xe]
        %v823 = vld [vmem:[%s236 + $0x8] sm:$0xf]
        %v824 = vld [vmem:[%s236 + $0xc] sm:$0xf]
        %v825 = vld [vmem:[%s236 + $0x10] sm:$0xf]
        %v826 = vld [vmem:[%s236 + $0x14] sm:$0xf]
        %v827 = vld [vmem:[%s236 + $0x18] sm:$0xf]
        %v828 = vld [vmem:[%s236 + $0x1c] sm:$0xf]
        %v829 = vld [vmem:[%s236 + $0x20] sm:$0xf]
        %v830 = vld [vmem:[%s236 + $0x24] sm:$0xf]
        %v831 = vld [vmem:[%s236 + $0x28] sm:$0xf]
        %v832 = vld [vmem:[%s236 + $0x2c] sm:$0x1]
        %s833 = scalar_lea.vmem [#allocation5], 192
        %v834 = vld [vmem:[%s833] sm:$0xf]
        %v835 = vld [vmem:[%s833 + $0x4] sm:$0xf]
        %v836 = vld [vmem:[%s833 + $0x8] sm:$0xf]
        %v837 = vld [vmem:[%s833 + $0xc] sm:$0xf]
        %v838 = vld [vmem:[%s833 + $0x10] sm:$0xf]
        %v839 = vld [vmem:[%s833 + $0x14] sm:$0xf]
        %v840 = vld [vmem:[%s833 + $0x18] sm:$0xf]
        %v841 = vld [vmem:[%s833 + $0x1c] sm:$0xf]
        %v842 = vld [vmem:[%s833 + $0x20] sm:$0xf]
        %v843 = vld [vmem:[%s833 + $0x24] sm:$0xf]
        %v844 = vld [vmem:[%s833 + $0x28] sm:$0xf]
        %v845 = vld [vmem:[%s833 + $0x2c] sm:$0xf]
        %v846 = vld [vmem:[%s833 + $0x30] sm:$0xf]
        %v847 = vld [vmem:[%s833 + $0x34] sm:$0xf]
        %v848 = vld [vmem:[%s833 + $0x38] sm:$0xf]
        %v849 = vld [vmem:[%s833 + $0x3c] sm:$0xf]
        %v861 = vunpack.c.l.b16 %v822
        %v862 = vunpack.c.l.b16 %v823
        %v863 = vunpack.c.l.b16 %v824
        %v864 = vunpack.c.l.b16 %v825
        %v865 = vunpack.c.l.b16 %v826
        %v866 = vunpack.c.l.b16 %v827
        %v867 = vunpack.c.l.b16 %v828
        %v868 = vunpack.c.l.b16 %v829
        %v869 = vunpack.c.l.b16 %v830
        %v870 = vunpack.c.l.b16 %v831
        %v871 = vunpack.c.l.b16 %v832
        %v872 = vpack.c.b16 %v862, %v861
        %v873 = vpack.c.b16 %v864, %v863
        %v874 = vpack.c.b16 %v866, %v865
        %v875 = vpack.c.b16 %v868, %v867
        %v876 = vpack.c.b16 %v870, %v869
        %v877 = vpack.c.b16 %v871, %v871
        %v878 = vrot.slane %v872, 1
        %v879 = vrot.slane %v873, 1
        %v880 = vsel %vm674, %v878, %v879
        %v881 = vrot.slane %v874, 1
        %v882 = vsel %vm674, %v879, %v881
        %v883 = vrot.slane %v875, 1
        %v884 = vsel %vm674, %v881, %v883
        %v885 = vrot.slane %v876, 1
        %v886 = vsel %vm674, %v883, %v885
        %v887 = vrot.slane %v877, 1
        %v888 = vsel %vm674, %v885, %v887
        %v910 = vunpack.c.l.b16 %v834
        %v911 = vunpack.c.l.b16 %v835
        %v912 = vunpack.c.l.b16 %v836
        %v913 = vunpack.c.l.b16 %v837
        %v914 = vunpack.c.l.b16 %v838
        %v915 = vunpack.c.l.b16 %v839
        %v916 = vunpack.c.l.b16 %v840
        %v917 = vunpack.c.l.b16 %v841
        %v918 = vunpack.c.l.b16 %v842
        %v919 = vunpack.c.l.b16 %v843
        %v920 = vunpack.c.l.b16 %v844
        %v921 = vunpack.c.l.b16 %v845
        %v922 = vunpack.c.l.b16 %v846
        %v923 = vunpack.c.l.b16 %v847
        %v924 = vunpack.c.l.b16 %v848
        %v925 = vunpack.c.l.b16 %v849
        %v926 = vpack.c.b16 %v911, %v910
        %v927 = vpack.c.b16 %v913, %v912
        %v928 = vpack.c.b16 %v915, %v914
        %v929 = vpack.c.b16 %v917, %v916
        %v930 = vpack.c.b16 %v919, %v918
        %v931 = vpack.c.b16 %v921, %v920
        %v932 = vpack.c.b16 %v923, %v922
        %v933 = vpack.c.b16 %v925, %v924
        %942 = vmatprep.subr.bf16.mxu0 0
        %943 = vmatpush1.bf16.msra.mxu0 %v926
        %944 = vmatprep.subr.bf16.mxu0 0
        %945 = vmatpush1.bf16.msra.mxu0 %v927
        %946 = vmatprep.subr.bf16.mxu0 0
        %947 = vmatpush1.bf16.msra.mxu0 %v928
        %948 = vmatprep.subr.bf16.mxu0 0
        %949 = vmatpush1.bf16.msra.mxu0 %v929
        %950 = vmatprep.subr.bf16.mxu0 0
        %951 = vmatpush1.bf16.msra.mxu0 %v930
        %952 = vmatprep.subr.bf16.mxu0 0
        %953 = vmatpush1.bf16.msra.mxu0 %v931
        %954 = vmatprep.subr.bf16.mxu0 0
        %955 = vmatpush1.bf16.msra.mxu0 %v932
        %956 = vmatprep.subr.bf16.mxu0 0
        %957 = vmatpush1.bf16.msra.mxu0 %v933
        %958 = vmatprep.subr.bf16.mxu0 0
        %959 = vmatpush1.bf16.msra.mxu0 0
        %960 = vmatprep.subr.bf16.mxu0 0
        %961 = vmatpush1.bf16.msra.mxu0 0
        %962 = vmatprep.subr.bf16.mxu0 0
        %963 = vmatpush1.bf16.msra.mxu0 0
        %964 = vmatprep.subr.bf16.mxu0 0
        %965 = vmatpush1.bf16.msra.mxu0 0
        %966 = vmatprep.subr.bf16.mxu0 0
        %967 = vmatpush1.bf16.msra.mxu0 0
        %968 = vmatprep.subr.bf16.mxu0 0
        %969 = vmatpush1.bf16.msra.mxu0 0
        %970 = vmatprep.subr.bf16.mxu0 0
        %971 = vmatpush1.bf16.msra.mxu0 0
        %972 = vmatprep.subr.bf16.mxu0 0
        %973 = vmatpush1.bf16.msra.mxu0 0
        %974 = vmatprep.mubr.bf16.mxu0 0
        %975 = vmatmul.mubr.bf16.gmra.mrb[0].mxu0 %v880
        %v976 = vpop.f32.mrb[0].mxu0
        %v977 = vadd.f32 0.0, %v976
        %v978 = vpop.f32.mrb[0].mxu0
        %v979 = vpop.f32.mrb[0].mxu0
        %v980 = vadd.f32 0.0, %v979
        %v981 = vpop.f32.mrb[0].mxu0
        %982 = vmatprep.mubr.bf16.mxu0 0
        %983 = vmatmul.mubr.bf16.gmra.mrb[0].mxu0 %v882
        %v984 = vpop.f32.mrb[0].mxu0
        %v985 = vadd.f32 0.0, %v984
        %v986 = vpop.f32.mrb[0].mxu0
        %v987 = vpop.f32.mrb[0].mxu0
        %v988 = vadd.f32 0.0, %v987
        %v989 = vpop.f32.mrb[0].mxu0
        %990 = vmatprep.mubr.bf16.mxu0 0
        %991 = vmatmul.mubr.bf16.gmra.mrb[0].mxu0 %v884
        %v992 = vpop.f32.mrb[0].mxu0
        %v993 = vadd.f32 0.0, %v992
        %v994 = vpop.f32.mrb[0].mxu0
        %v995 = vpop.f32.mrb[0].mxu0
        %v996 = vadd.f32 0.0, %v995
        %v997 = vpop.f32.mrb[0].mxu0
        %998 = vmatprep.mubr.bf16.mxu0 0
        %999 = vmatmul.mubr.bf16.gmra.mrb[0].mxu0 %v886
        %v1000 = vpop.f32.mrb[0].mxu0
        %v1001 = vadd.f32 0.0, %v1000
        %v1002 = vpop.f32.mrb[0].mxu0
        %v1003 = vpop.f32.mrb[0].mxu0
        %v1004 = vadd.f32 0.0, %v1003
        %v1005 = vpop.f32.mrb[0].mxu0
        %1006 = vmatprep.mubr.bf16.mxu0 0
        %1007 = vmatmul.mubr.bf16.gmra.mrb[0].mxu0 %v888
        %v1008 = vpop.f32.mrb[0].mxu0
        %v1009 = vadd.f32 0.0, %v1008
        %v1010 = vpop.f32.mrb[0].mxu0
        %v1011 = vpop.f32.mrb[0].mxu0
        %v1012 = vadd.f32 0.0, %v1011
        %v1013 = vpop.f32.mrb[0].mxu0
        %1014 = vdwg.mxu0
        %v1015 = vadd.f32 %v812, %v977
        %v1016 = vadd.f32 %v813, %v980
        %v1017 = vadd.f32 %v814, %v985
        %v1018 = vadd.f32 %v815, %v988
        %v1019 = vadd.f32 %v816, %v993
        %v1020 = vadd.f32 %v817, %v996
        %v1021 = vadd.f32 %v818, %v1001
        %v1022 = vadd.f32 %v819, %v1004
        %v1023 = vadd.f32 %v820, %v1009
        %v1024 = vadd.f32 %v821, %v1012
        %v1025 = vld [vmem:[%s236 + $0x2c] sm:$0x3]
        %s1026 = scalar_lea.vmem [#allocation5], 256
        %v1027 = vld [vmem:[%s1026] sm:$0xf]
        %v1028 = vld [vmem:[%s1026 + $0x4] sm:$0xf]
        %v1029 = vld [vmem:[%s1026 + $0x8] sm:$0xf]
        %v1030 = vld [vmem:[%s1026 + $0xc] sm:$0xf]
        %v1031 = vld [vmem:[%s1026 + $0x10] sm:$0xf]
        %v1032 = vld [vmem:[%s1026 + $0x14] sm:$0xf]
        %v1033 = vld [vmem:[%s1026 + $0x18] sm:$0xf]
        %v1034 = vld [vmem:[%s1026 + $0x1c] sm:$0xf]
        %v1035 = vld [vmem:[%s1026 + $0x20] sm:$0xf]
        %v1036 = vld [vmem:[%s1026 + $0x24] sm:$0xf]
        %v1037 = vld [vmem:[%s1026 + $0x28] sm:$0xf]
        %v1038 = vld [vmem:[%s1026 + $0x2c] sm:$0xf]
        %v1039 = vld [vmem:[%s1026 + $0x30] sm:$0xf]
        %v1040 = vld [vmem:[%s1026 + $0x34] sm:$0xf]
        %v1041 = vld [vmem:[%s1026 + $0x38] sm:$0xf]
        %v1042 = vld [vmem:[%s1026 + $0x3c] sm:$0xf]
        %v1044 = vunpack.c.l.b16 %v1025
        %v1045 = vpack.c.b16 %v1044, %v1044
        %vm1046 = vsmask.f32 6400
        %v1048 = vshrl.u32 %v872, 16
        %v1050 = vrot.slane %v1048, 1
        %v1051 = vshll.u32 %v872, 16
        %v1053 = vrot.slane %v1051, 2
        %v1054 = vor.u32 %v1050, %v1053
        %v1056 = vshrl.u32 %v873, 16
        %v1058 = vrot.slane %v1056, 1
        %v1059 = vshll.u32 %v873, 16
        %v1061 = vrot.slane %v1059, 2
        %v1062 = vor.u32 %v1058, %v1061
        %v1063 = vsel %vm1046, %v1054, %v1062
        %v1065 = vshrl.u32 %v874, 16
        %v1067 = vrot.slane %v1065, 1
        %v1068 = vshll.u32 %v874, 16
        %v1070 = vrot.slane %v1068, 2
        %v1071 = vor.u32 %v1067, %v1070
        %v1072 = vsel %vm1046, %v1062, %v1071
        %v1074 = vshrl.u32 %v875, 16
        %v1076 = vrot.slane %v1074, 1
        %v1077 = vshll.u32 %v875, 16
        %v1079 = vrot.slane %v1077, 2
        %v1080 = vor.u32 %v1076, %v1079
        %v1081 = vsel %vm1046, %v1071, %v1080
        %v1083 = vshrl.u32 %v876, 16
        %v1085 = vrot.slane %v1083, 1
        %v1086 = vshll.u32 %v876, 16
        %v1088 = vrot.slane %v1086, 2
        %v1089 = vor.u32 %v1085, %v1088
        %v1090 = vsel %vm1046, %v1080, %v1089
        %v1092 = vshrl.u32 %v1045, 16
        %v1094 = vrot.slane %v1092, 1
        %v1095 = vshll.u32 %v1045, 16
        %v1097 = vrot.slane %v1095, 2
        %v1098 = vor.u32 %v1094, %v1097
        %v1099 = vsel %vm1046, %v1089, %v1098
        %v1121 = vunpack.c.l.b16 %v1027
        %v1122 = vunpack.c.l.b16 %v1028
        %v1123 = vunpack.c.l.b16 %v1029
        %v1124 = vunpack.c.l.b16 %v1030
        %v1125 = vunpack.c.l.b16 %v1031
        %v1126 = vunpack.c.l.b16 %v1032
        %v1127 = vunpack.c.l.b16 %v1033
        %v1128 = vunpack.c.l.b16 %v1034
        %v1129 = vunpack.c.l.b16 %v1035
        %v1130 = vunpack.c.l.b16 %v1036
        %v1131 = vunpack.c.l.b16 %v1037
        %v1132 = vunpack.c.l.b16 %v1038
        %v1133 = vunpack.c.l.b16 %v1039
        %v1134 = vunpack.c.l.b16 %v1040
        %v1135 = vunpack.c.l.b16 %v1041
        %v1136 = vunpack.c.l.b16 %v1042
        %v1137 = vpack.c.b16 %v1122, %v1121
        %v1138 = vpack.c.b16 %v1124, %v1123
        %v1139 = vpack.c.b16 %v1126, %v1125
        %v1140 = vpack.c.b16 %v1128, %v1127
        %v1141 = vpack.c.b16 %v1130, %v1129
        %v1142 = vpack.c.b16 %v1132, %v1131
        %v1143 = vpack.c.b16 %v1134, %v1133
        %v1144 = vpack.c.b16 %v1136, %v1135
        %1153 = vmatprep.subr.bf16.mxu0 0
        %1154 = vmatpush1.bf16.msra.mxu0 %v1137
        %1155 = vmatprep.subr.bf16.mxu0 0
        %1156 = vmatpush1.bf16.msra.mxu0 %v1138
        %1157 = vmatprep.subr.bf16.mxu0 0
        %1158 = vmatpush1.bf16.msra.mxu0 %v1139
        %1159 = vmatprep.subr.bf16.mxu0 0
        %1160 = vmatpush1.bf16.msra.mxu0 %v1140
        %1161 = vmatprep.subr.bf16.mxu0 0
        %1162 = vmatpush1.bf16.msra.mxu0 %v1141
        %1163 = vmatprep.subr.bf16.mxu0 0
        %1164 = vmatpush1.bf16.msra.mxu0 %v1142
        %1165 = vmatprep.subr.bf16.mxu0 0
        %1166 = vmatpush1.bf16.msra.mxu0 %v1143
        %1167 = vmatprep.subr.bf16.mxu0 0
        %1168 = vmatpush1.bf16.msra.mxu0 %v1144
        %1169 = vmatprep.subr.bf16.mxu0 0
        %1170 = vmatpush1.bf16.msra.mxu0 0
        %1171 = vmatprep.subr.bf16.mxu0 0
        %1172 = vmatpush1.bf16.msra.mxu0 0
        %1173 = vmatprep.subr.bf16.mxu0 0
        %1174 = vmatpush1.bf16.msra.mxu0 0
        %1175 = vmatprep.subr.bf16.mxu0 0
        %1176 = vmatpush1.bf16.msra.mxu0 0
        %1177 = vmatprep.subr.bf16.mxu0 0
        %1178 = vmatpush1.bf16.msra.mxu0 0
        %1179 = vmatprep.subr.bf16.mxu0 0
        %1180 = vmatpush1.bf16.msra.mxu0 0
        %1181 = vmatprep.subr.bf16.mxu0 0
        %1182 = vmatpush1.bf16.msra.mxu0 0
        %1183 = vmatprep.subr.bf16.mxu0 0
        %1184 = vmatpush1.bf16.msra.mxu0 0
        %1185 = vmatprep.mubr.bf16.mxu0 0
        %1186 = vmatmul.mubr.bf16.gmra.mrb[0].mxu0 %v1063
        %v1187 = vpop.f32.mrb[0].mxu0
        %v1188 = vadd.f32 0.0, %v1187
        %v1189 = vpop.f32.mrb[0].mxu0
        %v1190 = vpop.f32.mrb[0].mxu0
        %v1191 = vadd.f32 0.0, %v1190
        %v1192 = vpop.f32.mrb[0].mxu0
        %1193 = vmatprep.mubr.bf16.mxu0 0
        %1194 = vmatmul.mubr.bf16.gmra.mrb[0].mxu0 %v1072
        %v1195 = vpop.f32.mrb[0].mxu0
        %v1196 = vadd.f32 0.0, %v1195
        %v1197 = vpop.f32.mrb[0].mxu0
        %v1198 = vpop.f32.mrb[0].mxu0
        %v1199 = vadd.f32 0.0, %v1198
        %v1200 = vpop.f32.mrb[0].mxu0
        %1201 = vmatprep.mubr.bf16.mxu0 0
        %1202 = vmatmul.mubr.bf16.gmra.mrb[0].mxu0 %v1081
        %v1203 = vpop.f32.mrb[0].mxu0
        %v1204 = vadd.f32 0.0, %v1203
        %v1205 = vpop.f32.mrb[0].mxu0
        %v1206 = vpop.f32.mrb[0].mxu0
        %v1207 = vadd.f32 0.0, %v1206
        %v1208 = vpop.f32.mrb[0].mxu0
        %1209 = vmatprep.mubr.bf16.mxu0 0
        %1210 = vmatmul.mubr.bf16.gmra.mrb[0].mxu0 %v1090
        %v1211 = vpop.f32.mrb[0].mxu0
        %v1212 = vadd.f32 0.0, %v1211
        %v1213 = vpop.f32.mrb[0].mxu0
        %v1214 = vpop.f32.mrb[0].mxu0
        %v1215 = vadd.f32 0.0, %v1214
        %v1216 = vpop.f32.mrb[0].mxu0
        %1217 = vmatprep.mubr.bf16.mxu0 0
        %1218 = vmatmul.mubr.bf16.gmra.mrb[0].mxu0 %v1099
        %v1219 = vpop.f32.mrb[0].mxu0
        %v1220 = vadd.f32 0.0, %v1219
        %v1221 = vpop.f32.mrb[0].mxu0
        %v1222 = vpop.f32.mrb[0].mxu0
        %v1223 = vadd.f32 0.0, %v1222
        %v1224 = vpop.f32.mrb[0].mxu0
        %1225 = vdwg.mxu0
        %v1226 = vadd.f32 %v1015, %v1188
        %v1227 = vadd.f32 %v1016, %v1191
        %v1228 = vadd.f32 %v1017, %v1196
        %v1229 = vadd.f32 %v1018, %v1199
        %v1230 = vadd.f32 %v1019, %v1204
        %v1231 = vadd.f32 %v1020, %v1207
        %v1232 = vadd.f32 %v1021, %v1212
        %v1233 = vadd.f32 %v1022, %v1215
        %v1234 = vadd.f32 %v1023, %v1220
        %v1235 = vadd.f32 %v1024, %v1223
        %v1236 = vld [vmem:[%s236 + $0x4] sm:$0xc]
        %s1237 = scalar_lea.vmem [#allocation5], 320
        %v1238 = vld [vmem:[%s1237] sm:$0xf]
        %v1239 = vld [vmem:[%s1237 + $0x4] sm:$0xf]
        %v1240 = vld [vmem:[%s1237 + $0x8] sm:$0xf]
        %v1241 = vld [vmem:[%s1237 + $0xc] sm:$0xf]
        %v1242 = vld [vmem:[%s1237 + $0x10] sm:$0xf]
        %v1243 = vld [vmem:[%s1237 + $0x14] sm:$0xf]
        %v1244 = vld [vmem:[%s1237 + $0x18] sm:$0xf]
        %v1245 = vld [vmem:[%s1237 + $0x1c] sm:$0xf]
        %v1246 = vld [vmem:[%s1237 + $0x20] sm:$0xf]
        %v1247 = vld [vmem:[%s1237 + $0x24] sm:$0xf]
        %v1248 = vld [vmem:[%s1237 + $0x28] sm:$0xf]
        %v1249 = vld [vmem:[%s1237 + $0x2c] sm:$0xf]
        %v1250 = vld [vmem:[%s1237 + $0x30] sm:$0xf]
        %v1251 = vld [vmem:[%s1237 + $0x34] sm:$0xf]
        %v1252 = vld [vmem:[%s1237 + $0x38] sm:$0xf]
        %v1253 = vld [vmem:[%s1237 + $0x3c] sm:$0xf]
        %v1255 = vunpack.c.l.b16 %v1236
        %v1256 = vpack.c.b16 %v862, %v1255
        %vm1257 = vcmask 1045504
        %v1258 = vrot.slane %v1256, 2
        %v1259 = vrot.slane %v873, 2
        %v1260 = vsel %vm1257, %v1258, %v1259
        %v1261 = vrot.slane %v874, 2
        %v1262 = vsel %vm1257, %v1259, %v1261
        %v1263 = vrot.slane %v875, 2
        %v1264 = vsel %vm1257, %v1261, %v1263
        %v1265 = vrot.slane %v876, 2
        %v1266 = vsel %vm1257, %v1263, %v1265
        %v1267 = vrot.slane %v1045, 2
        %v1268 = vsel %vm1257, %v1265, %v1267
        %v1290 = vunpack.c.l.b16 %v1238
        %v1291 = vunpack.c.l.b16 %v1239
        %v1292 = vunpack.c.l.b16 %v1240
        %v1293 = vunpack.c.l.b16 %v1241
        %v1294 = vunpack.c.l.b16 %v1242
        %v1295 = vunpack.c.l.b16 %v1243
        %v1296 = vunpack.c.l.b16 %v1244
        %v1297 = vunpack.c.l.b16 %v1245
        %v1298 = vunpack.c.l.b16 %v1246
        %v1299 = vunpack.c.l.b16 %v1247
        %v1300 = vunpack.c.l.b16 %v1248
        %v1301 = vunpack.c.l.b16 %v1249
        %v1302 = vunpack.c.l.b16 %v1250
        %v1303 = vunpack.c.l.b16 %v1251
        %v1304 = vunpack.c.l.b16 %v1252
        %v1305 = vunpack.c.l.b16 %v1253
        %v1306 = vpack.c.b16 %v1291, %v1290
        %v1307 = vpack.c.b16 %v1293, %v1292
        %v1308 = vpack.c.b16 %v1295, %v1294
        %v1309 = vpack.c.b16 %v1297, %v1296
        %v1310 = vpack.c.b16 %v1299, %v1298
        %v1311 = vpack.c.b16 %v1301, %v1300
        %v1312 = vpack.c.b16 %v1303, %v1302
        %v1313 = vpack.c.b16 %v1305, %v1304
        %1322 = vmatprep.subr.bf16.mxu0 0
        %1323 = vmatpush1.bf16.msra.mxu0 %v1306
        %1324 = vmatprep.subr.bf16.mxu0 0
        %1325 = vmatpush1.bf16.msra.mxu0 %v1307
        %1326 = vmatprep.subr.bf16.mxu0 0
        %1327 = vmatpush1.bf16.msra.mxu0 %v1308
        %1328 = vmatprep.subr.bf16.mxu0 0
        %1329 = vmatpush1.bf16.msra.mxu0 %v1309
        %1330 = vmatprep.subr.bf16.mxu0 0
        %1331 = vmatpush1.bf16.msra.mxu0 %v1310
        %1332 = vmatprep.subr.bf16.mxu0 0
        %1333 = vmatpush1.bf16.msra.mxu0 %v1311
        %1334 = vmatprep.subr.bf16.mxu0 0
        %1335 = vmatpush1.bf16.msra.mxu0 %v1312
        %1336 = vmatprep.subr.bf16.mxu0 0
        %1337 = vmatpush1.bf16.msra.mxu0 %v1313
        %1338 = vmatprep.subr.bf16.mxu0 0
        %1339 = vmatpush1.bf16.msra.mxu0 0
        %1340 = vmatprep.subr.bf16.mxu0 0
        %1341 = vmatpush1.bf16.msra.mxu0 0
        %1342 = vmatprep.subr.bf16.mxu0 0
        %1343 = vmatpush1.bf16.msra.mxu0 0
        %1344 = vmatprep.subr.bf16.mxu0 0
        %1345 = vmatpush1.bf16.msra.mxu0 0
        %1346 = vmatprep.subr.bf16.mxu0 0
        %1347 = vmatpush1.bf16.msra.mxu0 0
        %1348 = vmatprep.subr.bf16.mxu0 0
        %1349 = vmatpush1.bf16.msra.mxu0 0
        %1350 = vmatprep.subr.bf16.mxu0 0
        %1351 = vmatpush1.bf16.msra.mxu0 0
        %1352 = vmatprep.subr.bf16.mxu0 0
        %1353 = vmatpush1.bf16.msra.mxu0 0
        %1354 = vmatprep.mubr.bf16.mxu0 0
        %1355 = vmatmul.mubr.bf16.gmra.mrb[0].mxu0 %v1260
        %v1356 = vpop.f32.mrb[0].mxu0
        %v1357 = vadd.f32 0.0, %v1356
        %v1358 = vpop.f32.mrb[0].mxu0
        %v1359 = vpop.f32.mrb[0].mxu0
        %v1360 = vadd.f32 0.0, %v1359
        %v1361 = vpop.f32.mrb[0].mxu0
        %1362 = vmatprep.mubr.bf16.mxu0 0
        %1363 = vmatmul.mubr.bf16.gmra.mrb[0].mxu0 %v1262
        %v1364 = vpop.f32.mrb[0].mxu0
        %v1365 = vadd.f32 0.0, %v1364
        %v1366 = vpop.f32.mrb[0].mxu0
        %v1367 = vpop.f32.mrb[0].mxu0
        %v1368 = vadd.f32 0.0, %v1367
        %v1369 = vpop.f32.mrb[0].mxu0
        %1370 = vmatprep.mubr.bf16.mxu0 0
        %1371 = vmatmul.mubr.bf16.gmra.mrb[0].mxu0 %v1264
        %v1372 = vpop.f32.mrb[0].mxu0
        %v1373 = vadd.f32 0.0, %v1372
        %v1374 = vpop.f32.mrb[0].mxu0
        %v1375 = vpop.f32.mrb[0].mxu0
        %v1376 = vadd.f32 0.0, %v1375
        %v1377 = vpop.f32.mrb[0].mxu0
        %1378 = vmatprep.mubr.bf16.mxu0 0
        %1379 = vmatmul.mubr.bf16.gmra.mrb[0].mxu0 %v1266
        %v1380 = vpop.f32.mrb[0].mxu0
        %v1381 = vadd.f32 0.0, %v1380
        %v1382 = vpop.f32.mrb[0].mxu0
        %v1383 = vpop.f32.mrb[0].mxu0
        %v1384 = vadd.f32 0.0, %v1383
        %v1385 = vpop.f32.mrb[0].mxu0
        %1386 = vmatprep.mubr.bf16.mxu0 0
        %1387 = vmatmul.mubr.bf16.gmra.mrb[0].mxu0 %v1268
        %v1388 = vpop.f32.mrb[0].mxu0
        %v1389 = vadd.f32 0.0, %v1388
        %v1390 = vpop.f32.mrb[0].mxu0
        %v1391 = vpop.f32.mrb[0].mxu0
        %v1392 = vadd.f32 0.0, %v1391
        %v1393 = vpop.f32.mrb[0].mxu0
        %1394 = vdwg.mxu0
        %v1395 = vadd.f32 %v1226, %v1357
        %v1396 = vadd.f32 %v1227, %v1360
        %v1397 = vadd.f32 %v1228, %v1365
        %v1398 = vadd.f32 %v1229, %v1368
        %v1399 = vadd.f32 %v1230, %v1373
        %v1400 = vadd.f32 %v1231, %v1376
        %v1401 = vadd.f32 %v1232, %v1381
        %v1402 = vadd.f32 %v1233, %v1384
        %v1403 = vadd.f32 %v1234, %v1389
        %v1404 = vadd.f32 %v1235, %v1392
        %v1405 = vld [vmem:[%s236 + $0x8] sm:$0xc]
        %v1406 = vld [vmem:[%s236 + $0xc] sm:$0xf]
        %v1407 = vld [vmem:[%s236 + $0x10] sm:$0xf]
        %v1408 = vld [vmem:[%s236 + $0x14] sm:$0xf]
        %v1409 = vld [vmem:[%s236 + $0x18] sm:$0xf]
        %v1410 = vld [vmem:[%s236 + $0x1c] sm:$0xf]
        %v1411 = vld [vmem:[%s236 + $0x20] sm:$0xf]
        %v1412 = vld [vmem:[%s236 + $0x24] sm:$0xf]
        %v1413 = vld [vmem:[%s236 + $0x28] sm:$0xf]
        %v1414 = vld [vmem:[%s236 + $0x2c] sm:$0xf]
        %v1415 = vld [vmem:[%s236 + $0x30] sm:$0x3]
        %s1416 = scalar_lea.vmem [#allocation5], 384
        %v1417 = vld [vmem:[%s1416] sm:$0xf]
        %v1418 = vld [vmem:[%s1416 + $0x4] sm:$0xf]
        %v1419 = vld [vmem:[%s1416 + $0x8] sm:$0xf]
        %v1420 = vld [vmem:[%s1416 + $0xc] sm:$0xf]
        %v1421 = vld [vmem:[%s1416 + $0x10] sm:$0xf]
        %v1422 = vld [vmem:[%s1416 + $0x14] sm:$0xf]
        %v1423 = vld [vmem:[%s1416 + $0x18] sm:$0xf]
        %v1424 = vld [vmem:[%s1416 + $0x1c] sm:$0xf]
        %v1425 = vld [vmem:[%s1416 + $0x20] sm:$0xf]
        %v1426 = vld [vmem:[%s1416 + $0x24] sm:$0xf]
        %v1427 = vld [vmem:[%s1416 + $0x28] sm:$0xf]
        %v1428 = vld [vmem:[%s1416 + $0x2c] sm:$0xf]
        %v1429 = vld [vmem:[%s1416 + $0x30] sm:$0xf]
        %v1430 = vld [vmem:[%s1416 + $0x34] sm:$0xf]
        %v1431 = vld [vmem:[%s1416 + $0x38] sm:$0xf]
        %v1432 = vld [vmem:[%s1416 + $0x3c] sm:$0xf]
        %v1444 = vunpack.c.l.b16 %v1405
        %v1445 = vunpack.c.l.b16 %v1406
        %v1446 = vunpack.c.l.b16 %v1407
        %v1447 = vunpack.c.l.b16 %v1408
        %v1448 = vunpack.c.l.b16 %v1409
        %v1449 = vunpack.c.l.b16 %v1410
        %v1450 = vunpack.c.l.b16 %v1411
        %v1451 = vunpack.c.l.b16 %v1412
        %v1452 = vunpack.c.l.b16 %v1413
        %v1453 = vunpack.c.l.b16 %v1414
        %v1454 = vunpack.c.l.b16 %v1415
        %v1455 = vpack.c.b16 %v1445, %v1444
        %v1456 = vpack.c.b16 %v1447, %v1446
        %v1457 = vpack.c.b16 %v1449, %v1448
        %v1458 = vpack.c.b16 %v1451, %v1450
        %v1459 = vpack.c.b16 %v1453, %v1452
        %v1460 = vpack.c.b16 %v1454, %v1454
        %v1461 = vrot.slane %v1455, 2
        %v1462 = vrot.slane %v1456, 2
        %v1463 = vsel %vm1257, %v1461, %v1462
        %v1464 = vrot.slane %v1457, 2
        %v1465 = vsel %vm1257, %v1462, %v1464
        %v1466 = vrot.slane %v1458, 2
        %v1467 = vsel %vm1257, %v1464, %v1466
        %v1468 = vrot.slane %v1459, 2
        %v1469 = vsel %vm1257, %v1466, %v1468
        %v1470 = vrot.slane %v1460, 2
        %v1471 = vsel %vm1257, %v1468, %v1470
        %v1493 = vunpack.c.l.b16 %v1417
        %v1494 = vunpack.c.l.b16 %v1418
        %v1495 = vunpack.c.l.b16 %v1419
        %v1496 = vunpack.c.l.b16 %v1420
        %v1497 = vunpack.c.l.b16 %v1421
        %v1498 = vunpack.c.l.b16 %v1422
        %v1499 = vunpack.c.l.b16 %v1423
        %v1500 = vunpack.c.l.b16 %v1424
        %v1501 = vunpack.c.l.b16 %v1425
        %v1502 = vunpack.c.l.b16 %v1426
        %v1503 = vunpack.c.l.b16 %v1427
        %v1504 = vunpack.c.l.b16 %v1428
        %v1505 = vunpack.c.l.b16 %v1429
        %v1506 = vunpack.c.l.b16 %v1430
        %v1507 = vunpack.c.l.b16 %v1431
        %v1508 = vunpack.c.l.b16 %v1432
        %v1509 = vpack.c.b16 %v1494, %v1493
        %v1510 = vpack.c.b16 %v1496, %v1495
        %v1511 = vpack.c.b16 %v1498, %v1497
        %v1512 = vpack.c.b16 %v1500, %v1499
        %v1513 = vpack.c.b16 %v1502, %v1501
        %v1514 = vpack.c.b16 %v1504, %v1503
        %v1515 = vpack.c.b16 %v1506, %v1505
        %v1516 = vpack.c.b16 %v1508, %v1507
        %1525 = vmatprep.subr.bf16.mxu0 0
        %1526 = vmatpush1.bf16.msra.mxu0 %v1509
        %1527 = vmatprep.subr.bf16.mxu0 0
        %1528 = vmatpush1.bf16.msra.mxu0 %v1510
        %1529 = vmatprep.subr.bf16.mxu0 0
        %1530 = vmatpush1.bf16.msra.mxu0 %v1511
        %1531 = vmatprep.subr.bf16.mxu0 0
        %1532 = vmatpush1.bf16.msra.mxu0 %v1512
        %1533 = vmatprep.subr.bf16.mxu0 0
        %1534 = vmatpush1.bf16.msra.mxu0 %v1513
        %1535 = vmatprep.subr.bf16.mxu0 0
        %1536 = vmatpush1.bf16.msra.mxu0 %v1514
        %1537 = vmatprep.subr.bf16.mxu0 0
        %1538 = vmatpush1.bf16.msra.mxu0 %v1515
        %1539 = vmatprep.subr.bf16.mxu0 0
        %1540 = vmatpush1.bf16.msra.mxu0 %v1516
        %1541 = vmatprep.subr.bf16.mxu0 0
        %1542 = vmatpush1.bf16.msra.mxu0 0
        %1543 = vmatprep.subr.bf16.mxu0 0
        %1544 = vmatpush1.bf16.msra.mxu0 0
        %1545 = vmatprep.subr.bf16.mxu0 0
        %1546 = vmatpush1.bf16.msra.mxu0 0
        %1547 = vmatprep.subr.bf16.mxu0 0
        %1548 = vmatpush1.bf16.msra.mxu0 0
        %1549 = vmatprep.subr.bf16.mxu0 0
        %1550 = vmatpush1.bf16.msra.mxu0 0
        %1551 = vmatprep.subr.bf16.mxu0 0
        %1552 = vmatpush1.bf16.msra.mxu0 0
        %1553 = vmatprep.subr.bf16.mxu0 0
        %1554 = vmatpush1.bf16.msra.mxu0 0
        %1555 = vmatprep.subr.bf16.mxu0 0
        %1556 = vmatpush1.bf16.msra.mxu0 0
        %1557 = vmatprep.mubr.bf16.mxu0 0
        %1558 = vmatmul.mubr.bf16.gmra.mrb[0].mxu0 %v1463
        %v1559 = vpop.f32.mrb[0].mxu0
        %v1560 = vadd.f32 0.0, %v1559
        %v1561 = vpop.f32.mrb[0].mxu0
        %v1562 = vpop.f32.mrb[0].mxu0
        %v1563 = vadd.f32 0.0, %v1562
        %v1564 = vpop.f32.mrb[0].mxu0
        %1565 = vmatprep.mubr.bf16.mxu0 0
        %1566 = vmatmul.mubr.bf16.gmra.mrb[0].mxu0 %v1465
        %v1567 = vpop.f32.mrb[0].mxu0
        %v1568 = vadd.f32 0.0, %v1567
        %v1569 = vpop.f32.mrb[0].mxu0
        %v1570 = vpop.f32.mrb[0].mxu0
        %v1571 = vadd.f32 0.0, %v1570
        %v1572 = vpop.f32.mrb[0].mxu0
        %1573 = vmatprep.mubr.bf16.mxu0 0
        %1574 = vmatmul.mubr.bf16.gmra.mrb[0].mxu0 %v1467
        %v1575 = vpop.f32.mrb[0].mxu0
        %v1576 = vadd.f32 0.0, %v1575
        %v1577 = vpop.f32.mrb[0].mxu0
        %v1578 = vpop.f32.mrb[0].mxu0
        %v1579 = vadd.f32 0.0, %v1578
        %v1580 = vpop.f32.mrb[0].mxu0
        %1581 = vmatprep.mubr.bf16.mxu0 0
        %1582 = vmatmul.mubr.bf16.gmra.mrb[0].mxu0 %v1469
        %v1583 = vpop.f32.mrb[0].mxu0
        %v1584 = vadd.f32 0.0, %v1583
        %v1585 = vpop.f32.mrb[0].mxu0
        %v1586 = vpop.f32.mrb[0].mxu0
        %v1587 = vadd.f32 0.0, %v1586
        %v1588 = vpop.f32.mrb[0].mxu0
        %1589 = vmatprep.mubr.bf16.mxu0 0
        %1590 = vmatmul.mubr.bf16.gmra.mrb[0].mxu0 %v1471
        %v1591 = vpop.f32.mrb[0].mxu0
        %v1592 = vadd.f32 0.0, %v1591
        %v1593 = vpop.f32.mrb[0].mxu0
        %v1594 = vpop.f32.mrb[0].mxu0
        %v1595 = vadd.f32 0.0, %v1594
        %v1596 = vpop.f32.mrb[0].mxu0
        %1597 = vdwg.mxu0
        %v1598 = vadd.f32 %v1395, %v1560
        %v1599 = vadd.f32 %v1396, %v1563
        %v1600 = vadd.f32 %v1397, %v1568
        %v1601 = vadd.f32 %v1398, %v1571
        %v1602 = vadd.f32 %v1399, %v1576
        %v1603 = vadd.f32 %v1400, %v1579
        %v1604 = vadd.f32 %v1401, %v1584
        %v1605 = vadd.f32 %v1402, %v1587
        %v1606 = vadd.f32 %v1403, %v1592
        %v1607 = vadd.f32 %v1404, %v1595
        %v1608 = vld [vmem:[%s236 + $0x30] sm:$0x7]
        %s1609 = scalar_lea.vmem [#allocation5], 448
        %v1610 = vld [vmem:[%s1609] sm:$0xf]
        %v1611 = vld [vmem:[%s1609 + $0x4] sm:$0xf]
        %v1612 = vld [vmem:[%s1609 + $0x8] sm:$0xf]
        %v1613 = vld [vmem:[%s1609 + $0xc] sm:$0xf]
        %v1614 = vld [vmem:[%s1609 + $0x10] sm:$0xf]
        %v1615 = vld [vmem:[%s1609 + $0x14] sm:$0xf]
        %v1616 = vld [vmem:[%s1609 + $0x18] sm:$0xf]
        %v1617 = vld [vmem:[%s1609 + $0x1c] sm:$0xf]
        %v1618 = vld [vmem:[%s1609 + $0x20] sm:$0xf]
        %v1619 = vld [vmem:[%s1609 + $0x24] sm:$0xf]
        %v1620 = vld [vmem:[%s1609 + $0x28] sm:$0xf]
        %v1621 = vld [vmem:[%s1609 + $0x2c] sm:$0xf]
        %v1622 = vld [vmem:[%s1609 + $0x30] sm:$0xf]
        %v1623 = vld [vmem:[%s1609 + $0x34] sm:$0xf]
        %v1624 = vld [vmem:[%s1609 + $0x38] sm:$0xf]
        %v1625 = vld [vmem:[%s1609 + $0x3c] sm:$0xf]
        %v1627 = vunpack.c.l.b16 %v1608
        %v1628 = vpack.c.b16 %v1627, %v1627
        %vm1629 = vsmask.f32 5376
        %v1631 = vshrl.u32 %v1455, 16
        %v1633 = vrot.slane %v1631, 2
        %v1634 = vshll.u32 %v1455, 16
        %v1636 = vrot.slane %v1634, 3
        %v1637 = vor.u32 %v1633, %v1636
        %v1639 = vshrl.u32 %v1456, 16
        %v1641 = vrot.slane %v1639, 2
        %v1642 = vshll.u32 %v1456, 16
        %v1644 = vrot.slane %v1642, 3
        %v1645 = vor.u32 %v1641, %v1644
        %v1646 = vsel %vm1629, %v1637, %v1645
        %v1648 = vshrl.u32 %v1457, 16
        %v1650 = vrot.slane %v1648, 2
        %v1651 = vshll.u32 %v1457, 16
        %v1653 = vrot.slane %v1651, 3
        %v1654 = vor.u32 %v1650, %v1653
        %v1655 = vsel %vm1629, %v1645, %v1654
        %v1657 = vshrl.u32 %v1458, 16
        %v1659 = vrot.slane %v1657, 2
        %v1660 = vshll.u32 %v1458, 16
        %v1662 = vrot.slane %v1660, 3
        %v1663 = vor.u32 %v1659, %v1662
        %v1664 = vsel %vm1629, %v1654, %v1663
        %v1666 = vshrl.u32 %v1459, 16
        %v1668 = vrot.slane %v1666, 2
        %v1669 = vshll.u32 %v1459, 16
        %v1671 = vrot.slane %v1669, 3
        %v1672 = vor.u32 %v1668, %v1671
        %v1673 = vsel %vm1629, %v1663, %v1672
        %v1675 = vshrl.u32 %v1628, 16
        %v1677 = vrot.slane %v1675, 2
        %v1678 = vshll.u32 %v1628, 16
        %v1680 = vrot.slane %v1678, 3
        %v1681 = vor.u32 %v1677, %v1680
        %v1682 = vsel %vm1629, %v1672, %v1681
        %v1704 = vunpack.c.l.b16 %v1610
        %v1705 = vunpack.c.l.b16 %v1611
        %v1706 = vunpack.c.l.b16 %v1612
        %v1707 = vunpack.c.l.b16 %v1613
        %v1708 = vunpack.c.l.b16 %v1614
        %v1709 = vunpack.c.l.b16 %v1615
        %v1710 = vunpack.c.l.b16 %v1616
        %v1711 = vunpack.c.l.b16 %v1617
        %v1712 = vunpack.c.l.b16 %v1618
        %v1713 = vunpack.c.l.b16 %v1619
        %v1714 = vunpack.c.l.b16 %v1620
        %v1715 = vunpack.c.l.b16 %v1621
        %v1716 = vunpack.c.l.b16 %v1622
        %v1717 = vunpack.c.l.b16 %v1623
        %v1718 = vunpack.c.l.b16 %v1624
        %v1719 = vunpack.c.l.b16 %v1625
        %v1720 = vpack.c.b16 %v1705, %v1704
        %v1721 = vpack.c.b16 %v1707, %v1706
        %v1722 = vpack.c.b16 %v1709, %v1708
        %v1723 = vpack.c.b16 %v1711, %v1710
        %v1724 = vpack.c.b16 %v1713, %v1712
        %v1725 = vpack.c.b16 %v1715, %v1714
        %v1726 = vpack.c.b16 %v1717, %v1716
        %v1727 = vpack.c.b16 %v1719, %v1718
        %1736 = vmatprep.subr.bf16.mxu0 0
        %1737 = vmatpush1.bf16.msra.mxu0 %v1720
        %1738 = vmatprep.subr.bf16.mxu0 0
        %1739 = vmatpush1.bf16.msra.mxu0 %v1721
        %1740 = vmatprep.subr.bf16.mxu0 0
        %1741 = vmatpush1.bf16.msra.mxu0 %v1722
        %1742 = vmatprep.subr.bf16.mxu0 0
        %1743 = vmatpush1.bf16.msra.mxu0 %v1723
        %1744 = vmatprep.subr.bf16.mxu0 0
        %1745 = vmatpush1.bf16.msra.mxu0 %v1724
        %1746 = vmatprep.subr.bf16.mxu0 0
        %1747 = vmatpush1.bf16.msra.mxu0 %v1725
        %1748 = vmatprep.subr.bf16.mxu0 0
        %1749 = vmatpush1.bf16.msra.mxu0 %v1726
        %1750 = vmatprep.subr.bf16.mxu0 0
        %1751 = vmatpush1.bf16.msra.mxu0 %v1727
        %1752 = vmatprep.subr.bf16.mxu0 0
        %1753 = vmatpush1.bf16.msra.mxu0 0
        %1754 = vmatprep.subr.bf16.mxu0 0
        %1755 = vmatpush1.bf16.msra.mxu0 0
        %1756 = vmatprep.subr.bf16.mxu0 0
        %1757 = vmatpush1.bf16.msra.mxu0 0
        %1758 = vmatprep.subr.bf16.mxu0 0
        %1759 = vmatpush1.bf16.msra.mxu0 0
        %1760 = vmatprep.subr.bf16.mxu0 0
        %1761 = vmatpush1.bf16.msra.mxu0 0
        %1762 = vmatprep.subr.bf16.mxu0 0
        %1763 = vmatpush1.bf16.msra.mxu0 0
        %1764 = vmatprep.subr.bf16.mxu0 0
        %1765 = vmatpush1.bf16.msra.mxu0 0
        %1766 = vmatprep.subr.bf16.mxu0 0
        %1767 = vmatpush1.bf16.msra.mxu0 0
        %1768 = vmatprep.mubr.bf16.mxu0 0
        %1769 = vmatmul.mubr.bf16.gmra.mrb[0].mxu0 %v1646
        %v1770 = vpop.f32.mrb[0].mxu0
        %v1771 = vadd.f32 0.0, %v1770
        %v1772 = vpop.f32.mrb[0].mxu0
        %v1773 = vpop.f32.mrb[0].mxu0
        %v1774 = vadd.f32 0.0, %v1773
        %v1775 = vpop.f32.mrb[0].mxu0
        %1776 = vmatprep.mubr.bf16.mxu0 0
        %1777 = vmatmul.mubr.bf16.gmra.mrb[0].mxu0 %v1655
        %v1778 = vpop.f32.mrb[0].mxu0
        %v1779 = vadd.f32 0.0, %v1778
        %v1780 = vpop.f32.mrb[0].mxu0
        %v1781 = vpop.f32.mrb[0].mxu0
        %v1782 = vadd.f32 0.0, %v1781
        %v1783 = vpop.f32.mrb[0].mxu0
        %1784 = vmatprep.mubr.bf16.mxu0 0
        %1785 = vmatmul.mubr.bf16.gmra.mrb[0].mxu0 %v1664
        %v1786 = vpop.f32.mrb[0].mxu0
        %v1787 = vadd.f32 0.0, %v1786
        %v1788 = vpop.f32.mrb[0].mxu0
        %v1789 = vpop.f32.mrb[0].mxu0
        %v1790 = vadd.f32 0.0, %v1789
        %v1791 = vpop.f32.mrb[0].mxu0
        %1792 = vmatprep.mubr.bf16.mxu0 0
        %1793 = vmatmul.mubr.bf16.gmra.mrb[0].mxu0 %v1673
        %v1794 = vpop.f32.mrb[0].mxu0
        %v1795 = vadd.f32 0.0, %v1794
        %v1796 = vpop.f32.mrb[0].mxu0
        %v1797 = vpop.f32.mrb[0].mxu0
        %v1798 = vadd.f32 0.0, %v1797
        %v1799 = vpop.f32.mrb[0].mxu0
        %1800 = vmatprep.mubr.bf16.mxu0 0
        %1801 = vmatmul.mubr.bf16.gmra.mrb[0].mxu0 %v1682
        %v1802 = vpop.f32.mrb[0].mxu0
        %v1803 = vadd.f32 0.0, %v1802
        %v1804 = vpop.f32.mrb[0].mxu0
        %v1805 = vpop.f32.mrb[0].mxu0
        %v1806 = vadd.f32 0.0, %v1805
        %v1807 = vpop.f32.mrb[0].mxu0
        %1808 = vdwg.mxu0
        %v1809 = vadd.f32 %v1598, %v1771
        %v1810 = vadd.f32 %v1599, %v1774
        %v1811 = vadd.f32 %v1600, %v1779
        %v1812 = vadd.f32 %v1601, %v1782
        %v1813 = vadd.f32 %v1602, %v1787
        %v1814 = vadd.f32 %v1603, %v1790
        %v1815 = vadd.f32 %v1604, %v1795
        %v1816 = vadd.f32 %v1605, %v1798
        %v1817 = vadd.f32 %v1606, %v1803
        %v1818 = vadd.f32 %v1607, %v1806
        %v1819 = vld [vmem:[%s236 + $0x8] sm:$0x8]
        %s1820 = scalar_lea.vmem [#allocation5], 512
        %v1821 = vld [vmem:[%s1820] sm:$0xf]
        %v1822 = vld [vmem:[%s1820 + $0x4] sm:$0xf]
        %v1823 = vld [vmem:[%s1820 + $0x8] sm:$0xf]
        %v1824 = vld [vmem:[%s1820 + $0xc] sm:$0xf]
        %v1825 = vld [vmem:[%s1820 + $0x10] sm:$0xf]
        %v1826 = vld [vmem:[%s1820 + $0x14] sm:$0xf]
        %v1827 = vld [vmem:[%s1820 + $0x18] sm:$0xf]
        %v1828 = vld [vmem:[%s1820 + $0x1c] sm:$0xf]
        %v1829 = vld [vmem:[%s1820 + $0x20] sm:$0xf]
        %v1830 = vld [vmem:[%s1820 + $0x24] sm:$0xf]
        %v1831 = vld [vmem:[%s1820 + $0x28] sm:$0xf]
        %v1832 = vld [vmem:[%s1820 + $0x2c] sm:$0xf]
        %v1833 = vld [vmem:[%s1820 + $0x30] sm:$0xf]
        %v1834 = vld [vmem:[%s1820 + $0x34] sm:$0xf]
        %v1835 = vld [vmem:[%s1820 + $0x38] sm:$0xf]
        %v1836 = vld [vmem:[%s1820 + $0x3c] sm:$0xf]
        %v1838 = vunpack.c.l.b16 %v1819
        %v1839 = vpack.c.b16 %v1445, %v1838
        %vm1840 = vcmask 1044480
        %v1841 = vrot.slane %v1839, 3
        %v1842 = vrot.slane %v1456, 3
        %v1843 = vsel %vm1840, %v1841, %v1842
        %v1844 = vrot.slane %v1457, 3
        %v1845 = vsel %vm1840, %v1842, %v1844
        %v1846 = vrot.slane %v1458, 3
        %v1847 = vsel %vm1840, %v1844, %v1846
        %v1848 = vrot.slane %v1459, 3
        %v1849 = vsel %vm1840, %v1846, %v1848
        %v1850 = vrot.slane %v1628, 3
        %v1851 = vsel %vm1840, %v1848, %v1850
        %v1873 = vunpack.c.l.b16 %v1821
        %v1874 = vunpack.c.l.b16 %v1822
        %v1875 = vunpack.c.l.b16 %v1823
        %v1876 = vunpack.c.l.b16 %v1824
        %v1877 = vunpack.c.l.b16 %v1825
        %v1878 = vunpack.c.l.b16 %v1826
        %v1879 = vunpack.c.l.b16 %v1827
        %v1880 = vunpack.c.l.b16 %v1828
        %v1881 = vunpack.c.l.b16 %v1829
        %v1882 = vunpack.c.l.b16 %v1830
        %v1883 = vunpack.c.l.b16 %v1831
        %v1884 = vunpack.c.l.b16 %v1832
        %v1885 = vunpack.c.l.b16 %v1833
        %v1886 = vunpack.c.l.b16 %v1834
        %v1887 = vunpack.c.l.b16 %v1835
        %v1888 = vunpack.c.l.b16 %v1836
        %v1889 = vpack.c.b16 %v1874, %v1873
        %v1890 = vpack.c.b16 %v1876, %v1875
        %v1891 = vpack.c.b16 %v1878, %v1877
        %v1892 = vpack.c.b16 %v1880, %v1879
        %v1893 = vpack.c.b16 %v1882, %v1881
        %v1894 = vpack.c.b16 %v1884, %v1883
        %v1895 = vpack.c.b16 %v1886, %v1885
        %v1896 = vpack.c.b16 %v1888, %v1887
        %1905 = vmatprep.subr.bf16.mxu0 0
        %1906 = vmatpush1.bf16.msra.mxu0 %v1889
        %1907 = vmatprep.subr.bf16.mxu0 0
        %1908 = vmatpush1.bf16.msra.mxu0 %v1890
        %1909 = vmatprep.subr.bf16.mxu0 0
        %1910 = vmatpush1.bf16.msra.mxu0 %v1891
        %1911 = vmatprep.subr.bf16.mxu0 0
        %1912 = vmatpush1.bf16.msra.mxu0 %v1892
        %1913 = vmatprep.subr.bf16.mxu0 0
        %1914 = vmatpush1.bf16.msra.mxu0 %v1893
        %1915 = vmatprep.subr.bf16.mxu0 0
        %1916 = vmatpush1.bf16.msra.mxu0 %v1894
        %1917 = vmatprep.subr.bf16.mxu0 0
        %1918 = vmatpush1.bf16.msra.mxu0 %v1895
        %1919 = vmatprep.subr.bf16.mxu0 0
        %1920 = vmatpush1.bf16.msra.mxu0 %v1896
        %1921 = vmatprep.subr.bf16.mxu0 0
        %1922 = vmatpush1.bf16.msra.mxu0 0
        %1923 = vmatprep.subr.bf16.mxu0 0
        %1924 = vmatpush1.bf16.msra.mxu0 0
        %1925 = vmatprep.subr.bf16.mxu0 0
        %1926 = vmatpush1.bf16.msra.mxu0 0
        %1927 = vmatprep.subr.bf16.mxu0 0
        %1928 = vmatpush1.bf16.msra.mxu0 0
        %1929 = vmatprep.subr.bf16.mxu0 0
        %1930 = vmatpush1.bf16.msra.mxu0 0
        %1931 = vmatprep.subr.bf16.mxu0 0
        %1932 = vmatpush1.bf16.msra.mxu0 0
        %1933 = vmatprep.subr.bf16.mxu0 0
        %1934 = vmatpush1.bf16.msra.mxu0 0
        %1935 = vmatprep.subr.bf16.mxu0 0
        %1936 = vmatpush1.bf16.msra.mxu0 0
        %1937 = vmatprep.mubr.bf16.mxu0 0
        %1938 = vmatmul.mubr.bf16.gmra.mrb[0].mxu0 %v1843
        %v1939 = vpop.f32.mrb[0].mxu0
        %v1940 = vadd.f32 0.0, %v1939
        %v1941 = vpop.f32.mrb[0].mxu0
        %v1942 = vpop.f32.mrb[0].mxu0
        %v1943 = vadd.f32 0.0, %v1942
        %v1944 = vpop.f32.mrb[0].mxu0
        %1945 = vmatprep.mubr.bf16.mxu0 0
        %1946 = vmatmul.mubr.bf16.gmra.mrb[0].mxu0 %v1845
        %v1947 = vpop.f32.mrb[0].mxu0
        %v1948 = vadd.f32 0.0, %v1947
        %v1949 = vpop.f32.mrb[0].mxu0
        %v1950 = vpop.f32.mrb[0].mxu0
        %v1951 = vadd.f32 0.0, %v1950
        %v1952 = vpop.f32.mrb[0].mxu0
        %1953 = vmatprep.mubr.bf16.mxu0 0
        %1954 = vmatmul.mubr.bf16.gmra.mrb[0].mxu0 %v1847
        %v1955 = vpop.f32.mrb[0].mxu0
        %v1956 = vadd.f32 0.0, %v1955
        %v1957 = vpop.f32.mrb[0].mxu0
        %v1958 = vpop.f32.mrb[0].mxu0
        %v1959 = vadd.f32 0.0, %v1958
        %v1960 = vpop.f32.mrb[0].mxu0
        %1961 = vmatprep.mubr.bf16.mxu0 0
        %1962 = vmatmul.mubr.bf16.gmra.mrb[0].mxu0 %v1849
        %v1963 = vpop.f32.mrb[0].mxu0
        %v1964 = vadd.f32 0.0, %v1963
        %v1965 = vpop.f32.mrb[0].mxu0
        %v1966 = vpop.f32.mrb[0].mxu0
        %v1967 = vadd.f32 0.0, %v1966
        %v1968 = vpop.f32.mrb[0].mxu0
        %1969 = vmatprep.mubr.bf16.mxu0 0
        %1970 = vmatmul.mubr.bf16.gmra.mrb[0].mxu0 %v1851
        %v1971 = vpop.f32.mrb[0].mxu0
        %v1972 = vadd.f32 0.0, %v1971
        %v1973 = vpop.f32.mrb[0].mxu0
        %v1974 = vpop.f32.mrb[0].mxu0
        %v1975 = vadd.f32 0.0, %v1974
        %v1976 = vpop.f32.mrb[0].mxu0
        %1977 = vdwg.mxu0
        %v1978 = vadd.f32 %v1809, %v1940
        %v1979 = vadd.f32 %v1810, %v1943
        %v1980 = vadd.f32 %v1811, %v1948
        %v1981 = vadd.f32 %v1812, %v1951
        %v1982 = vadd.f32 %v1813, %v1956
        %v1983 = vadd.f32 %v1814, %v1959
        %v1984 = vadd.f32 %v1815, %v1964
        %v1985 = vadd.f32 %v1816, %v1967
        %v1986 = vadd.f32 %v1817, %v1972
        %v1987 = vadd.f32 %v1818, %v1975
        %v1988 = vld [vmem:[#allocation7] sm:$0x1]
        %v1990 = vlaneseq
        %v1991 = vshrl.u32 %v1990, 7
        %v1992 = vsub.s32 0, %v1991
        %v1993 = vrot.slane %v1988, %v1992
        %v1995 = vadd.f32 %v1978, %v1993
        %v1996 = vadd.f32 %v1979, %v1993
        %v1997 = vadd.f32 %v1980, %v1993
        %v1998 = vadd.f32 %v1981, %v1993
        %v1999 = vadd.f32 %v1982, %v1993
        %v2000 = vadd.f32 %v1983, %v1993
        %v2001 = vadd.f32 %v1984, %v1993
        %v2002 = vadd.f32 %v1985, %v1993
        %v2003 = vadd.f32 %v1986, %v1993
        %v2004 = vadd.f32 %v1987, %v1993
        %v2005 = vld [vmem:[%s253] sm:$0xf]
        %v2006 = vld [vmem:[%s253 + $0x4] sm:$0xf]
        %v2007 = vld [vmem:[%s253 + $0x8] sm:$0xf]
        %v2008 = vld [vmem:[%s253 + $0xc] sm:$0xf]
        %v2009 = vld [vmem:[%s253 + $0x10] sm:$0xf]
        %v2010 = vld [vmem:[%s253 + $0x14] sm:$0xf]
        %v2011 = vld [vmem:[%s253 + $0x18] sm:$0xf]
        %v2012 = vld [vmem:[%s253 + $0x1c] sm:$0xf]
        %v2013 = vld [vmem:[%s253 + $0x20] sm:$0xf]
        %v2014 = vld [vmem:[%s253 + $0x24] sm:$0xf]
        %v2015 = vunpack.c.l.bf16 %v2005
        %v2016 = vunpack.c.l.bf16 %v2006
        %v2017 = vunpack.c.l.bf16 %v2007
        %v2018 = vunpack.c.l.bf16 %v2008
        %v2019 = vunpack.c.l.bf16 %v2009
        %v2020 = vunpack.c.l.bf16 %v2010
        %v2021 = vunpack.c.l.bf16 %v2011
        %v2022 = vunpack.c.l.bf16 %v2012
        %v2023 = vunpack.c.l.bf16 %v2013
        %v2024 = vunpack.c.l.bf16 %v2014
        %v2025 = vadd.f32 %v1995, %v2015
        %v2026 = vadd.f32 %v1996, %v2016
        %v2027 = vadd.f32 %v1997, %v2017
        %v2028 = vadd.f32 %v1998, %v2018
        %v2029 = vadd.f32 %v1999, %v2019
        %v2030 = vadd.f32 %v2000, %v2020
        %v2031 = vadd.f32 %v2001, %v2021
        %v2032 = vadd.f32 %v2002, %v2022
        %v2033 = vadd.f32 %v2003, %v2023
        %v2034 = vadd.f32 %v2004, %v2024
        %2035 = vst [vmem:[%s282] sm:$0xff] %v2025
        %2036 = vst [vmem:[%s282 + $0x8] sm:$0xff] %v2026
        %2037 = vst [vmem:[%s282 + $0x10] sm:$0xff] %v2027
        %2038 = vst [vmem:[%s282 + $0x18] sm:$0xff] %v2028
        %2039 = vst [vmem:[%s282 + $0x20] sm:$0xff] %v2029
        %2040 = vst [vmem:[%s282 + $0x28] sm:$0xff] %v2030
        %2041 = vst [vmem:[%s282 + $0x30] sm:$0xff] %v2031
        %2042 = vst [vmem:[%s282 + $0x38] sm:$0xff] %v2032
        %2043 = vst [vmem:[%s282 + $0x40] sm:$0xff] %v2033
        %2044 = vst [vmem:[%s282 + $0x48] sm:$0xff] %v2034
        %s2045 = sand.u32 %s127, 1
        %s2046 = scalar_lea.sflag [#allocation4], %s2045
        %s2047 = sand.u32 %s127, 1
        %s2048 = smul.addr %s2047, 80
        %s2049 = scalar_lea.vmem [#allocation10], %s2048
        // Predicated region
        $region53: #{basic_block_v1_forward.5} parent=35 // pred_check
          %p2050 = pneg %p137
        $region54: #{basic_block_v1_forward.5} parent=35 // pred_check_branch
          %2052 = sbr.rel (%p2050) target = $region56
        $region55: #{basic_block_v1_forward.5} parent=35 // pred_region
          %s2054 = ssub.s32 1280, 1280
          %2055 = vsyncadd %s2046, %s2054
          %s2056 = smul.addr %s25, 10
          %s2057 = smul.addr %s2056, 128
          %s2058 = scalar_lea.hbm %s4, %s2057
          %s2059 = sshll.u32 %s2049, 4
          %s2060 = int_to_ptr.vmem [resolvable:$true] %s2059
          %2065 = dma.vmem_to_hbm [thread:$0]  %s2060, 1280, %s2058, %s2046, 128, 128, 8
        $region56: #{basic_block_v1_forward.5} parent=35 // pred_fallthru
          _
      $region36: #{basic_block_v1_forward.5} parent=5 // pred_fallthru
        _
      %p2066 = scmp.le.s32.totalorder 2, %s20
      // Predicated region
      $region57: #{basic_block_v1_forward.5} parent=5 // pred_check
        %p2067 = pneg %p2066
      $region58: #{basic_block_v1_forward.5} parent=5 // pred_check_branch
        %2069 = sbr.rel (%p2067) target = $region60
      $region59: #{basic_block_v1_forward.5} parent=5 // pred_region
        %s2070 = ssub.s32 %s20, 2
        // Predicated region
        $region61: #{basic_block_v1_forward.5} parent=59 // pred_check
          %p2071 = pneg %p143
        $region62: #{basic_block_v1_forward.5} parent=59 // pred_check_branch
          %2073 = sbr.rel (%p2071) target = $region64
        $region63: #{basic_block_v1_forward.5} parent=59 // pred_region
          %s2074 = sand.u32 %s128, 1
          %s2075 = scalar_lea.sflag [#allocation4], %s2074
          %s2076 = sand.u32 %s128, 1
          %s2077 = smul.addr %s2076, 80
          %s2078 = scalar_lea.vmem [#allocation10], %s2077
          %2079 = dma.done %s2075, 1280
        $region64: #{basic_block_v1_forward.5} parent=59 // pred_fallthru
          _
      $region60: #{basic_block_v1_forward.5} parent=5 // pred_fallthru
        _
    $region6: #{basic_block_v1_forward.5} parent=1 // loop_footer
      %s24 = sadd.s32 1, %s20
    $region7: #{basic_block_v1_forward.5} parent=1 // loop_footer_branch
      %19 = sbr.rel target = $region3
    $region8: #{basic_block_v1_forward.5} parent=1 // loop_exit
      _
    %2080 = vsyncpa [#allocation3], 1
    %s2081 = scalar_lea.sflag [#allocation3], 1
    %2082 = vsyncpa %s2081, 1
    %2083 = vsyncpa [#allocation6], 1
    %2084 = vsyncpa [#allocation9], 1
    %s2085 = scalar_lea.sflag [#allocation9], 1
    %2086 = vsyncpa %s2085, 1
    %2087 = vsyncpa [#allocation4], 1
    %s2088 = scalar_lea.sflag [#allocation4], 1
    %2089 = vsyncpa %s2088, 1

</llo_original>
